<compile_context>
chip_gen: v7x
topology: tpu7x:2x2x1
jax: 0.10.0
libtpu: 0.0.40
codegen_flags: <defaults>
</compile_context>

<pallas_src>
import math
from functools import partial

import jax
import jax.numpy as jnp
from jax.experimental import pallas as pl
from jax.experimental.pallas import tpu as pltpu


def _rup(x, m):
    return ((x + m - 1) // m) * m


def _cdiv(a, b):
    return (a + b - 1) // b


# ----------------------------- Pallas kernels -----------------------------


def _gemm_kernel(a_ref, r_ref, w_ref, s_ref, b_ref, *rest, relu, fuse_res):
    """Tiled GEMM with BatchEnsemble / BN / residual epilogue.

    grid = (batch n, M tile i, K tile k); K is the innermost reduction axis.
      a   : (1, tm, tk)  bf16 im2col patches of batch element n
      r   : (1, tk, 1)   f32  BatchEnsemble input scale, folded into the
                              weight tile: (A*diag(r)) @ W == A @ (diag(r)*W)
      w   : (tk, Cp)     bf16 conv / linear weight tile
      s,b : (1, 1, Cp)   f32  folded output scale / bias (BE s, bias, BN1)
      [fuse_res only]
      sc  : (1, tm, Cp)  bf16 shortcut tile;  g,h: (1,1,Cp) folded bn2
      o   : (1, tm, Cp)  output tile
      acc : (tm, Cp)     f32  VMEM accumulator scratch
    """
    if fuse_res:
        sc_ref, g_ref, h_ref, o_ref, acc_ref = rest
    else:
        o_ref, acc_ref = rest
    k = pl.program_id(2)

    @pl.when(k == 0)
    def _init():
        acc_ref[...] = jnp.zeros_like(acc_ref)

    # Fold the r-scale into the (small) weight tile, then bf16 MXU matmul
    # with f32 accumulation.
    w = (w_ref[...] * r_ref[0]).astype(jnp.bfloat16)
    acc_ref[...] += jnp.dot(a_ref[0], w, preferred_element_type=jnp.float32)

    @pl.when(k == pl.num_programs(2) - 1)
    def _finalize():
        y = acc_ref[...] * s_ref[0] + b_ref[0]
        if fuse_res:
            # relu(bn2(conv2(h1) + shortcut(x))) fused epilogue.
            y = (y + sc_ref[0].astype(jnp.float32)) * g_ref[0] + h_ref[0]
        if relu:
            y = jnp.maximum(y, 0.0)
        o_ref[0] = y.astype(o_ref.dtype)


def _maxpool_kernel(ee_ref, eo_ref, oe_ref, oo_ref, o_ref, *, ho, wo):
    # 3x3 stride-2 pad-1 max pool from four parity slabs (even/odd rows x
    # even/odd cols of the padded input); only stride-1 in-kernel slices.
    ee = ee_ref[0]
    eo = eo_ref[0]
    oe = oe_ref[0]
    oo = oo_ref[0]
    y = ee[:ho, :wo, :]
    y = jnp.maximum(y, ee[:ho, 1:wo + 1, :])
    y = jnp.maximum(y, ee[1:ho + 1, :wo, :])
    y = jnp.maximum(y, ee[1:ho + 1, 1:wo + 1, :])
    y = jnp.maximum(y, eo[:ho, :wo, :])
    y = jnp.maximum(y, eo[1:ho + 1, :wo, :])
    y = jnp.maximum(y, oe[:ho, :wo, :])
    y = jnp.maximum(y, oe[:ho, 1:wo + 1, :])
    y = jnp.maximum(y, oo[:ho, :wo, :])
    o_ref[0] = y


# ----------------------------- kernel wrappers -----------------------------


def conv_gemm(patches, r, w, s, b, *, relu, out_dtype,
              sc=None, g=None, h=None, tm_target=512, tk_target=512):
    """patches:(Nb,P,K) r:(Nb,K) w:(K,C) s,b:(Nb,C) [sc:(Nb,P,Csc) g,h:(C,)]
    -> (Nb, Pp, Cp), P padded to the M tile and C lane-padded to 128."""
    Nb, P, K = patches.shape
    C = w.shape[1]
    fuse_res = sc is not None
    Cp = _rup(C, 128)
    if fuse_res:
        Cp = max(Cp, sc.shape[-1])
    # M (pixel) tiling: biggest tile <= tm_target, multiples of 16 (bf16).
    p16 = _rup(P, 16)
    nm = _cdiv(p16, tm_target)
    tm = _rup(_cdiv(p16, nm), 16)
    Pp = tm * nm
    # K (reduction) tiling: multiples of 128 lanes.
    k128 = _rup(K, 128)
    nk = _cdiv(k128, tk_target)
    tk = _rup(_cdiv(k128, nk), 128)
    Kp = tk * nk

    a = jnp.pad(patches.astype(jnp.bfloat16),
                ((0, 0), (0, Pp - P), (0, Kp - K)))
    rp = jnp.pad(r.astype(jnp.float32), ((0, 0), (0, Kp - K)))[:, :, None]
    wp = jnp.pad(w.astype(jnp.bfloat16), ((0, Kp - K), (0, Cp - C)))
    sp = jnp.pad(s.astype(jnp.float32), ((0, 0), (0, Cp - C)))[:, None, :]
    bp = jnp.pad(b.astype(jnp.float32), ((0, 0), (0, Cp - C)))[:, None, :]

    inputs = [a, rp, wp, sp, bp]
    in_specs = [
        pl.BlockSpec((1, tm, tk), lambda n, i, k: (n, i, k)),
        pl.BlockSpec((1, tk, 1), lambda n, i, k: (n, k, 0)),
        pl.BlockSpec((tk, Cp), lambda n, i, k: (k, 0)),
        pl.BlockSpec((1, 1, Cp), lambda n, i, k: (n, 0, 0)),
        pl.BlockSpec((1, 1, Cp), lambda n, i, k: (n, 0, 0)),
    ]
    if fuse_res:
        scp = jnp.pad(sc.astype(jnp.bfloat16),
                      ((0, 0), (0, Pp - P), (0, Cp - sc.shape[-1])))
        gp = jnp.pad(g.astype(jnp.float32), (0, Cp - g.shape[0]))[None, None, :]
        hp = jnp.pad(h.astype(jnp.float32), (0, Cp - h.shape[0]))[None, None, :]
        inputs += [scp, gp, hp]
        in_specs += [
            pl.BlockSpec((1, tm, Cp), lambda n, i, k: (n, i, 0)),
            pl.BlockSpec((1, 1, Cp), lambda n, i, k: (0, 0, 0)),
            pl.BlockSpec((1, 1, Cp), lambda n, i, k: (0, 0, 0)),
        ]
    return pl.pallas_call(
        partial(_gemm_kernel, relu=relu, fuse_res=fuse_res),
        out_shape=jax.ShapeDtypeStruct((Nb, Pp, Cp), out_dtype),
        grid=(Nb, nm, nk),
        in_specs=in_specs,
        out_specs=pl.BlockSpec((1, tm, Cp), lambda n, i, k: (n, i, 0)),
        scratch_shapes=[pltpu.VMEM((tm, Cp), jnp.float32)],
        compiler_params=pltpu.CompilerParams(
            dimension_semantics=("parallel", "parallel", "arbitrary")),
    )(*inputs)


def maxpool_3x3_s2_p1(x):
    """x: (Nb, H, W, C) NHWC (C lane-padded) -> (Nb, Ho, Wo, C), k=3 s=2 p=1."""
    Nb, H, W, C = x.shape
    Ho = (H - 1) // 2 + 1
    Wo = (W - 1) // 2 + 1
    neg = float(jnp.finfo(x.dtype).min)
    xp = jnp.pad(x, ((0, 0), (1, 1), (1, 1), (0, 0)), constant_values=neg)
    # Parity slabs (strided slicing handled by XLA; total bytes ~= one input).
    ee = xp[:, 0::2, 0::2, :][:, :Ho + 1, :Wo + 1, :]
    eo = xp[:, 0::2, 1::2, :][:, :Ho + 1, :Wo, :]
    oe = xp[:, 1::2, 0::2, :][:, :Ho, :Wo + 1, :]
    oo = xp[:, 1::2, 1::2, :][:, :Ho, :Wo, :]
    eo = jnp.pad(eo, ((0, 0), (0, 0), (0, 1), (0, 0)), constant_values=neg)
    oe = jnp.pad(oe, ((0, 0), (0, 1), (0, 0), (0, 0)), constant_values=neg)
    oo = jnp.pad(oo, ((0, 0), (0, 1), (0, 1), (0, 0)), constant_values=neg)
    slab_spec = pl.BlockSpec((1, Ho + 1, Wo + 1, C), lambda n: (n, 0, 0, 0))
    return pl.pallas_call(
        partial(_maxpool_kernel, ho=Ho, wo=Wo),
        out_shape=jax.ShapeDtypeStruct((Nb, Ho, Wo, C), x.dtype),
        grid=(Nb,),
        in_specs=[slab_spec, slab_spec, slab_spec, slab_spec],
        out_specs=pl.BlockSpec((1, Ho, Wo, C), lambda n: (n, 0, 0, 0)),
        compiler_params=pltpu.CompilerParams(
            dimension_semantics=("parallel",)),
    )(ee, eo, oe, oo)


# ----------------------------- JAX glue -----------------------------


def im2col(x, kh, kw, stride, pad):
    """x: (Nb,H,W,C) -> patches (Nb, Ho*Wo, kh*kw*C), tap-major channel-minor."""
    Nb, H, W, C = x.shape
    Ho = (H + 2 * pad - kh) // stride + 1
    Wo = (W + 2 * pad - kw) // stride + 1
    xp = jnp.pad(x, ((0, 0), (pad, pad), (pad, pad), (0, 0)))
    cols = []
    for i in range(kh):
        for j in range(kw):
            cols.append(xp[:, i:i + stride * (Ho - 1) + 1:stride,
                           j:j + stride * (Wo - 1) + 1:stride, :])
    patches = jnp.stack(cols, axis=3)  # (Nb, Ho, Wo, kh*kw, C)
    return patches.reshape(Nb, Ho * Wo, kh * kw * C), Ho, Wo


def _bn_fold(bn, eps=1e-5):
    g = bn["gamma"] / jnp.sqrt(bn["var"] + eps)
    h = bn["beta"] - bn["mean"] * g
    return g, h


def batch_conv(x, cp, *, stride, padding, b_per, bn=None, relu=False,
               residual=None, bn2=None, out_dtype=jnp.bfloat16):
    """BatchConv2d (+ folded BN [+ fused residual/bn2/ReLU]).  x: NHWC."""
    kh, kw, cin, cout = cp["w"].shape
    Nb, H, W, Cx = x.shape
    w = cp["w"]
    r = cp["r"]
    if Cx > cin:  # activations carry lane-padded channels between layers
        w = jnp.pad(w, ((0, 0), (0, 0), (0, Cx - cin), (0, 0)))
        r = jnp.pad(r, ((0, 0), (0, Cx - cin)))
    patches, Ho, Wo = im2col(x, kh, kw, stride, padding)
    # r applies per input channel; tile across kernel taps to match K layout.
    r_exp = jnp.repeat(jnp.tile(r, (1, kh * kw)), b_per, axis=0)
    w2 = w.reshape(-1, cout)
    s = cp["s"]
    b = cp.get("b", jnp.zeros_like(s))
    if bn is not None:
        g1, h1 = _bn_fold(bn)
        s = s * g1[None, :]
        b = b * g1[None, :] + h1[None, :]
    s_exp = jnp.repeat(s, b_per, axis=0)
    b_exp = jnp.repeat(b, b_per, axis=0)
    if residual is not None:
        g2, h2 = _bn_fold(bn2)
        sc = residual.reshape(Nb, Ho * Wo, residual.shape[-1])
        out = conv_gemm(patches, r_exp, w2, s_exp, b_exp, relu=True,
                        out_dtype=out_dtype, sc=sc, g=g2, h=h2)
    else:
        out = conv_gemm(patches, r_exp, w2, s_exp, b_exp, relu=relu,
                        out_dtype=out_dtype)
    # keep lane-padded channels; only slice off the padded pixel rows.
    return out[:, :Ho * Wo, :].reshape(Nb, Ho, Wo, out.shape[-1])


def wide_basic_block(x, bp, stride, b_per):
    # relu(bn1(dropout(conv1(x))))  -- Dropout2d is identity in eval mode.
    h1 = batch_conv(x, bp["conv1"], stride=1, padding=1, b_per=b_per,
                    bn=bp["bn1"], relu=True)
    if "shortcut" in bp:
        sc = batch_conv(x, bp["shortcut"], stride=stride, padding=0,
                        b_per=b_per)
    else:
        sc = x
    # conv2 + residual add + bn2 + ReLU fused into one GEMM epilogue.
    return batch_conv(h1, bp["conv2"], stride=stride, padding=1, b_per=b_per,
                      residual=sc, bn2=bp["bn2"])


def batch_linear(feat, lp, b_per):
    """BatchLinear: ((x*r) @ W) * s + bias, per-estimator r/s/bias."""
    Nb, Fp = feat.shape
    F, n_cls = lp["w"].shape
    w = lp["w"]
    r = lp["r"]
    if Fp > F:  # features arrive lane-padded from the conv stack
        w = jnp.pad(w, ((0, Fp - F), (0, 0)))
        r = jnp.pad(r, ((0, 0), (0, Fp - F)))
    r_exp = jnp.repeat(r, b_per, axis=0)
    s_exp = jnp.repeat(lp["s"], b_per, axis=0)
    b_exp = jnp.repeat(lp["b"], b_per, axis=0)
    out = conv_gemm(feat[:, None, :], r_exp, w, s_exp, b_exp,
                    relu=False, out_dtype=jnp.float32)
    return out[:, 0, :n_cls]


def batch_wideresnet_forward(x_nchw, params, *, num_estimators, block_strides,
                             style="imagenet"):
    B = x_nchw.shape[0]
    # out = x.repeat(num_estimators, 1, 1, 1)  (estimator-major batch)
    x = jnp.tile(x_nchw, (num_estimators, 1, 1, 1))
    x = jnp.transpose(x, (0, 2, 3, 1))  # NCHW -> NHWC
    b_per = B
    if style == "imagenet":
        h = batch_conv(x, params["conv1"], stride=2, padding=3, b_per=b_per,
                       bn=params["bn1"], relu=True)
        h = maxpool_3x3_s2_p1(h)
    else:
        h = batch_conv(x, params["conv1"], stride=1, padding=1, b_per=b_per,
                       bn=params["bn1"], relu=True)
    for layer_name, strides in zip(("layer1", "layer2", "layer3"),
                                   block_strides):
        for bp, stride in zip(params[layer_name], strides):
            h = wide_basic_block(h, bp, stride, b_per)
    # AdaptiveAvgPool2d(1) + Flatten; model-level Dropout is identity (eval).
    feat = jnp.mean(h.astype(jnp.float32), axis=(1, 2))  # (Nb, Cp_last)
    return batch_linear(feat, params["linear"], b_per)


# ----------------------------- parameter init -----------------------------


def _make_batchconv(key, cin, cout, ksz, M, bias):
    k1, k2, k3, k4 = jax.random.split(key, 4)
    fan_in = ksz * ksz * cin
    p = {
        "w": jax.random.normal(k1, (ksz, ksz, cin, cout), jnp.float32)
        * (1.0 / math.sqrt(fan_in)),
        "r": 1.0 + 0.1 * jax.random.normal(k2, (M, cin), jnp.float32),
        "s": 1.0 + 0.1 * jax.random.normal(k3, (M, cout), jnp.float32),
    }
    if bias:
        p["b"] = 0.1 * jax.random.normal(k4, (M, cout), jnp.float32)
    return p


def _make_bn(key, c):
    k1, k2, k3, k4 = jax.random.split(key, 4)
    return {
        "gamma": 1.0 + 0.1 * jax.random.normal(k1, (c,), jnp.float32),
        "beta": 0.1 * jax.random.normal(k2, (c,), jnp.float32),
        "mean": 0.1 * jax.random.normal(k3, (c,), jnp.float32),
        "var": 1.0 + 0.1 * jnp.abs(jax.random.normal(k4, (c,), jnp.float32)),
    }


def _make_block(key, cin, cout, stride, M):
    keys = jax.random.split(key, 5)
    bp = {
        "conv1": _make_batchconv(keys[0], cin, cout, 3, M, bias=False),
        "bn1": _make_bn(keys[1], cout),
        "conv2": _make_batchconv(keys[2], cout, cout, 3, M, bias=False),
        "bn2": _make_bn(keys[3], cout),
    }
    if stride != 1 or cin != cout:
        bp["shortcut"] = _make_batchconv(keys[4], cin, cout, 1, M, bias=True)
    return bp


def make_params(key, depth, widen_factor, in_channels, num_classes, M,
                style="imagenet"):
    assert (depth - 4) % 6 == 0, "Wide-resnet depth should be 6n+4."
    n = (depth - 4) // 6
    k = widen_factor
    stages = [16, 16 * k, 32 * k, 64 * k]
    keys = jax.random.split(key, 6)
    params = {}
    if style == "imagenet":
        params["conv1"] = _make_batchconv(keys[0], in_channels, stages[0], 7,
                                          M, bias=True)
    else:
        params["conv1"] = _make_batchconv(keys[0], in_channels, stages[0], 3,
                                          M, bias=True)
    params["bn1"] = _make_bn(keys[1], stages[0])
    in_planes = stages[0]
    block_strides = []  # static architecture info (NOT part of the jit pytree)
    for li, (planes, lstride, lk) in enumerate(
            zip(stages[1:], [1, 2, 2], keys[2:5])):
        strides = [lstride] + [1] * (n - 1)
        block_strides.append(tuple(strides))
        bkeys = jax.random.split(lk, n)
        blocks = []
        for stride, bkey in zip(strides, bkeys):
            blocks.append(_make_block(bkey, in_planes, planes, stride, M))
            in_planes = planes
        params[f"layer{li + 1}"] = blocks
    kl = jax.random.split(keys[5], 4)
    feat = stages[3]
    params["linear"] = {
        "w": jax.random.normal(kl[0], (feat, num_classes), jnp.float32)
        * (1.0 / math.sqrt(feat)),
        "r": 1.0 + 0.1 * jax.random.normal(kl[1], (M, feat), jnp.float32),
        "s": 1.0 + 0.1 * jax.random.normal(kl[2], (M, num_classes),
                                           jnp.float32),
        "b": 0.1 * jax.random.normal(kl[3], (M, num_classes), jnp.float32),
    }
    return params, tuple(block_strides)


# ----------------------------- main -----------------------------

if __name__ == "__main__":
    key = jax.random.PRNGKey(0)
    kp, kx = jax.random.split(key)
    depth, widen, in_ch, n_cls, M = 10, 1, 3, 10, 2  # depth=10 -> 1 block/stage
    params, block_strides = make_params(kp, depth, widen, in_ch, n_cls, M,
                                        style="imagenet")
    x = jax.random.normal(kx, (2, in_ch, 16, 16), jnp.float32)  # NCHW input

    fwd = jax.jit(partial(batch_wideresnet_forward, num_estimators=M,
                          block_strides=block_strides, style="imagenet"))
    out = fwd(x, params)
    jax.block_until_ready(out)
    assert out.shape == (2 * M, n_cls), out.shape
    assert bool(jnp.all(jnp.isfinite(out)))
    print("KERNEL_OK")
</pallas_src>

<mosaic_0001>
module attributes {stable_mosaic.version = 11 : i64} {
  func.func @_gemm_kernel(%arg0: i32, %arg1: i32, %arg2: i32, %arg3: memref<1x64x256xbf16, #tpu.memory_space<vmem>>, %arg4: memref<1x256x1xf32, #tpu.memory_space<vmem>>, %arg5: memref<256x128xbf16, #tpu.memory_space<vmem>>, %arg6: memref<1x1x128xf32, #tpu.memory_space<vmem>>, %arg7: memref<1x1x128xf32, #tpu.memory_space<vmem>>, %arg8: memref<1x64x128xbf16, #tpu.memory_space<vmem>>, %arg9: memref<64x128xf32, #tpu.memory_space<vmem>>) attributes {dimension_semantics = [#tpu.dimension_semantics<parallel>, #tpu.dimension_semantics<parallel>, #tpu.dimension_semantics<arbitrary>], iteration_bounds = array<i64: 4, 1, 1>, scalar_prefetch = 0 : i64, scratch_operands = 1 : i64, tpu.core_type = #tpu.core_type<tc>, window_params = [{transform_indices = @transform_0, window_bounds = array<i64: 1, 64, 256>}, {transform_indices = @transform_1, window_bounds = array<i64: 1, 256, 1>}, {transform_indices = @transform_2, window_bounds = array<i64: 256, 128>}, {transform_indices = @transform_3, window_bounds = array<i64: 1, 1, 128>}, {transform_indices = @transform_4, window_bounds = array<i64: 1, 1, 128>}, {transform_indices = @transform_5, window_bounds = array<i64: 1, 64, 128>}]} {
    %c0_i32 = arith.constant 0 : i32
    %0 = arith.cmpi eq, %arg2, %c0_i32 : i32
    %1 = arith.extui %0 : i1 to i32
    %c0_i32_0 = arith.constant 0 : i32
    %2 = arith.cmpi ne, %1, %c0_i32_0 : i32
    scf.if %2 {
      %cst_14 = arith.constant 0.000000e+00 : f32
      %19 = vector.broadcast %cst_14 : f32 to vector<64x128xf32>
      %c0_15 = arith.constant 0 : index
      %c0_16 = arith.constant 0 : index
      %20 = vector.load %arg9[%c0_15, %c0_16] : memref<64x128xf32, #tpu.memory_space<vmem>>, vector<64x128xf32>
      tpu.vector_store %arg9[%c0_15, %c0_16], %19 {strides = array<i32>} : memref<64x128xf32, #tpu.memory_space<vmem>>, vector<64x128xf32>,
    } else {
    }
    %c0 = arith.constant 0 : index
    %c0_1 = arith.constant 0 : index
    %3 = vector.load %arg5[%c0, %c0_1] : memref<256x128xbf16, #tpu.memory_space<vmem>>, vector<256x128xbf16>
    %c0_2 = arith.constant 0 : index
    %c0_3 = arith.constant 0 : index
    %c0_4 = arith.constant 0 : index
    %4 = vector.load %arg4[%c0_2, %c0_3, %c0_4] : memref<1x256x1xf32, #tpu.memory_space<vmem>>, vector<1x256x1xf32>
    %5 = vector.shape_cast %4 : vector<1x256x1xf32> to vector<256x1xf32>
    %6 = arith.extf %3 : vector<256x128xbf16> to vector<256x128xf32>
    %7 = vector.broadcast %5 : vector<256x1xf32> to vector<256x128xf32>
    %8 = arith.mulf %6, %7 : vector<256x128xf32>
    %9 = arith.truncf %8 : vector<256x128xf32> to vector<256x128xbf16>
    %c0_5 = arith.constant 0 : index
    %c0_6 = arith.constant 0 : index
    %10 = vector.load %arg9[%c0_5, %c0_6] : memref<64x128xf32, #tpu.memory_space<vmem>>, vector<64x128xf32>
    %c0_7 = arith.constant 0 : index
    %c0_8 = arith.constant 0 : index
    %c0_9 = arith.constant 0 : index
    %11 = vector.load %arg3[%c0_7, %c0_8, %c0_9] : memref<1x64x256xbf16, #tpu.memory_space<vmem>>, vector<1x64x256xbf16>
    %12 = vector.shape_cast %11 : vector<1x64x256xbf16> to vector<64x256xbf16>
    %cst = arith.constant dense<0.000000e+00> : vector<64x128xf32>
    %13 = tpu.matmul %12, %9, %cst {dimension_numbers = #tpu.dot_dimension_numbers<[1], [0], [0], [1], [0, 0, 1, 1], [], []>} : vector<64x256xbf16>, vector<256x128xbf16>, vector<64x128xf32> -> vector<64x128xf32>
    %14 = arith.addf %10, %13 : vector<64x128xf32>
    %c0_10 = arith.constant 0 : index
    %c0_11 = arith.constant 0 : index
    %15 = vector.load %arg9[%c0_10, %c0_11] : memref<64x128xf32, #tpu.memory_space<vmem>>, vector<64x128xf32>
    tpu.vector_store %arg9[%c0_10, %c0_11], %14 {strides = array<i32>} : memref<64x128xf32, #tpu.memory_space<vmem>>, vector<64x128xf32>,
    %c0_i32_12 = arith.constant 0 : i32
    %16 = arith.cmpi eq, %arg2, %c0_i32_12 : i32
    %17 = arith.extui %16 : i1 to i32
    %c0_i32_13 = arith.constant 0 : i32
    %18 = arith.cmpi ne, %17, %c0_i32_13 : i32
    scf.if %18 {
      %c0_14 = arith.constant 0 : index
      %c0_15 = arith.constant 0 : index
      %19 = vector.load %arg9[%c0_14, %c0_15] : memref<64x128xf32, #tpu.memory_space<vmem>>, vector<64x128xf32>
      %c0_16 = arith.constant 0 : index
      %c0_17 = arith.constant 0 : index
      %c0_18 = arith.constant 0 : index
      %20 = vector.load %arg6[%c0_16, %c0_17, %c0_18] : memref<1x1x128xf32, #tpu.memory_space<vmem>>, vector<1x1x128xf32>
      %21 = vector.shape_cast %20 : vector<1x1x128xf32> to vector<1x128xf32>
      %22 = vector.broadcast %21 : vector<1x128xf32> to vector<64x128xf32>
      %23 = arith.mulf %19, %22 : vector<64x128xf32>
      %c0_19 = arith.constant 0 : index
      %c0_20 = arith.constant 0 : index
      %c0_21 = arith.constant 0 : index
      %24 = vector.load %arg7[%c0_19, %c0_20, %c0_21] : memref<1x1x128xf32, #tpu.memory_space<vmem>>, vector<1x1x128xf32>
      %25 = vector.shape_cast %24 : vector<1x1x128xf32> to vector<1x128xf32>
      %26 = vector.broadcast %25 : vector<1x128xf32> to vector<64x128xf32>
      %27 = arith.addf %23, %26 : vector<64x128xf32>
      %cst_22 = arith.constant 0.000000e+00 : f32
      %28 = vector.broadcast %cst_22 : f32 to vector<64x128xf32>
      %29 = arith.maximumf %27, %28 : vector<64x128xf32>
      %30 = arith.truncf %29 : vector<64x128xf32> to vector<64x128xbf16>
      %c0_23 = arith.constant 0 : index
      %c0_24 = arith.constant 0 : index
      %c0_25 = arith.constant 0 : index
      %31 = vector.load %arg8[%c0_23, %c0_24, %c0_25] : memref<1x64x128xbf16, #tpu.memory_space<vmem>>, vector<1x64x128xbf16>
      %32 = vector.shape_cast %31 : vector<1x64x128xbf16> to vector<64x128xbf16>
      %33 = vector.shape_cast %30 : vector<64x128xbf16> to vector<1x64x128xbf16>
      tpu.vector_store %arg8[%c0_23, %c0_24, %c0_25], %33 {strides = array<i32>} : memref<1x64x128xbf16, #tpu.memory_space<vmem>>, vector<1x64x128xbf16>,
    } else {
    }
    return
  }
  func.func @transform_0(%arg0: i32, %arg1: i32, %arg2: i32) -> (i32, i32, i32) {
    %c0_i32 = arith.constant 0 : i32
    return %arg0, %arg1, %arg2 : i32, i32, i32
  }
  func.func @transform_1(%arg0: i32, %arg1: i32, %arg2: i32) -> (i32, i32, i32) {
    %c0_i32 = arith.constant 0 : i32
    %c0_i32_0 = arith.constant 0 : i32
    return %arg0, %arg2, %c0_i32 : i32, i32, i32
  }
  func.func @transform_2(%arg0: i32, %arg1: i32, %arg2: i32) -> (i32, i32) {
    %c0_i32 = arith.constant 0 : i32
    %c0_i32_0 = arith.constant 0 : i32
    return %arg2, %c0_i32 : i32, i32
  }
  func.func @transform_3(%arg0: i32, %arg1: i32, %arg2: i32) -> (i32, i32, i32) {
    %c0_i32 = arith.constant 0 : i32
    %c0_i32_0 = arith.constant 0 : i32
    %c0_i32_1 = arith.constant 0 : i32
    return %arg0, %c0_i32, %c0_i32_0 : i32, i32, i32
  }
  func.func @transform_4(%arg0: i32, %arg1: i32, %arg2: i32) -> (i32, i32, i32) {
    %c0_i32 = arith.constant 0 : i32
    %c0_i32_0 = arith.constant 0 : i32
    %c0_i32_1 = arith.constant 0 : i32
    return %arg0, %c0_i32, %c0_i32_0 : i32, i32, i32
  }
  func.func @transform_5(%arg0: i32, %arg1: i32, %arg2: i32) -> (i32, i32, i32) {
    %c0_i32 = arith.constant 0 : i32
    %c0_i32_0 = arith.constant 0 : i32
    return %arg0, %arg1, %c0_i32 : i32, i32, i32
  }
}

module attributes {stable_mosaic.version = 11 : i64} {
  func.func @_maxpool_kernel(%arg0: i32, %arg1: memref<1x5x5x128xbf16, #tpu.memory_space<vmem>>, %arg2: memref<1x5x5x128xbf16, #tpu.memory_space<vmem>>, %arg3: memref<1x5x5x128xbf16, #tpu.memory_space<vmem>>, %arg4: memref<1x5x5x128xbf16, #tpu.memory_space<vmem>>, %arg5: memref<1x4x4x128xbf16, #tpu.memory_space<vmem>>) attributes {dimension_semantics = [#tpu.dimension_semantics<parallel>], iteration_bounds = array<i64: 4>, scalar_prefetch = 0 : i64, scratch_operands = 0 : i64, tpu.core_type = #tpu.core_type<tc>, window_params = [{transform_indices = @transform_0, window_bounds = array<i64: 1, 5, 5, 128>}, {transform_indices = @transform_1, window_bounds = array<i64: 1, 5, 5, 128>}, {transform_indices = @transform_2, window_bounds = array<i64: 1, 5, 5, 128>}, {transform_indices = @transform_3, window_bounds = array<i64: 1, 5, 5, 128>}, {transform_indices = @transform_4, window_bounds = array<i64: 1, 4, 4, 128>}]} {
    %c0 = arith.constant 0 : index
    %c0_0 = arith.constant 0 : index
    %c0_1 = arith.constant 0 : index
    %c0_2 = arith.constant 0 : index
    %0 = vector.load %arg1[%c0, %c0_0, %c0_1, %c0_2] : memref<1x5x5x128xbf16, #tpu.memory_space<vmem>>, vector<1x5x5x128xbf16>
    %1 = vector.shape_cast %0 : vector<1x5x5x128xbf16> to vector<5x5x128xbf16>
    %c0_3 = arith.constant 0 : index
    %c0_4 = arith.constant 0 : index
    %c0_5 = arith.constant 0 : index
    %c0_6 = arith.constant 0 : index
    %2 = vector.load %arg2[%c0_3, %c0_4, %c0_5, %c0_6] : memref<1x5x5x128xbf16, #tpu.memory_space<vmem>>, vector<1x5x5x128xbf16>
    %3 = vector.shape_cast %2 : vector<1x5x5x128xbf16> to vector<5x5x128xbf16>
    %c0_7 = arith.constant 0 : index
    %c0_8 = arith.constant 0 : index
    %c0_9 = arith.constant 0 : index
    %c0_10 = arith.constant 0 : index
    %4 = vector.load %arg3[%c0_7, %c0_8, %c0_9, %c0_10] : memref<1x5x5x128xbf16, #tpu.memory_space<vmem>>, vector<1x5x5x128xbf16>
    %5 = vector.shape_cast %4 : vector<1x5x5x128xbf16> to vector<5x5x128xbf16>
    %c0_11 = arith.constant 0 : index
    %c0_12 = arith.constant 0 : index
    %c0_13 = arith.constant 0 : index
    %c0_14 = arith.constant 0 : index
    %6 = vector.load %arg4[%c0_11, %c0_12, %c0_13, %c0_14] : memref<1x5x5x128xbf16, #tpu.memory_space<vmem>>, vector<1x5x5x128xbf16>
    %7 = vector.shape_cast %6 : vector<1x5x5x128xbf16> to vector<5x5x128xbf16>
    %8 = vector.extract_strided_slice %1 {offsets = [0, 0, 0], sizes = [4, 4, 128], strides = [1, 1, 1]} : vector<5x5x128xbf16> to vector<4x4x128xbf16>
    %9 = vector.extract_strided_slice %1 {offsets = [0, 1, 0], sizes = [4, 4, 128], strides = [1, 1, 1]} : vector<5x5x128xbf16> to vector<4x4x128xbf16>
    %10 = arith.maximumf %8, %9 : vector<4x4x128xbf16>
    %11 = vector.extract_strided_slice %1 {offsets = [1, 0, 0], sizes = [4, 4, 128], strides = [1, 1, 1]} : vector<5x5x128xbf16> to vector<4x4x128xbf16>
    %12 = arith.maximumf %10, %11 : vector<4x4x128xbf16>
    %13 = vector.extract_strided_slice %1 {offsets = [1, 1, 0], sizes = [4, 4, 128], strides = [1, 1, 1]} : vector<5x5x128xbf16> to vector<4x4x128xbf16>
    %14 = arith.maximumf %12, %13 : vector<4x4x128xbf16>
    %15 = vector.extract_strided_slice %3 {offsets = [0, 0, 0], sizes = [4, 4, 128], strides = [1, 1, 1]} : vector<5x5x128xbf16> to vector<4x4x128xbf16>
    %16 = arith.maximumf %14, %15 : vector<4x4x128xbf16>
    %17 = vector.extract_strided_slice %3 {offsets = [1, 0, 0], sizes = [4, 4, 128], strides = [1, 1, 1]} : vector<5x5x128xbf16> to vector<4x4x128xbf16>
    %18 = arith.maximumf %16, %17 : vector<4x4x128xbf16>
    %19 = vector.extract_strided_slice %5 {offsets = [0, 0, 0], sizes = [4, 4, 128], strides = [1, 1, 1]} : vector<5x5x128xbf16> to vector<4x4x128xbf16>
    %20 = arith.maximumf %18, %19 : vector<4x4x128xbf16>
    %21 = vector.extract_strided_slice %5 {offsets = [0, 1, 0], sizes = [4, 4, 128], strides = [1, 1, 1]} : vector<5x5x128xbf16> to vector<4x4x128xbf16>
    %22 = arith.maximumf %20, %21 : vector<4x4x128xbf16>
    %23 = vector.extract_strided_slice %7 {offsets = [0, 0, 0], sizes = [4, 4, 128], strides = [1, 1, 1]} : vector<5x5x128xbf16> to vector<4x4x128xbf16>
    %24 = arith.maximumf %22, %23 : vector<4x4x128xbf16>
    %c0_15 = arith.constant 0 : index
    %c0_16 = arith.constant 0 : index
    %c0_17 = arith.constant 0 : index
    %c0_18 = arith.constant 0 : index
    %25 = vector.load %arg5[%c0_15, %c0_16, %c0_17, %c0_18] : memref<1x4x4x128xbf16, #tpu.memory_space<vmem>>, vector<1x4x4x128xbf16>
    %26 = vector.shape_cast %25 : vector<1x4x4x128xbf16> to vector<4x4x128xbf16>
    %27 = vector.shape_cast %24 : vector<4x4x128xbf16> to vector<1x4x4x128xbf16>
    tpu.vector_store %arg5[%c0_15, %c0_16, %c0_17, %c0_18], %27 {strides = array<i32>} : memref<1x4x4x128xbf16, #tpu.memory_space<vmem>>, vector<1x4x4x128xbf16>,
    return
  }
  func.func @transform_0(%arg0: i32) -> (i32, i32, i32, i32) {
    %c0_i32 = arith.constant 0 : i32
    %c0_i32_0 = arith.constant 0 : i32
    %c0_i32_1 = arith.constant 0 : i32
    %c0_i32_2 = arith.constant 0 : i32
    return %arg0, %c0_i32, %c0_i32_0, %c0_i32_1 : i32, i32, i32, i32
  }
  func.func @transform_1(%arg0: i32) -> (i32, i32, i32, i32) {
    %c0_i32 = arith.constant 0 : i32
    %c0_i32_0 = arith.constant 0 : i32
    %c0_i32_1 = arith.constant 0 : i32
    %c0_i32_2 = arith.constant 0 : i32
    return %arg0, %c0_i32, %c0_i32_0, %c0_i32_1 : i32, i32, i32, i32
  }
  func.func @transform_2(%arg0: i32) -> (i32, i32, i32, i32) {
    %c0_i32 = arith.constant 0 : i32
    %c0_i32_0 = arith.constant 0 : i32
    %c0_i32_1 = arith.constant 0 : i32
    %c0_i32_2 = arith.constant 0 : i32
    return %arg0, %c0_i32, %c0_i32_0, %c0_i32_1 : i32, i32, i32, i32
  }
  func.func @transform_3(%arg0: i32) -> (i32, i32, i32, i32) {
    %c0_i32 = arith.constant 0 : i32
    %c0_i32_0 = arith.constant 0 : i32
    %c0_i32_1 = arith.constant 0 : i32
    %c0_i32_2 = arith.constant 0 : i32
    return %arg0, %c0_i32, %c0_i32_0, %c0_i32_1 : i32, i32, i32, i32
  }
  func.func @transform_4(%arg0: i32) -> (i32, i32, i32, i32) {
    %c0_i32 = arith.constant 0 : i32
    %c0_i32_0 = arith.constant 0 : i32
    %c0_i32_1 = arith.constant 0 : i32
    %c0_i32_2 = arith.constant 0 : i32
    return %arg0, %c0_i32, %c0_i32_0, %c0_i32_1 : i32, i32, i32, i32
  }
}

module attributes {stable_mosaic.version = 11 : i64} {
  func.func @_gemm_kernel(%arg0: i32, %arg1: i32, %arg2: i32, %arg3: memref<1x16x384xbf16, #tpu.memory_space<vmem>>, %arg4: memref<1x384x1xf32, #tpu.memory_space<vmem>>, %arg5: memref<384x128xbf16, #tpu.memory_space<vmem>>, %arg6: memref<1x1x128xf32, #tpu.memory_space<vmem>>, %arg7: memref<1x1x128xf32, #tpu.memory_space<vmem>>, %arg8: memref<1x16x128xbf16, #tpu.memory_space<vmem>>, %arg9: memref<16x128xf32, #tpu.memory_space<vmem>>) attributes {dimension_semantics = [#tpu.dimension_semantics<parallel>, #tpu.dimension_semantics<parallel>, #tpu.dimension_semantics<arbitrary>], iteration_bounds = array<i64: 4, 1, 3>, scalar_prefetch = 0 : i64, scratch_operands = 1 : i64, tpu.core_type = #tpu.core_type<tc>, window_params = [{transform_indices = @transform_0, window_bounds = array<i64: 1, 16, 384>}, {transform_indices = @transform_1, window_bounds = array<i64: 1, 384, 1>}, {transform_indices = @transform_2, window_bounds = array<i64: 384, 128>}, {transform_indices = @transform_3, window_bounds = array<i64: 1, 1, 128>}, {transform_indices = @transform_4, window_bounds = array<i64: 1, 1, 128>}, {transform_indices = @transform_5, window_bounds = array<i64: 1, 16, 128>}]} {
    %c0_i32 = arith.constant 0 : i32
    %0 = arith.cmpi eq, %arg2, %c0_i32 : i32
    %1 = arith.extui %0 : i1 to i32
    %c0_i32_0 = arith.constant 0 : i32
    %2 = arith.cmpi ne, %1, %c0_i32_0 : i32
    scf.if %2 {
      %cst_13 = arith.constant 0.000000e+00 : f32
      %19 = vector.broadcast %cst_13 : f32 to vector<16x128xf32>
      %c0_14 = arith.constant 0 : index
      %c0_15 = arith.constant 0 : index
      %20 = vector.load %arg9[%c0_14, %c0_15] : memref<16x128xf32, #tpu.memory_space<vmem>>, vector<16x128xf32>
      tpu.vector_store %arg9[%c0_14, %c0_15], %19 {strides = array<i32>} : memref<16x128xf32, #tpu.memory_space<vmem>>, vector<16x128xf32>,
    } else {
    }
    %c0 = arith.constant 0 : index
    %c0_1 = arith.constant 0 : index
    %3 = vector.load %arg5[%c0, %c0_1] : memref<384x128xbf16, #tpu.memory_space<vmem>>, vector<384x128xbf16>
    %c0_2 = arith.constant 0 : index
    %c0_3 = arith.constant 0 : index
    %c0_4 = arith.constant 0 : index
    %4 = vector.load %arg4[%c0_2, %c0_3, %c0_4] : memref<1x384x1xf32, #tpu.memory_space<vmem>>, vector<1x384x1xf32>
    %5 = vector.shape_cast %4 : vector<1x384x1xf32> to vector<384x1xf32>
    %6 = arith.extf %3 : vector<384x128xbf16> to vector<384x128xf32>
    %7 = vector.broadcast %5 : vector<384x1xf32> to vector<384x128xf32>
    %8 = arith.mulf %6, %7 : vector<384x128xf32>
    %9 = arith.truncf %8 : vector<384x128xf32> to vector<384x128xbf16>
    %c0_5 = arith.constant 0 : index
    %c0_6 = arith.constant 0 : index
    %10 = vector.load %arg9[%c0_5, %c0_6] : memref<16x128xf32, #tpu.memory_space<vmem>>, vector<16x128xf32>
    %c0_7 = arith.constant 0 : index
    %c0_8 = arith.constant 0 : index
    %c0_9 = arith.constant 0 : index
    %11 = vector.load %arg3[%c0_7, %c0_8, %c0_9] : memref<1x16x384xbf16, #tpu.memory_space<vmem>>, vector<1x16x384xbf16>
    %12 = vector.shape_cast %11 : vector<1x16x384xbf16> to vector<16x384xbf16>
    %cst = arith.constant dense<0.000000e+00> : vector<16x128xf32>
    %13 = tpu.matmul %12, %9, %cst {dimension_numbers = #tpu.dot_dimension_numbers<[1], [0], [0], [1], [0, 0, 1, 1], [], []>} : vector<16x384xbf16>, vector<384x128xbf16>, vector<16x128xf32> -> vector<16x128xf32>
    %14 = arith.addf %10, %13 : vector<16x128xf32>
    %c0_10 = arith.constant 0 : index
    %c0_11 = arith.constant 0 : index
    %15 = vector.load %arg9[%c0_10, %c0_11] : memref<16x128xf32, #tpu.memory_space<vmem>>, vector<16x128xf32>
    tpu.vector_store %arg9[%c0_10, %c0_11], %14 {strides = array<i32>} : memref<16x128xf32, #tpu.memory_space<vmem>>, vector<16x128xf32>,
    %c2_i32 = arith.constant 2 : i32
    %16 = arith.cmpi eq, %arg2, %c2_i32 : i32
    %17 = arith.extui %16 : i1 to i32
    %c0_i32_12 = arith.constant 0 : i32
    %18 = arith.cmpi ne, %17, %c0_i32_12 : i32
    scf.if %18 {
      %c0_13 = arith.constant 0 : index
      %c0_14 = arith.constant 0 : index
      %19 = vector.load %arg9[%c0_13, %c0_14] : memref<16x128xf32, #tpu.memory_space<vmem>>, vector<16x128xf32>
      %c0_15 = arith.constant 0 : index
      %c0_16 = arith.constant 0 : index
      %c0_17 = arith.constant 0 : index
      %20 = vector.load %arg6[%c0_15, %c0_16, %c0_17] : memref<1x1x128xf32, #tpu.memory_space<vmem>>, vector<1x1x128xf32>
      %21 = vector.shape_cast %20 : vector<1x1x128xf32> to vector<1x128xf32>
      %22 = vector.broadcast %21 : vector<1x128xf32> to vector<16x128xf32>
      %23 = arith.mulf %19, %22 : vector<16x128xf32>
      %c0_18 = arith.constant 0 : index
      %c0_19 = arith.constant 0 : index
      %c0_20 = arith.constant 0 : index
      %24 = vector.load %arg7[%c0_18, %c0_19, %c0_20] : memref<1x1x128xf32, #tpu.memory_space<vmem>>, vector<1x1x128xf32>
      %25 = vector.shape_cast %24 : vector<1x1x128xf32> to vector<1x128xf32>
      %26 = vector.broadcast %25 : vector<1x128xf32> to vector<16x128xf32>
      %27 = arith.addf %23, %26 : vector<16x128xf32>
      %cst_21 = arith.constant 0.000000e+00 : f32
      %28 = vector.broadcast %cst_21 : f32 to vector<16x128xf32>
      %29 = arith.maximumf %27, %28 : vector<16x128xf32>
      %30 = arith.truncf %29 : vector<16x128xf32> to vector<16x128xbf16>
      %c0_22 = arith.constant 0 : index
      %c0_23 = arith.constant 0 : index
      %c0_24 = arith.constant 0 : index
      %31 = vector.load %arg8[%c0_22, %c0_23, %c0_24] : memref<1x16x128xbf16, #tpu.memory_space<vmem>>, vector<1x16x128xbf16>
      %32 = vector.shape_cast %31 : vector<1x16x128xbf16> to vector<16x128xbf16>
      %33 = vector.shape_cast %30 : vector<16x128xbf16> to vector<1x16x128xbf16>
      tpu.vector_store %arg8[%c0_22, %c0_23, %c0_24], %33 {strides = array<i32>} : memref<1x16x128xbf16, #tpu.memory_space<vmem>>, vector<1x16x128xbf16>,
    } else {
    }
    return
  }
  func.func @transform_0(%arg0: i32, %arg1: i32, %arg2: i32) -> (i32, i32, i32) {
    %c0_i32 = arith.constant 0 : i32
    return %arg0, %arg1, %arg2 : i32, i32, i32
  }
  func.func @transform_1(%arg0: i32, %arg1: i32, %arg2: i32) -> (i32, i32, i32) {
    %c0_i32 = arith.constant 0 : i32
    %c0_i32_0 = arith.constant 0 : i32
    return %arg0, %arg2, %c0_i32 : i32, i32, i32
  }
  func.func @transform_2(%arg0: i32, %arg1: i32, %arg2: i32) -> (i32, i32) {
    %c0_i32 = arith.constant 0 : i32
    %c0_i32_0 = arith.constant 0 : i32
    return %arg2, %c0_i32 : i32, i32
  }
  func.func @transform_3(%arg0: i32, %arg1: i32, %arg2: i32) -> (i32, i32, i32) {
    %c0_i32 = arith.constant 0 : i32
    %c0_i32_0 = arith.constant 0 : i32
    %c0_i32_1 = arith.constant 0 : i32
    return %arg0, %c0_i32, %c0_i32_0 : i32, i32, i32
  }
  func.func @transform_4(%arg0: i32, %arg1: i32, %arg2: i32) -> (i32, i32, i32) {
    %c0_i32 = arith.constant 0 : i32
    %c0_i32_0 = arith.constant 0 : i32
    %c0_i32_1 = arith.constant 0 : i32
    return %arg0, %c0_i32, %c0_i32_0 : i32, i32, i32
  }
  func.func @transform_5(%arg0: i32, %arg1: i32, %arg2: i32) -> (i32, i32, i32) {
    %c0_i32 = arith.constant 0 : i32
    %c0_i32_0 = arith.constant 0 : i32
    return %arg0, %arg1, %c0_i32 : i32, i32, i32
  }
}

module attributes {stable_mosaic.version = 11 : i64} {
  func.func @_gemm_kernel(%arg0: i32, %arg1: i32, %arg2: i32, %arg3: memref<1x16x384xbf16, #tpu.memory_space<vmem>>, %arg4: memref<1x384x1xf32, #tpu.memory_space<vmem>>, %arg5: memref<384x128xbf16, #tpu.memory_space<vmem>>, %arg6: memref<1x1x128xf32, #tpu.memory_space<vmem>>, %arg7: memref<1x1x128xf32, #tpu.memory_space<vmem>>, %arg8: memref<1x16x128xbf16, #tpu.memory_space<vmem>>, %arg9: memref<1x1x128xf32, #tpu.memory_space<vmem>>, %arg10: memref<1x1x128xf32, #tpu.memory_space<vmem>>, %arg11: memref<1x16x128xbf16, #tpu.memory_space<vmem>>, %arg12: memref<16x128xf32, #tpu.memory_space<vmem>>) attributes {dimension_semantics = [#tpu.dimension_semantics<parallel>, #tpu.dimension_semantics<parallel>, #tpu.dimension_semantics<arbitrary>], iteration_bounds = array<i64: 4, 1, 3>, scalar_prefetch = 0 : i64, scratch_operands = 1 : i64, tpu.core_type = #tpu.core_type<tc>, window_params = [{transform_indices = @transform_0, window_bounds = array<i64: 1, 16, 384>}, {transform_indices = @transform_1, window_bounds = array<i64: 1, 384, 1>}, {transform_indices = @transform_2, window_bounds = array<i64: 384, 128>}, {transform_indices = @transform_3, window_bounds = array<i64: 1, 1, 128>}, {transform_indices = @transform_4, window_bounds = array<i64: 1, 1, 128>}, {transform_indices = @transform_5, window_bounds = array<i64: 1, 16, 128>}, {pipeline_mode = #tpu.pipeline_mode<synchronous>, transform_indices = @transform_6, window_bounds = array<i64: 1, 1, 128>}, {pipeline_mode = #tpu.pipeline_mode<synchronous>, transform_indices = @transform_7, window_bounds = array<i64: 1, 1, 128>}, {transform_indices = @transform_8, window_bounds = array<i64: 1, 16, 128>}]} {
    %c0_i32 = arith.constant 0 : i32
    %0 = arith.cmpi eq, %arg2, %c0_i32 : i32
    %1 = arith.extui %0 : i1 to i32
    %c0_i32_0 = arith.constant 0 : i32
    %2 = arith.cmpi ne, %1, %c0_i32_0 : i32
    scf.if %2 {
      %cst_13 = arith.constant 0.000000e+00 : f32
      %19 = vector.broadcast %cst_13 : f32 to vector<16x128xf32>
      %c0_14 = arith.constant 0 : index
      %c0_15 = arith.constant 0 : index
      %20 = vector.load %arg12[%c0_14, %c0_15] : memref<16x128xf32, #tpu.memory_space<vmem>>, vector<16x128xf32>
      tpu.vector_store %arg12[%c0_14, %c0_15], %19 {strides = array<i32>} : memref<16x128xf32, #tpu.memory_space<vmem>>, vector<16x128xf32>,
    } else {
    }
    %c0 = arith.constant 0 : index
    %c0_1 = arith.constant 0 : index
    %3 = vector.load %arg5[%c0, %c0_1] : memref<384x128xbf16, #tpu.memory_space<vmem>>, vector<384x128xbf16>
    %c0_2 = arith.constant 0 : index
    %c0_3 = arith.constant 0 : index
    %c0_4 = arith.constant 0 : index
    %4 = vector.load %arg4[%c0_2, %c0_3, %c0_4] : memref<1x384x1xf32, #tpu.memory_space<vmem>>, vector<1x384x1xf32>
    %5 = vector.shape_cast %4 : vector<1x384x1xf32> to vector<384x1xf32>
    %6 = arith.extf %3 : vector<384x128xbf16> to vector<384x128xf32>
    %7 = vector.broadcast %5 : vector<384x1xf32> to vector<384x128xf32>
    %8 = arith.mulf %6, %7 : vector<384x128xf32>
    %9 = arith.truncf %8 : vector<384x128xf32> to vector<384x128xbf16>
    %c0_5 = arith.constant 0 : index
    %c0_6 = arith.constant 0 : index
    %10 = vector.load %arg12[%c0_5, %c0_6] : memref<16x128xf32, #tpu.memory_space<vmem>>, vector<16x128xf32>
    %c0_7 = arith.constant 0 : index
    %c0_8 = arith.constant 0 : index
    %c0_9 = arith.constant 0 : index
    %11 = vector.load %arg3[%c0_7, %c0_8, %c0_9] : memref<1x16x384xbf16, #tpu.memory_space<vmem>>, vector<1x16x384xbf16>
    %12 = vector.shape_cast %11 : vector<1x16x384xbf16> to vector<16x384xbf16>
    %cst = arith.constant dense<0.000000e+00> : vector<16x128xf32>
    %13 = tpu.matmul %12, %9, %cst {dimension_numbers = #tpu.dot_dimension_numbers<[1], [0], [0], [1], [0, 0, 1, 1], [], []>} : vector<16x384xbf16>, vector<384x128xbf16>, vector<16x128xf32> -> vector<16x128xf32>
    %14 = arith.addf %10, %13 : vector<16x128xf32>
    %c0_10 = arith.constant 0 : index
    %c0_11 = arith.constant 0 : index
    %15 = vector.load %arg12[%c0_10, %c0_11] : memref<16x128xf32, #tpu.memory_space<vmem>>, vector<16x128xf32>
    tpu.vector_store %arg12[%c0_10, %c0_11], %14 {strides = array<i32>} : memref<16x128xf32, #tpu.memory_space<vmem>>, vector<16x128xf32>,
    %c2_i32 = arith.constant 2 : i32
    %16 = arith.cmpi eq, %arg2, %c2_i32 : i32
    %17 = arith.extui %16 : i1 to i32
    %c0_i32_12 = arith.constant 0 : i32
    %18 = arith.cmpi ne, %17, %c0_i32_12 : i32
    scf.if %18 {
      %c0_13 = arith.constant 0 : index
      %c0_14 = arith.constant 0 : index
      %19 = vector.load %arg12[%c0_13, %c0_14] : memref<16x128xf32, #tpu.memory_space<vmem>>, vector<16x128xf32>
      %c0_15 = arith.constant 0 : index
      %c0_16 = arith.constant 0 : index
      %c0_17 = arith.constant 0 : index
      %20 = vector.load %arg6[%c0_15, %c0_16, %c0_17] : memref<1x1x128xf32, #tpu.memory_space<vmem>>, vector<1x1x128xf32>
      %21 = vector.shape_cast %20 : vector<1x1x128xf32> to vector<1x128xf32>
      %22 = vector.broadcast %21 : vector<1x128xf32> to vector<16x128xf32>
      %23 = arith.mulf %19, %22 : vector<16x128xf32>
      %c0_18 = arith.constant 0 : index
      %c0_19 = arith.constant 0 : index
      %c0_20 = arith.constant 0 : index
      %24 = vector.load %arg7[%c0_18, %c0_19, %c0_20] : memref<1x1x128xf32, #tpu.memory_space<vmem>>, vector<1x1x128xf32>
      %25 = vector.shape_cast %24 : vector<1x1x128xf32> to vector<1x128xf32>
      %26 = vector.broadcast %25 : vector<1x128xf32> to vector<16x128xf32>
      %27 = arith.addf %23, %26 : vector<16x128xf32>
      %c0_21 = arith.constant 0 : index
      %c0_22 = arith.constant 0 : index
      %c0_23 = arith.constant 0 : index
      %28 = vector.load %arg8[%c0_21, %c0_22, %c0_23] : memref<1x16x128xbf16, #tpu.memory_space<vmem>>, vector<1x16x128xbf16>
      %29 = vector.shape_cast %28 : vector<1x16x128xbf16> to vector<16x128xbf16>
      %30 = arith.extf %29 : vector<16x128xbf16> to vector<16x128xf32>
      %31 = arith.addf %27, %30 : vector<16x128xf32>
      %c0_24 = arith.constant 0 : index
      %c0_25 = arith.constant 0 : index
      %c0_26 = arith.constant 0 : index
      %32 = vector.load %arg9[%c0_24, %c0_25, %c0_26] : memref<1x1x128xf32, #tpu.memory_space<vmem>>, vector<1x1x128xf32>
      %33 = vector.shape_cast %32 : vector<1x1x128xf32> to vector<1x128xf32>
      %34 = vector.broadcast %33 : vector<1x128xf32> to vector<16x128xf32>
      %35 = arith.mulf %31, %34 : vector<16x128xf32>
      %c0_27 = arith.constant 0 : index
      %c0_28 = arith.constant 0 : index
      %c0_29 = arith.constant 0 : index
      %36 = vector.load %arg10[%c0_27, %c0_28, %c0_29] : memref<1x1x128xf32, #tpu.memory_space<vmem>>, vector<1x1x128xf32>
      %37 = vector.shape_cast %36 : vector<1x1x128xf32> to vector<1x128xf32>
      %38 = vector.broadcast %37 : vector<1x128xf32> to vector<16x128xf32>
      %39 = arith.addf %35, %38 : vector<16x128xf32>
      %cst_30 = arith.constant 0.000000e+00 : f32
      %40 = vector.broadcast %cst_30 : f32 to vector<16x128xf32>
      %41 = arith.maximumf %39, %40 : vector<16x128xf32>
      %42 = arith.truncf %41 : vector<16x128xf32> to vector<16x128xbf16>
      %c0_31 = arith.constant 0 : index
      %c0_32 = arith.constant 0 : index
      %c0_33 = arith.constant 0 : index
      %43 = vector.load %arg11[%c0_31, %c0_32, %c0_33] : memref<1x16x128xbf16, #tpu.memory_space<vmem>>, vector<1x16x128xbf16>
      %44 = vector.shape_cast %43 : vector<1x16x128xbf16> to vector<16x128xbf16>
      %45 = vector.shape_cast %42 : vector<16x128xbf16> to vector<1x16x128xbf16>
      tpu.vector_store %arg11[%c0_31, %c0_32, %c0_33], %45 {strides = array<i32>} : memref<1x16x128xbf16, #tpu.memory_space<vmem>>, vector<1x16x128xbf16>,
    } else {
    }
    return
  }
  func.func @transform_0(%arg0: i32, %arg1: i32, %arg2: i32) -> (i32, i32, i32) {
    %c0_i32 = arith.constant 0 : i32
    return %arg0, %arg1, %arg2 : i32, i32, i32
  }
  func.func @transform_1(%arg0: i32, %arg1: i32, %arg2: i32) -> (i32, i32, i32) {
    %c0_i32 = arith.constant 0 : i32
    %c0_i32_0 = arith.constant 0 : i32
    return %arg0, %arg2, %c0_i32 : i32, i32, i32
  }
  func.func @transform_2(%arg0: i32, %arg1: i32, %arg2: i32) -> (i32, i32) {
    %c0_i32 = arith.constant 0 : i32
    %c0_i32_0 = arith.constant 0 : i32
    return %arg2, %c0_i32 : i32, i32
  }
  func.func @transform_3(%arg0: i32, %arg1: i32, %arg2: i32) -> (i32, i32, i32) {
    %c0_i32 = arith.constant 0 : i32
    %c0_i32_0 = arith.constant 0 : i32
    %c0_i32_1 = arith.constant 0 : i32
    return %arg0, %c0_i32, %c0_i32_0 : i32, i32, i32
  }
  func.func @transform_4(%arg0: i32, %arg1: i32, %arg2: i32) -> (i32, i32, i32) {
    %c0_i32 = arith.constant 0 : i32
    %c0_i32_0 = arith.constant 0 : i32
    %c0_i32_1 = arith.constant 0 : i32
    return %arg0, %c0_i32, %c0_i32_0 : i32, i32, i32
  }
  func.func @transform_5(%arg0: i32, %arg1: i32, %arg2: i32) -> (i32, i32, i32) {
    %c0_i32 = arith.constant 0 : i32
    %c0_i32_0 = arith.constant 0 : i32
    return %arg0, %arg1, %c0_i32 : i32, i32, i32
  }
  func.func @transform_6(%arg0: i32, %arg1: i32, %arg2: i32) -> (i32, i32, i32) {
    %c0_i32 = arith.constant 0 : i32
    %c0_i32_0 = arith.constant 0 : i32
    %c0_i32_1 = arith.constant 0 : i32
    %c0_i32_2 = arith.constant 0 : i32
    return %c0_i32, %c0_i32_0, %c0_i32_1 : i32, i32, i32
  }
  func.func @transform_7(%arg0: i32, %arg1: i32, %arg2: i32) -> (i32, i32, i32) {
    %c0_i32 = arith.constant 0 : i32
    %c0_i32_0 = arith.constant 0 : i32
    %c0_i32_1 = arith.constant 0 : i32
    %c0_i32_2 = arith.constant 0 : i32
    return %c0_i32, %c0_i32_0, %c0_i32_1 : i32, i32, i32
  }
  func.func @transform_8(%arg0: i32, %arg1: i32, %arg2: i32) -> (i32, i32, i32) {
    %c0_i32 = arith.constant 0 : i32
    %c0_i32_0 = arith.constant 0 : i32
    return %arg0, %arg1, %c0_i32 : i32, i32, i32
  }
}

module attributes {stable_mosaic.version = 11 : i64} {
  func.func @_gemm_kernel(%arg0: i32, %arg1: i32, %arg2: i32, %arg3: memref<1x16x128xbf16, #tpu.memory_space<vmem>>, %arg4: memref<1x128x1xf32, #tpu.memory_space<vmem>>, %arg5: memref<128x128xbf16, #tpu.memory_space<vmem>>, %arg6: memref<1x1x128xf32, #tpu.memory_space<vmem>>, %arg7: memref<1x1x128xf32, #tpu.memory_space<vmem>>, %arg8: memref<1x16x128xbf16, #tpu.memory_space<vmem>>, %arg9: memref<16x128xf32, #tpu.memory_space<vmem>>) attributes {dimension_semantics = [#tpu.dimension_semantics<parallel>, #tpu.dimension_semantics<parallel>, #tpu.dimension_semantics<arbitrary>], iteration_bounds = array<i64: 4, 1, 1>, scalar_prefetch = 0 : i64, scratch_operands = 1 : i64, tpu.core_type = #tpu.core_type<tc>, window_params = [{transform_indices = @transform_0, window_bounds = array<i64: 1, 16, 128>}, {transform_indices = @transform_1, window_bounds = array<i64: 1, 128, 1>}, {transform_indices = @transform_2, window_bounds = array<i64: 128, 128>}, {transform_indices = @transform_3, window_bounds = array<i64: 1, 1, 128>}, {transform_indices = @transform_4, window_bounds = array<i64: 1, 1, 128>}, {transform_indices = @transform_5, window_bounds = array<i64: 1, 16, 128>}]} {
    %c0_i32 = arith.constant 0 : i32
    %0 = arith.cmpi eq, %arg2, %c0_i32 : i32
    %1 = arith.extui %0 : i1 to i32
    %c0_i32_0 = arith.constant 0 : i32
    %2 = arith.cmpi ne, %1, %c0_i32_0 : i32
    scf.if %2 {
      %cst_14 = arith.constant 0.000000e+00 : f32
      %19 = vector.broadcast %cst_14 : f32 to vector<16x128xf32>
      %c0_15 = arith.constant 0 : index
      %c0_16 = arith.constant 0 : index
      %20 = vector.load %arg9[%c0_15, %c0_16] : memref<16x128xf32, #tpu.memory_space<vmem>>, vector<16x128xf32>
      tpu.vector_store %arg9[%c0_15, %c0_16], %19 {strides = array<i32>} : memref<16x128xf32, #tpu.memory_space<vmem>>, vector<16x128xf32>,
    } else {
    }
    %c0 = arith.constant 0 : index
    %c0_1 = arith.constant 0 : index
    %3 = vector.load %arg5[%c0, %c0_1] : memref<128x128xbf16, #tpu.memory_space<vmem>>, vector<128x128xbf16>
    %c0_2 = arith.constant 0 : index
    %c0_3 = arith.constant 0 : index
    %c0_4 = arith.constant 0 : index
    %4 = vector.load %arg4[%c0_2, %c0_3, %c0_4] : memref<1x128x1xf32, #tpu.memory_space<vmem>>, vector<1x128x1xf32>
    %5 = vector.shape_cast %4 : vector<1x128x1xf32> to vector<128x1xf32>
    %6 = arith.extf %3 : vector<128x128xbf16> to vector<128x128xf32>
    %7 = vector.broadcast %5 : vector<128x1xf32> to vector<128x128xf32>
    %8 = arith.mulf %6, %7 : vector<128x128xf32>
    %9 = arith.truncf %8 : vector<128x128xf32> to vector<128x128xbf16>
    %c0_5 = arith.constant 0 : index
    %c0_6 = arith.constant 0 : index
    %10 = vector.load %arg9[%c0_5, %c0_6] : memref<16x128xf32, #tpu.memory_space<vmem>>, vector<16x128xf32>
    %c0_7 = arith.constant 0 : index
    %c0_8 = arith.constant 0 : index
    %c0_9 = arith.constant 0 : index
    %11 = vector.load %arg3[%c0_7, %c0_8, %c0_9] : memref<1x16x128xbf16, #tpu.memory_space<vmem>>, vector<1x16x128xbf16>
    %12 = vector.shape_cast %11 : vector<1x16x128xbf16> to vector<16x128xbf16>
    %cst = arith.constant dense<0.000000e+00> : vector<16x128xf32>
    %13 = tpu.matmul %12, %9, %cst {dimension_numbers = #tpu.dot_dimension_numbers<[1], [0], [0], [1], [0, 0, 1, 1], [], []>} : vector<16x128xbf16>, vector<128x128xbf16>, vector<16x128xf32> -> vector<16x128xf32>
    %14 = arith.addf %10, %13 : vector<16x128xf32>
    %c0_10 = arith.constant 0 : index
    %c0_11 = arith.constant 0 : index
    %15 = vector.load %arg9[%c0_10, %c0_11] : memref<16x128xf32, #tpu.memory_space<vmem>>, vector<16x128xf32>
    tpu.vector_store %arg9[%c0_10, %c0_11], %14 {strides = array<i32>} : memref<16x128xf32, #tpu.memory_space<vmem>>, vector<16x128xf32>,
    %c0_i32_12 = arith.constant 0 : i32
    %16 = arith.cmpi eq, %arg2, %c0_i32_12 : i32
    %17 = arith.extui %16 : i1 to i32
    %c0_i32_13 = arith.constant 0 : i32
    %18 = arith.cmpi ne, %17, %c0_i32_13 : i32
    scf.if %18 {
      %c0_14 = arith.constant 0 : index
      %c0_15 = arith.constant 0 : index
      %19 = vector.load %arg9[%c0_14, %c0_15] : memref<16x128xf32, #tpu.memory_space<vmem>>, vector<16x128xf32>
      %c0_16 = arith.constant 0 : index
      %c0_17 = arith.constant 0 : index
      %c0_18 = arith.constant 0 : index
      %20 = vector.load %arg6[%c0_16, %c0_17, %c0_18] : memref<1x1x128xf32, #tpu.memory_space<vmem>>, vector<1x1x128xf32>
      %21 = vector.shape_cast %20 : vector<1x1x128xf32> to vector<1x128xf32>
      %22 = vector.broadcast %21 : vector<1x128xf32> to vector<16x128xf32>
      %23 = arith.mulf %19, %22 : vector<16x128xf32>
      %c0_19 = arith.constant 0 : index
      %c0_20 = arith.constant 0 : index
      %c0_21 = arith.constant 0 : index
      %24 = vector.load %arg7[%c0_19, %c0_20, %c0_21] : memref<1x1x128xf32, #tpu.memory_space<vmem>>, vector<1x1x128xf32>
      %25 = vector.shape_cast %24 : vector<1x1x128xf32> to vector<1x128xf32>
      %26 = vector.broadcast %25 : vector<1x128xf32> to vector<16x128xf32>
      %27 = arith.addf %23, %26 : vector<16x128xf32>
      %28 = arith.truncf %27 : vector<16x128xf32> to vector<16x128xbf16>
      %c0_22 = arith.constant 0 : index
      %c0_23 = arith.constant 0 : index
      %c0_24 = arith.constant 0 : index
      %29 = vector.load %arg8[%c0_22, %c0_23, %c0_24] : memref<1x16x128xbf16, #tpu.memory_space<vmem>>, vector<1x16x128xbf16>
      %30 = vector.shape_cast %29 : vector<1x16x128xbf16> to vector<16x128xbf16>
      %31 = vector.shape_cast %28 : vector<16x128xbf16> to vector<1x16x128xbf16>
      tpu.vector_store %arg8[%c0_22, %c0_23, %c0_24], %31 {strides = array<i32>} : memref<1x16x128xbf16, #tpu.memory_space<vmem>>, vector<1x16x128xbf16>,
    } else {
    }
    return
  }
  func.func @transform_0(%arg0: i32, %arg1: i32, %arg2: i32) -> (i32, i32, i32) {
    %c0_i32 = arith.constant 0 : i32
    return %arg0, %arg1, %arg2 : i32, i32, i32
  }
  func.func @transform_1(%arg0: i32, %arg1: i32, %arg2: i32) -> (i32, i32, i32) {
    %c0_i32 = arith.constant 0 : i32
    %c0_i32_0 = arith.constant 0 : i32
    return %arg0, %arg2, %c0_i32 : i32, i32, i32
  }
  func.func @transform_2(%arg0: i32, %arg1: i32, %arg2: i32) -> (i32, i32) {
    %c0_i32 = arith.constant 0 : i32
    %c0_i32_0 = arith.constant 0 : i32
    return %arg2, %c0_i32 : i32, i32
  }
  func.func @transform_3(%arg0: i32, %arg1: i32, %arg2: i32) -> (i32, i32, i32) {
    %c0_i32 = arith.constant 0 : i32
    %c0_i32_0 = arith.constant 0 : i32
    %c0_i32_1 = arith.constant 0 : i32
    return %arg0, %c0_i32, %c0_i32_0 : i32, i32, i32
  }
  func.func @transform_4(%arg0: i32, %arg1: i32, %arg2: i32) -> (i32, i32, i32) {
    %c0_i32 = arith.constant 0 : i32
    %c0_i32_0 = arith.constant 0 : i32
    %c0_i32_1 = arith.constant 0 : i32
    return %arg0, %c0_i32, %c0_i32_0 : i32, i32, i32
  }
  func.func @transform_5(%arg0: i32, %arg1: i32, %arg2: i32) -> (i32, i32, i32) {
    %c0_i32 = arith.constant 0 : i32
    %c0_i32_0 = arith.constant 0 : i32
    return %arg0, %arg1, %c0_i32 : i32, i32, i32
  }
}

module attributes {stable_mosaic.version = 11 : i64} {
  func.func @_gemm_kernel(%arg0: i32, %arg1: i32, %arg2: i32, %arg3: memref<1x16x128xbf16, #tpu.memory_space<vmem>>, %arg4: memref<1x128x1xf32, #tpu.memory_space<vmem>>, %arg5: memref<128x128xbf16, #tpu.memory_space<vmem>>, %arg6: memref<1x1x128xf32, #tpu.memory_space<vmem>>, %arg7: memref<1x1x128xf32, #tpu.memory_space<vmem>>, %arg8: memref<1x16x128xf32, #tpu.memory_space<vmem>>, %arg9: memref<16x128xf32, #tpu.memory_space<vmem>>) attributes {dimension_semantics = [#tpu.dimension_semantics<parallel>, #tpu.dimension_semantics<parallel>, #tpu.dimension_semantics<arbitrary>], iteration_bounds = array<i64: 4, 1, 1>, scalar_prefetch = 0 : i64, scratch_operands = 1 : i64, tpu.core_type = #tpu.core_type<tc>, window_params = [{transform_indices = @transform_0, window_bounds = array<i64: 1, 16, 128>}, {transform_indices = @transform_1, window_bounds = array<i64: 1, 128, 1>}, {transform_indices = @transform_2, window_bounds = array<i64: 128, 128>}, {transform_indices = @transform_3, window_bounds = array<i64: 1, 1, 128>}, {transform_indices = @transform_4, window_bounds = array<i64: 1, 1, 128>}, {transform_indices = @transform_5, window_bounds = array<i64: 1, 16, 128>}]} {
    %c0_i32 = arith.constant 0 : i32
    %0 = arith.cmpi eq, %arg2, %c0_i32 : i32
    %1 = arith.extui %0 : i1 to i32
    %c0_i32_0 = arith.constant 0 : i32
    %2 = arith.cmpi ne, %1, %c0_i32_0 : i32
    scf.if %2 {
      %cst_14 = arith.constant 0.000000e+00 : f32
      %19 = vector.broadcast %cst_14 : f32 to vector<16x128xf32>
      %c0_15 = arith.constant 0 : index
      %c0_16 = arith.constant 0 : index
      %20 = vector.load %arg9[%c0_15, %c0_16] : memref<16x128xf32, #tpu.memory_space<vmem>>, vector<16x128xf32>
      tpu.vector_store %arg9[%c0_15, %c0_16], %19 {strides = array<i32>} : memref<16x128xf32, #tpu.memory_space<vmem>>, vector<16x128xf32>,
    } else {
    }
    %c0 = arith.constant 0 : index
    %c0_1 = arith.constant 0 : index
    %3 = vector.load %arg5[%c0, %c0_1] : memref<128x128xbf16, #tpu.memory_space<vmem>>, vector<128x128xbf16>
    %c0_2 = arith.constant 0 : index
    %c0_3 = arith.constant 0 : index
    %c0_4 = arith.constant 0 : index
    %4 = vector.load %arg4[%c0_2, %c0_3, %c0_4] : memref<1x128x1xf32, #tpu.memory_space<vmem>>, vector<1x128x1xf32>
    %5 = vector.shape_cast %4 : vector<1x128x1xf32> to vector<128x1xf32>
    %6 = arith.extf %3 : vector<128x128xbf16> to vector<128x128xf32>
    %7 = vector.broadcast %5 : vector<128x1xf32> to vector<128x128xf32>
    %8 = arith.mulf %6, %7 : vector<128x128xf32>
    %9 = arith.truncf %8 : vector<128x128xf32> to vector<128x128xbf16>
    %c0_5 = arith.constant 0 : index
    %c0_6 = arith.constant 0 : index
    %10 = vector.load %arg9[%c0_5, %c0_6] : memref<16x128xf32, #tpu.memory_space<vmem>>, vector<16x128xf32>
    %c0_7 = arith.constant 0 : index
    %c0_8 = arith.constant 0 : index
    %c0_9 = arith.constant 0 : index
    %11 = vector.load %arg3[%c0_7, %c0_8, %c0_9] : memref<1x16x128xbf16, #tpu.memory_space<vmem>>, vector<1x16x128xbf16>
    %12 = vector.shape_cast %11 : vector<1x16x128xbf16> to vector<16x128xbf16>
    %cst = arith.constant dense<0.000000e+00> : vector<16x128xf32>
    %13 = tpu.matmul %12, %9, %cst {dimension_numbers = #tpu.dot_dimension_numbers<[1], [0], [0], [1], [0, 0, 1, 1], [], []>} : vector<16x128xbf16>, vector<128x128xbf16>, vector<16x128xf32> -> vector<16x128xf32>
    %14 = arith.addf %10, %13 : vector<16x128xf32>
    %c0_10 = arith.constant 0 : index
    %c0_11 = arith.constant 0 : index
    %15 = vector.load %arg9[%c0_10, %c0_11] : memref<16x128xf32, #tpu.memory_space<vmem>>, vector<16x128xf32>
    tpu.vector_store %arg9[%c0_10, %c0_11], %14 {strides = array<i32>} : memref<16x128xf32, #tpu.memory_space<vmem>>, vector<16x128xf32>,
    %c0_i32_12 = arith.constant 0 : i32
    %16 = arith.cmpi eq, %arg2, %c0_i32_12 : i32
    %17 = arith.extui %16 : i1 to i32
    %c0_i32_13 = arith.constant 0 : i32
    %18 = arith.cmpi ne, %17, %c0_i32_13 : i32
    scf.if %18 {
      %c0_14 = arith.constant 0 : index
      %c0_15 = arith.constant 0 : index
      %19 = vector.load %arg9[%c0_14, %c0_15] : memref<16x128xf32, #tpu.memory_space<vmem>>, vector<16x128xf32>
      %c0_16 = arith.constant 0 : index
      %c0_17 = arith.constant 0 : index
      %c0_18 = arith.constant 0 : index
      %20 = vector.load %arg6[%c0_16, %c0_17, %c0_18] : memref<1x1x128xf32, #tpu.memory_space<vmem>>, vector<1x1x128xf32>
      %21 = vector.shape_cast %20 : vector<1x1x128xf32> to vector<1x128xf32>
      %22 = vector.broadcast %21 : vector<1x128xf32> to vector<16x128xf32>
      %23 = arith.mulf %19, %22 : vector<16x128xf32>
      %c0_19 = arith.constant 0 : index
      %c0_20 = arith.constant 0 : index
      %c0_21 = arith.constant 0 : index
      %24 = vector.load %arg7[%c0_19, %c0_20, %c0_21] : memref<1x1x128xf32, #tpu.memory_space<vmem>>, vector<1x1x128xf32>
      %25 = vector.shape_cast %24 : vector<1x1x128xf32> to vector<1x128xf32>
      %26 = vector.broadcast %25 : vector<1x128xf32> to vector<16x128xf32>
      %27 = arith.addf %23, %26 : vector<16x128xf32>
      %c0_22 = arith.constant 0 : index
      %c0_23 = arith.constant 0 : index
      %c0_24 = arith.constant 0 : index
      %28 = vector.load %arg8[%c0_22, %c0_23, %c0_24] : memref<1x16x128xf32, #tpu.memory_space<vmem>>, vector<1x16x128xf32>
      %29 = vector.shape_cast %28 : vector<1x16x128xf32> to vector<16x128xf32>
      %30 = vector.shape_cast %27 : vector<16x128xf32> to vector<1x16x128xf32>
      tpu.vector_store %arg8[%c0_22, %c0_23, %c0_24], %30 {strides = array<i32>} : memref<1x16x128xf32, #tpu.memory_space<vmem>>, vector<1x16x128xf32>,
    } else {
    }
    return
  }
  func.func @transform_0(%arg0: i32, %arg1: i32, %arg2: i32) -> (i32, i32, i32) {
    %c0_i32 = arith.constant 0 : i32
    return %arg0, %arg1, %arg2 : i32, i32, i32
  }
  func.func @transform_1(%arg0: i32, %arg1: i32, %arg2: i32) -> (i32, i32, i32) {
    %c0_i32 = arith.constant 0 : i32
    %c0_i32_0 = arith.constant 0 : i32
    return %arg0, %arg2, %c0_i32 : i32, i32, i32
  }
  func.func @transform_2(%arg0: i32, %arg1: i32, %arg2: i32) -> (i32, i32) {
    %c0_i32 = arith.constant 0 : i32
    %c0_i32_0 = arith.constant 0 : i32
    return %arg2, %c0_i32 : i32, i32
  }
  func.func @transform_3(%arg0: i32, %arg1: i32, %arg2: i32) -> (i32, i32, i32) {
    %c0_i32 = arith.constant 0 : i32
    %c0_i32_0 = arith.constant 0 : i32
    %c0_i32_1 = arith.constant 0 : i32
    return %arg0, %c0_i32, %c0_i32_0 : i32, i32, i32
  }
  func.func @transform_4(%arg0: i32, %arg1: i32, %arg2: i32) -> (i32, i32, i32) {
    %c0_i32 = arith.constant 0 : i32
    %c0_i32_0 = arith.constant 0 : i32
    %c0_i32_1 = arith.constant 0 : i32
    return %arg0, %c0_i32, %c0_i32_0 : i32, i32, i32
  }
  func.func @transform_5(%arg0: i32, %arg1: i32, %arg2: i32) -> (i32, i32, i32) {
    %c0_i32 = arith.constant 0 : i32
    %c0_i32_0 = arith.constant 0 : i32
    return %arg0, %arg1, %c0_i32 : i32, i32, i32
  }
}

</mosaic_0001>

<llo_original>
// kernel: tile.49
$region0: #{tile.49}
  %s0 = inlined_call_operand.vmem [shape: f32[2,49,3], index: 0, kind: input, shape index: {}]
  %s1 = inlined_call_operand.vmem [shape: f32[2,147], index: 1, kind: output, shape index: {}]
  $region1: #{tile.49} parent=0
    #allocation0 [shape = 'u8[8192]{0}', space=vmem, size = 0x2000, scoped, tag = 'scoped mem for output reshape']
    %s2 = smov 3
    %v3 = vld [vmem:[%s0] ss:$56 sm:%s2]
    %vm4 = vcmask 23552
    %5 = vst.msk [vmem:[#allocation0] sm:$0x3] %vm4, %v3
    %s6 = scalar_lea.vmem %s0, 42
    %s7 = smov 3
    %v8 = vld [vmem:[%s6] ss:$56 sm:%s7]
    %s9 = scalar_lea.vmem %s0, 42
    %s10 = smov 3
    %v11 = vld [vmem:[%s9] ss:$56 sm:%s10]
    %vm12 = vcmask 15360
    %v13 = vsel %vm12, %v11, %v8
    %14 = vrot.lane.b32.xlu0 %v13, 126
    %v15 = vpop.permute.xlu0 %14
    %vm16 = vcmask 7168
    %s17 = scalar_lea.vmem [#allocation0], 8
    %18 = vst.msk [vmem:[%s17] sm:$0x3] %vm16, %v15
    %vm19 = vcmask 1048560
    %20 = vst.msk [vmem:[#allocation0] sm:$0x3] %vm19, %v15
    %s21 = scalar_lea.vmem %s0, 41
    %s22 = smov 3
    %v23 = vld [vmem:[%s21] ss:$56 sm:%s22]
    %24 = vrot.lane.b32.xlu0 %v23, 123
    %v25 = vpop.permute.xlu0 %24
    %vm26 = vcmask 1032152
    %27 = vst.msk [vmem:[#allocation0] sm:$0x3] %vm26, %v25
    %s28 = scalar_lea.vmem %s0, 40
    %s29 = smov 3
    %v30 = vld [vmem:[%s28] ss:$56 sm:%s29]
    %31 = vrot.lane.b32.xlu0 %v30, 120
    %v32 = vpop.permute.xlu0 %31
    %vm33 = vcmask 1007552
    %34 = vst.msk [vmem:[#allocation0] sm:$0x3] %vm33, %v32
    %s35 = scalar_lea.vmem %s0, 39
    %s36 = smov 3
    %v37 = vld [vmem:[%s35] ss:$56 sm:%s36]
    %38 = vrot.lane.b32.xlu0 %v37, 117
    %v39 = vpop.permute.xlu0 %38
    %vm40 = vcmask 982952
    %41 = vst.msk [vmem:[#allocation0] sm:$0x3] %vm40, %v39
    %s42 = scalar_lea.vmem %s0, 38
    %s43 = smov 3
    %v44 = vld [vmem:[%s42] ss:$56 sm:%s43]
    %45 = vrot.lane.b32.xlu0 %v44, 114
    %v46 = vpop.permute.xlu0 %45
    %vm47 = vcmask 958352
    %48 = vst.msk [vmem:[#allocation0] sm:$0x3] %vm47, %v46
    %s49 = scalar_lea.vmem %s0, 37
    %s50 = smov 3
    %v51 = vld [vmem:[%s49] ss:$56 sm:%s50]
    %52 = vrot.lane.b32.xlu0 %v51, 111
    %v53 = vpop.permute.xlu0 %52
    %vm54 = vcmask 933752
    %55 = vst.msk [vmem:[#allocation0] sm:$0x3] %vm54, %v53
    %s56 = scalar_lea.vmem %s0, 36
    %s57 = smov 3
    %v58 = vld [vmem:[%s56] ss:$56 sm:%s57]
    %59 = vrot.lane.b32.xlu0 %v58, 108
    %v60 = vpop.permute.xlu0 %59
    %vm61 = vcmask 909152
    %62 = vst.msk [vmem:[#allocation0] sm:$0x3] %vm61, %v60
    %s63 = scalar_lea.vmem %s0, 35
    %s64 = smov 3
    %v65 = vld [vmem:[%s63] ss:$56 sm:%s64]
    %66 = vrot.lane.b32.xlu0 %v65, 105
    %v67 = vpop.permute.xlu0 %66
    %vm68 = vcmask 884552
    %69 = vst.msk [vmem:[#allocation0] sm:$0x3] %vm68, %v67
    %s70 = scalar_lea.vmem %s0, 34
    %s71 = smov 3
    %v72 = vld [vmem:[%s70] ss:$56 sm:%s71]
    %73 = vrot.lane.b32.xlu0 %v72, 102
    %v74 = vpop.permute.xlu0 %73
    %vm75 = vcmask 859952
    %76 = vst.msk [vmem:[#allocation0] sm:$0x3] %vm75, %v74
    %s77 = scalar_lea.vmem %s0, 33
    %s78 = smov 3
    %v79 = vld [vmem:[%s77] ss:$56 sm:%s78]
    %80 = vrot.lane.b32.xlu0 %v79, 99
    %v81 = vpop.permute.xlu0 %80
    %vm82 = vcmask 835352
    %83 = vst.msk [vmem:[#allocation0] sm:$0x3] %vm82, %v81
    %s84 = scalar_lea.vmem %s0, 32
    %s85 = smov 3
    %v86 = vld [vmem:[%s84] ss:$56 sm:%s85]
    %87 = vrot.lane.b32.xlu0 %v86, 96
    %v88 = vpop.permute.xlu0 %87
    %vm89 = vcmask 810752
    %90 = vst.msk [vmem:[#allocation0] sm:$0x3] %vm89, %v88
    %s91 = scalar_lea.vmem %s0, 31
    %s92 = smov 3
    %v93 = vld [vmem:[%s91] ss:$56 sm:%s92]
    %94 = vrot.lane.b32.xlu0 %v93, 93
    %v95 = vpop.permute.xlu0 %94
    %vm96 = vcmask 786152
    %97 = vst.msk [vmem:[#allocation0] sm:$0x3] %vm96, %v95
    %s98 = scalar_lea.vmem %s0, 30
    %s99 = smov 3
    %v100 = vld [vmem:[%s98] ss:$56 sm:%s99]
    %101 = vrot.lane.b32.xlu0 %v100, 90
    %v102 = vpop.permute.xlu0 %101
    %vm103 = vcmask 761552
    %104 = vst.msk [vmem:[#allocation0] sm:$0x3] %vm103, %v102
    %s105 = scalar_lea.vmem %s0, 29
    %s106 = smov 3
    %v107 = vld [vmem:[%s105] ss:$56 sm:%s106]
    %108 = vrot.lane.b32.xlu0 %v107, 87
    %v109 = vpop.permute.xlu0 %108
    %vm110 = vcmask 736952
    %111 = vst.msk [vmem:[#allocation0] sm:$0x3] %vm110, %v109
    %s112 = scalar_lea.vmem %s0, 28
    %s113 = smov 3
    %v114 = vld [vmem:[%s112] ss:$56 sm:%s113]
    %115 = vrot.lane.b32.xlu0 %v114, 84
    %v116 = vpop.permute.xlu0 %115
    %vm117 = vcmask 712352
    %118 = vst.msk [vmem:[#allocation0] sm:$0x3] %vm117, %v116
    %s119 = scalar_lea.vmem %s0, 27
    %s120 = smov 3
    %v121 = vld [vmem:[%s119] ss:$56 sm:%s120]
    %122 = vrot.lane.b32.xlu0 %v121, 81
    %v123 = vpop.permute.xlu0 %122
    %vm124 = vcmask 687752
    %125 = vst.msk [vmem:[#allocation0] sm:$0x3] %vm124, %v123
    %s126 = scalar_lea.vmem %s0, 26
    %s127 = smov 3
    %v128 = vld [vmem:[%s126] ss:$56 sm:%s127]
    %129 = vrot.lane.b32.xlu0 %v128, 78
    %v130 = vpop.permute.xlu0 %129
    %vm131 = vcmask 663152
    %132 = vst.msk [vmem:[#allocation0] sm:$0x3] %vm131, %v130
    %s133 = scalar_lea.vmem %s0, 25
    %s134 = smov 3
    %v135 = vld [vmem:[%s133] ss:$56 sm:%s134]
    %136 = vrot.lane.b32.xlu0 %v135, 75
    %v137 = vpop.permute.xlu0 %136
    %vm138 = vcmask 638552
    %139 = vst.msk [vmem:[#allocation0] sm:$0x3] %vm138, %v137
    %s140 = scalar_lea.vmem %s0, 24
    %s141 = smov 3
    %v142 = vld [vmem:[%s140] ss:$56 sm:%s141]
    %143 = vrot.lane.b32.xlu0 %v142, 72
    %v144 = vpop.permute.xlu0 %143
    %vm145 = vcmask 613952
    %146 = vst.msk [vmem:[#allocation0] sm:$0x3] %vm145, %v144
    %s147 = scalar_lea.vmem %s0, 23
    %s148 = smov 3
    %v149 = vld [vmem:[%s147] ss:$56 sm:%s148]
    %150 = vrot.lane.b32.xlu0 %v149, 69
    %v151 = vpop.permute.xlu0 %150
    %vm152 = vcmask 589352
    %153 = vst.msk [vmem:[#allocation0] sm:$0x3] %vm152, %v151
    %s154 = scalar_lea.vmem %s0, 22
    %s155 = smov 3
    %v156 = vld [vmem:[%s154] ss:$56 sm:%s155]
    %157 = vrot.lane.b32.xlu0 %v156, 66
    %v158 = vpop.permute.xlu0 %157
    %vm159 = vcmask 564752
    %160 = vst.msk [vmem:[#allocation0] sm:$0x3] %vm159, %v158
    %s161 = scalar_lea.vmem %s0, 21
    %s162 = smov 3
    %v163 = vld [vmem:[%s161] ss:$56 sm:%s162]
    %164 = vrot.lane.b32.xlu0 %v163, 63
    %v165 = vpop.permute.xlu0 %164
    %vm166 = vcmask 540152
    %167 = vst.msk [vmem:[#allocation0] sm:$0x3] %vm166, %v165
    %s168 = scalar_lea.vmem %s0, 20
    %s169 = smov 3
    %v170 = vld [vmem:[%s168] ss:$56 sm:%s169]
    %171 = vrot.lane.b32.xlu0 %v170, 60
    %v172 = vpop.permute.xlu0 %171
    %vm173 = vcmask 515552
    %174 = vst.msk [vmem:[#allocation0] sm:$0x3] %vm173, %v172
    %s175 = scalar_lea.vmem %s0, 19
    %s176 = smov 3
    %v177 = vld [vmem:[%s175] ss:$56 sm:%s176]
    %178 = vrot.lane.b32.xlu0 %v177, 57
    %v179 = vpop.permute.xlu0 %178
    %vm180 = vcmask 490952
    %181 = vst.msk [vmem:[#allocation0] sm:$0x3] %vm180, %v179
    %s182 = scalar_lea.vmem %s0, 18
    %s183 = smov 3
    %v184 = vld [vmem:[%s182] ss:$56 sm:%s183]
    %185 = vrot.lane.b32.xlu0 %v184, 54
    %v186 = vpop.permute.xlu0 %185
    %vm187 = vcmask 466352
    %188 = vst.msk [vmem:[#allocation0] sm:$0x3] %vm187, %v186
    %s189 = scalar_lea.vmem %s0, 17
    %s190 = smov 3
    %v191 = vld [vmem:[%s189] ss:$56 sm:%s190]
    %192 = vrot.lane.b32.xlu0 %v191, 51
    %v193 = vpop.permute.xlu0 %192
    %vm194 = vcmask 441752
    %195 = vst.msk [vmem:[#allocation0] sm:$0x3] %vm194, %v193
    %s196 = scalar_lea.vmem %s0, 16
    %s197 = smov 3
    %v198 = vld [vmem:[%s196] ss:$56 sm:%s197]
    %199 = vrot.lane.b32.xlu0 %v198, 48
    %v200 = vpop.permute.xlu0 %199
    %vm201 = vcmask 417152
    %202 = vst.msk [vmem:[#allocation0] sm:$0x3] %vm201, %v200
    %s203 = scalar_lea.vmem %s0, 15
    %s204 = smov 3
    %v205 = vld [vmem:[%s203] ss:$56 sm:%s204]
    %206 = vrot.lane.b32.xlu0 %v205, 45
    %v207 = vpop.permute.xlu0 %206
    %vm208 = vcmask 392552
    %209 = vst.msk [vmem:[#allocation0] sm:$0x3] %vm208, %v207
    %s210 = scalar_lea.vmem %s0, 14
    %s211 = smov 3
    %v212 = vld [vmem:[%s210] ss:$56 sm:%s211]
    %213 = vrot.lane.b32.xlu0 %v212, 42
    %v214 = vpop.permute.xlu0 %213
    %vm215 = vcmask 367952
    %216 = vst.msk [vmem:[#allocation0] sm:$0x3] %vm215, %v214
    %s217 = scalar_lea.vmem %s0, 13
    %s218 = smov 3
    %v219 = vld [vmem:[%s217] ss:$56 sm:%s218]
    %220 = vrot.lane.b32.xlu0 %v219, 39
    %v221 = vpop.permute.xlu0 %220
    %vm222 = vcmask 343352
    %223 = vst.msk [vmem:[#allocation0] sm:$0x3] %vm222, %v221
    %s224 = scalar_lea.vmem %s0, 12
    %s225 = smov 3
    %v226 = vld [vmem:[%s224] ss:$56 sm:%s225]
    %227 = vrot.lane.b32.xlu0 %v226, 36
    %v228 = vpop.permute.xlu0 %227
    %vm229 = vcmask 318752
    %230 = vst.msk [vmem:[#allocation0] sm:$0x3] %vm229, %v228
    %s231 = scalar_lea.vmem %s0, 11
    %s232 = smov 3
    %v233 = vld [vmem:[%s231] ss:$56 sm:%s232]
    %234 = vrot.lane.b32.xlu0 %v233, 33
    %v235 = vpop.permute.xlu0 %234
    %vm236 = vcmask 294152
    %237 = vst.msk [vmem:[#allocation0] sm:$0x3] %vm236, %v235
    %s238 = scalar_lea.vmem %s0, 10
    %s239 = smov 3
    %v240 = vld [vmem:[%s238] ss:$56 sm:%s239]
    %241 = vrot.lane.b32.xlu0 %v240, 30
    %v242 = vpop.permute.xlu0 %241
    %vm243 = vcmask 269552
    %244 = vst.msk [vmem:[#allocation0] sm:$0x3] %vm243, %v242
    %s245 = scalar_lea.vmem %s0, 9
    %s246 = smov 3
    %v247 = vld [vmem:[%s245] ss:$56 sm:%s246]
    %248 = vrot.lane.b32.xlu0 %v247, 27
    %v249 = vpop.permute.xlu0 %248
    %vm250 = vcmask 244952
    %251 = vst.msk [vmem:[#allocation0] sm:$0x3] %vm250, %v249
    %s252 = scalar_lea.vmem %s0, 8
    %s253 = smov 3
    %v254 = vld [vmem:[%s252] ss:$56 sm:%s253]
    %255 = vrot.lane.b32.xlu0 %v254, 24
    %v256 = vpop.permute.xlu0 %255
    %vm257 = vcmask 220352
    %258 = vst.msk [vmem:[#allocation0] sm:$0x3] %vm257, %v256
    %s259 = scalar_lea.vmem %s0, 7
    %s260 = smov 3
    %v261 = vld [vmem:[%s259] ss:$56 sm:%s260]
    %262 = vrot.lane.b32.xlu0 %v261, 21
    %v263 = vpop.permute.xlu0 %262
    %vm264 = vcmask 195752
    %265 = vst.msk [vmem:[#allocation0] sm:$0x3] %vm264, %v263
    %s266 = scalar_lea.vmem %s0, 6
    %s267 = smov 3
    %v268 = vld [vmem:[%s266] ss:$56 sm:%s267]
    %269 = vrot.lane.b32.xlu0 %v268, 18
    %v270 = vpop.permute.xlu0 %269
    %vm271 = vcmask 171152
    %272 = vst.msk [vmem:[#allocation0] sm:$0x3] %vm271, %v270
    %s273 = scalar_lea.vmem %s0, 48
    %s274 = smov 3
    %v275 = vld [vmem:[%s273] ss:$56 sm:%s274]
    %276 = vrot.lane.b32.xlu0 %v275, 16
    %v277 = vpop.permute.xlu0 %276
    %vm278 = vcmask 154752
    %s279 = scalar_lea.vmem [#allocation0], 8
    %280 = vst.msk [vmem:[%s279] sm:$0x3] %vm278, %v277
    %s281 = scalar_lea.vmem %s0, 5
    %s282 = smov 3
    %v283 = vld [vmem:[%s281] ss:$56 sm:%s282]
    %284 = vrot.lane.b32.xlu0 %v283, 15
    %v285 = vpop.permute.xlu0 %284
    %vm286 = vcmask 146552
    %287 = vst.msk [vmem:[#allocation0] sm:$0x3] %vm286, %v285
    %s288 = scalar_lea.vmem %s0, 47
    %s289 = smov 3
    %v290 = vld [vmem:[%s288] ss:$56 sm:%s289]
    %291 = vrot.lane.b32.xlu0 %v290, 13
    %v292 = vpop.permute.xlu0 %291
    %vm293 = vcmask 130152
    %s294 = scalar_lea.vmem [#allocation0], 8
    %295 = vst.msk [vmem:[%s294] sm:$0x3] %vm293, %v292
    %s296 = scalar_lea.vmem %s0, 4
    %s297 = smov 3
    %v298 = vld [vmem:[%s296] ss:$56 sm:%s297]
    %299 = vrot.lane.b32.xlu0 %v298, 12
    %v300 = vpop.permute.xlu0 %299
    %vm301 = vcmask 121952
    %302 = vst.msk [vmem:[#allocation0] sm:$0x3] %vm301, %v300
    %s303 = scalar_lea.vmem %s0, 46
    %s304 = smov 3
    %v305 = vld [vmem:[%s303] ss:$56 sm:%s304]
    %306 = vrot.lane.b32.xlu0 %v305, 10
    %v307 = vpop.permute.xlu0 %306
    %vm308 = vcmask 105552
    %s309 = scalar_lea.vmem [#allocation0], 8
    %310 = vst.msk [vmem:[%s309] sm:$0x3] %vm308, %v307
    %s311 = scalar_lea.vmem %s0, 3
    %s312 = smov 3
    %v313 = vld [vmem:[%s311] ss:$56 sm:%s312]
    %314 = vrot.lane.b32.xlu0 %v313, 9
    %v315 = vpop.permute.xlu0 %314
    %vm316 = vcmask 97352
    %317 = vst.msk [vmem:[#allocation0] sm:$0x3] %vm316, %v315
    %s318 = scalar_lea.vmem %s0, 45
    %s319 = smov 3
    %v320 = vld [vmem:[%s318] ss:$56 sm:%s319]
    %321 = vrot.lane.b32.xlu0 %v320, 7
    %v322 = vpop.permute.xlu0 %321
    %vm323 = vcmask 80952
    %s324 = scalar_lea.vmem [#allocation0], 8
    %325 = vst.msk [vmem:[%s324] sm:$0x3] %vm323, %v322
    %s326 = scalar_lea.vmem %s0, 2
    %s327 = smov 3
    %v328 = vld [vmem:[%s326] ss:$56 sm:%s327]
    %329 = vrot.lane.b32.xlu0 %v328, 6
    %v330 = vpop.permute.xlu0 %329
    %vm331 = vcmask 72752
    %332 = vst.msk [vmem:[#allocation0] sm:$0x3] %vm331, %v330
    %s333 = scalar_lea.vmem %s0, 44
    %s334 = smov 3
    %v335 = vld [vmem:[%s333] ss:$56 sm:%s334]
    %336 = vrot.lane.b32.xlu0 %v335, 4
    %v337 = vpop.permute.xlu0 %336
    %vm338 = vcmask 56352
    %s339 = scalar_lea.vmem [#allocation0], 8
    %340 = vst.msk [vmem:[%s339] sm:$0x3] %vm338, %v337
    %s341 = scalar_lea.vmem %s0, 1
    %s342 = smov 3
    %v343 = vld [vmem:[%s341] ss:$56 sm:%s342]
    %344 = vrot.lane.b32.xlu0 %v343, 3
    %v345 = vpop.permute.xlu0 %344
    %vm346 = vcmask 48152
    %347 = vst.msk [vmem:[#allocation0] sm:$0x3] %vm346, %v345
    %s348 = scalar_lea.vmem %s0, 43
    %s349 = smov 3
    %v350 = vld [vmem:[%s348] ss:$56 sm:%s349]
    %351 = vrot.lane.b32.xlu0 %v350, 1
    %v352 = vpop.permute.xlu0 %351
    %vm353 = vcmask 31752
    %s354 = scalar_lea.vmem [#allocation0], 8
    %355 = vst.msk [vmem:[%s354] sm:$0x3] %vm353, %v352
    %s357 = sshllo.u32 0, 2
    %v359 = vld [vmem:[#allocation0] sm:%s357]
    %s360 = sshllo.u32 0, 2
    %361 = vst [vmem:[%s1] sm:%s360] %v359
    %s362 = scalar_lea.vmem [#allocation0], 8
    %v363 = vld [vmem:[%s362] sm:%s357]
    %s364 = sshllo.u32 0, 2
    %s365 = scalar_lea.vmem %s1, 2
    %366 = vst [vmem:[%s365] sm:%s364] %v363

// kernel: batch_wideresnet_forward.11
$region0: #{batch_wideresnet_forward.11}
  #allocation0 [shape = 'u32[]', space=smem, size = 0x4, offset = 0x4, fixed_abs, tag = 'smem constant byte address 0x4 - core index']
  #allocation1 [shape = 'u32[144,128]{1,0:T(1,128)}', space=vmem, size = 0x12000, scoped, tag = 'internal scratch']
  #allocation2 [shape = 'f32[64,128]{1,0:T(8,128)}', space=vmem, size = 0x8000, scoped, tag = 'scratch operand']
  %s0 = inlined_call_operand.vmem [shape: bf16[4,64,256], index: 0, kind: input, shape index: {}]
  %s1 = inlined_call_operand.vmem [shape: f32[4,256,1], index: 1, kind: input, shape index: {}]
  %s2 = inlined_call_operand.vmem [shape: bf16[256,128], index: 2, kind: input, shape index: {}]
  %s3 = inlined_call_operand.vmem [shape: f32[4,1,128], index: 3, kind: input, shape index: {}]
  %s4 = inlined_call_operand.vmem [shape: f32[4,1,128], index: 4, kind: input, shape index: {}]
  %s5 = inlined_call_operand.vmem [shape: bf16[4,64,128], index: 5, kind: output, shape index: {}]
  %s6 = sld [smem:[#allocation0]]
  $region61: #{batch_wideresnet_forward.11} parent=0
    _
  %s8 = ssub.s32 1, %s6
  %s9 = scalar_select 0, %s8, %s6
  loop: start=0, step=1, limit=6
  $region2: #{batch_wideresnet_forward.11} parent=0 // loop_pre_header
    _
  $region3: #{batch_wideresnet_forward.11} parent=0 // loop_header
    %s11 = sphi 0, %s15
    %p12 = scmp.ge.s32.totalorder %s11, 6
    %s18 = sphi 0, %s37
    %s19 = sphi 0, %s33
    %s20 = sphi 0, %s29
    %s21 = sphi 0, %s18
    %s22 = sphi 0, %s19
    %s23 = sphi 0, %s20
    %s24 = sphi 0, %s21
    %s25 = sphi 0, %s22
    %s26 = sphi 0, %s23
    %s44 = sphi 0, %s46
    %s47 = sphi 0, %s44
    %s48 = sphi 0, %s47
    %s64 = sphi 0, %s48
    %s72 = sphi 0, %s74
    %s75 = sphi 0, %s72
    %s76 = sphi 0, %s75
    %s92 = sphi 0, %s76
    %s98 = sphi 0, %s100
    %s101 = sphi 0, %s98
    %s102 = sphi 0, %s101
    %s118 = sphi 0, %s102
    %s124 = sphi 0, %s126
    %s127 = sphi 0, %s124
    %s128 = sphi 0, %s127
    %s144 = sphi 0, %s128
    %s150 = sphi 0, %s152
    %s153 = sphi 0, %s150
    %s154 = sphi 0, %s153
    %s170 = sphi 0, %s154
    %s178 = sphi 0, %s180
    %s181 = sphi 0, %s178
    %s182 = sphi 0, %s181
    %s198 = sphi 0, %s182
  $region4: #{batch_wideresnet_forward.11} parent=0 // loop_header_branch
    %14 = sbr.rel (%p12) target = $region8
  $region5: #{batch_wideresnet_forward.11} parent=0 // loop_body
    %s16 = ssub.s32 %s11, 1
    %s17 = ssub.s32 %s11, 2
    %s27 = sadd.s32 1, %s20
    %p28 = scmp.ge.s32.totalorder %s27, 1
    %s29 = scalar_select %p28, 0, %s27
    %s30 = sadd.s32 1, %s19
    %s31 = scalar_select %p28, %s30, %s19
    %p32 = scmp.ge.s32.totalorder %s31, 1
    %s33 = scalar_select %p32, 0, %s31
    %s34 = sadd.s32 1, %s18
    %s35 = scalar_select %p32, %s34, %s18
    %p36 = scmp.ge.s32.totalorder %s35, 4
    %s37 = scalar_select %p36, 0, %s35
    %s38 = ssub.s32 %s18, %s37
    %s39 = ssub.s32 %s19, %s33
    %s40 = sor.u32 %s38, %s39
    %s41 = ssub.s32 %s20, %s29
    %s42 = sor.u32 %s40, %s41
    %p43 = scmp.eq.s32.totalorder %s42, 0
    %s45 = sadd.s32 %s44, 1
    %s46 = scalar_select %p43, %s44, %s45
    %p49 = pneg %p43
    %p50 = scmp.eq.s32.totalorder %s11, 3
    %p51 = por %p49, %p50
    %p52 = scmp.ne.s32.totalorder %s44, %s47
    %p53 = scmp.eq.s32.totalorder %s11, 0
    %p54 = por %p52, %p53
    %p55 = scmp.ne.s32.totalorder %s44, %s47
    %p56 = scmp.eq.s32.totalorder %s16, 3
    %p57 = por %p55, %p56
    %p58 = scmp.ne.s32.totalorder %s47, %s48
    %p59 = scmp.eq.s32.totalorder %s16, 0
    %p60 = por %p58, %p59
    %p61 = scmp.ne.s32.totalorder %s47, %s48
    %p62 = scmp.eq.s32.totalorder %s17, 3
    %p63 = por %p61, %p62
    %p65 = scmp.ne.s32.totalorder %s48, %s64
    %p66 = scmp.eq.s32.totalorder %s17, 0
    %p67 = por %p65, %p66
    %s68 = ssub.s32 %s18, %s37
    %s69 = ssub.s32 %s20, %s29
    %s70 = sor.u32 %s68, %s69
    %p71 = scmp.eq.s32.totalorder %s70, 0
    %s73 = sadd.s32 %s72, 1
    %s74 = scalar_select %p71, %s72, %s73
    %p77 = pneg %p71
    %p78 = scmp.eq.s32.totalorder %s11, 3
    %p79 = por %p77, %p78
    %p80 = scmp.ne.s32.totalorder %s72, %s75
    %p81 = scmp.eq.s32.totalorder %s11, 0
    %p82 = por %p80, %p81
    %p83 = scmp.ne.s32.totalorder %s72, %s75
    %p84 = scmp.eq.s32.totalorder %s16, 3
    %p85 = por %p83, %p84
    %p86 = scmp.ne.s32.totalorder %s75, %s76
    %p87 = scmp.eq.s32.totalorder %s16, 0
    %p88 = por %p86, %p87
    %p89 = scmp.ne.s32.totalorder %s75, %s76
    %p90 = scmp.eq.s32.totalorder %s17, 3
    %p91 = por %p89, %p90
    %p93 = scmp.ne.s32.totalorder %s76, %s92
    %p94 = scmp.eq.s32.totalorder %s17, 0
    %p95 = por %p93, %p94
    %s96 = ssub.s32 %s20, %s29
    %p97 = scmp.eq.s32.totalorder %s96, 0
    %s99 = sadd.s32 %s98, 1
    %s100 = scalar_select %p97, %s98, %s99
    %p103 = pneg %p97
    %p104 = scmp.eq.s32.totalorder %s11, 3
    %p105 = por %p103, %p104
    %p106 = scmp.ne.s32.totalorder %s98, %s101
    %p107 = scmp.eq.s32.totalorder %s11, 0
    %p108 = por %p106, %p107
    %p109 = scmp.ne.s32.totalorder %s98, %s101
    %p110 = scmp.eq.s32.totalorder %s16, 3
    %p111 = por %p109, %p110
    %p112 = scmp.ne.s32.totalorder %s101, %s102
    %p113 = scmp.eq.s32.totalorder %s16, 0
    %p114 = por %p112, %p113
    %p115 = scmp.ne.s32.totalorder %s101, %s102
    %p116 = scmp.eq.s32.totalorder %s17, 3
    %p117 = por %p115, %p116
    %p119 = scmp.ne.s32.totalorder %s102, %s118
    %p120 = scmp.eq.s32.totalorder %s17, 0
    %p121 = por %p119, %p120
    %s122 = ssub.s32 %s18, %s37
    %p123 = scmp.eq.s32.totalorder %s122, 0
    %s125 = sadd.s32 %s124, 1
    %s126 = scalar_select %p123, %s124, %s125
    %p129 = pneg %p123
    %p130 = scmp.eq.s32.totalorder %s11, 3
    %p131 = por %p129, %p130
    %p132 = scmp.ne.s32.totalorder %s124, %s127
    %p133 = scmp.eq.s32.totalorder %s11, 0
    %p134 = por %p132, %p133
    %p135 = scmp.ne.s32.totalorder %s124, %s127
    %p136 = scmp.eq.s32.totalorder %s16, 3
    %p137 = por %p135, %p136
    %p138 = scmp.ne.s32.totalorder %s127, %s128
    %p139 = scmp.eq.s32.totalorder %s16, 0
    %p140 = por %p138, %p139
    %p141 = scmp.ne.s32.totalorder %s127, %s128
    %p142 = scmp.eq.s32.totalorder %s17, 3
    %p143 = por %p141, %p142
    %p145 = scmp.ne.s32.totalorder %s128, %s144
    %p146 = scmp.eq.s32.totalorder %s17, 0
    %p147 = por %p145, %p146
    %s148 = ssub.s32 %s18, %s37
    %p149 = scmp.eq.s32.totalorder %s148, 0
    %s151 = sadd.s32 %s150, 1
    %s152 = scalar_select %p149, %s150, %s151
    %p155 = pneg %p149
    %p156 = scmp.eq.s32.totalorder %s11, 3
    %p157 = por %p155, %p156
    %p158 = scmp.ne.s32.totalorder %s150, %s153
    %p159 = scmp.eq.s32.totalorder %s11, 0
    %p160 = por %p158, %p159
    %p161 = scmp.ne.s32.totalorder %s150, %s153
    %p162 = scmp.eq.s32.totalorder %s16, 3
    %p163 = por %p161, %p162
    %p164 = scmp.ne.s32.totalorder %s153, %s154
    %p165 = scmp.eq.s32.totalorder %s16, 0
    %p166 = por %p164, %p165
    %p167 = scmp.ne.s32.totalorder %s153, %s154
    %p168 = scmp.eq.s32.totalorder %s17, 3
    %p169 = por %p167, %p168
    %p171 = scmp.ne.s32.totalorder %s154, %s170
    %p172 = scmp.eq.s32.totalorder %s17, 0
    %p173 = por %p171, %p172
    %s174 = ssub.s32 %s18, %s37
    %s175 = ssub.s32 %s19, %s33
    %s176 = sor.u32 %s174, %s175
    %p177 = scmp.eq.s32.totalorder %s176, 0
    %s179 = sadd.s32 %s178, 1
    %s180 = scalar_select %p177, %s178, %s179
    %p183 = pneg %p177
    %p184 = scmp.eq.s32.totalorder %s11, 3
    %p185 = por %p183, %p184
    %p186 = scmp.ne.s32.totalorder %s178, %s181
    %p187 = scmp.eq.s32.totalorder %s11, 0
    %p188 = por %p186, %p187
    %p189 = scmp.ne.s32.totalorder %s178, %s181
    %p190 = scmp.eq.s32.totalorder %s16, 3
    %p191 = por %p189, %p190
    %p192 = scmp.ne.s32.totalorder %s181, %s182
    %p193 = scmp.eq.s32.totalorder %s16, 0
    %p194 = por %p192, %p193
    %p195 = scmp.ne.s32.totalorder %s181, %s182
    %p196 = scmp.eq.s32.totalorder %s17, 3
    %p197 = por %p195, %p196
    %p199 = scmp.ne.s32.totalorder %s182, %s198
    %p200 = scmp.eq.s32.totalorder %s17, 0
    %p201 = por %p199, %p200
    %p202 = scmp.le.s32.totalorder 1, %s11
    %p203 = scmp.lt.s32.totalorder %s11, 5
    %p204 = pnand %p202, %p203
    %p205 = pneg %p204
    // Predicated region
    $region9: #{batch_wideresnet_forward.11} parent=5 // pred_check
      _
    $region10: #{batch_wideresnet_forward.11} parent=5 // pred_check_branch
      %207 = sbr.rel (%p204) target = $region12
    $region11: #{batch_wideresnet_forward.11} parent=5 // pred_region
      %s208 = ssub.s32 %s11, 1
      // Predicated region
      $region13: #{batch_wideresnet_forward.11} parent=11 // pred_check
        %p209 = pneg %p114
      $region14: #{batch_wideresnet_forward.11} parent=11 // pred_check_branch
        %211 = sbr.rel (%p209) target = $region16
      $region15: #{batch_wideresnet_forward.11} parent=11 // pred_region
        %s212 = smul.u32 32, %s23
        %p213 = scmp.lt.s32.totalorder %s212, 31
        %s214 = scalar_select %p213, %s212, 31
        %s215 = smul.addr %s214, 4
        %s216 = scalar_lea.vmem %s2, %s215
        %s217 = smul.u32 32, %s23
      $region16: #{batch_wideresnet_forward.11} parent=11 // pred_fallthru
        _
    $region12: #{batch_wideresnet_forward.11} parent=5 // pred_fallthru
      _
    %p218 = scmp.lt.s32.totalorder %s11, 4
    // Predicated region
    $region17: #{batch_wideresnet_forward.11} parent=5 // pred_check
      %p219 = pneg %p218
    $region18: #{batch_wideresnet_forward.11} parent=5 // pred_check_branch
      %221 = sbr.rel (%p219) target = $region20
    $region19: #{batch_wideresnet_forward.11} parent=5 // pred_region
      // Predicated region
      $region21: #{batch_wideresnet_forward.11} parent=19 // pred_check
        %p222 = pneg %p54
      $region22: #{batch_wideresnet_forward.11} parent=19 // pred_check_branch
        %224 = sbr.rel (%p222) target = $region24
      $region23: #{batch_wideresnet_forward.11} parent=19 // pred_region
        %s225 = smul.u32 8, %s19
        %s226 = smul.u32 2, %s20
        %p227 = scmp.lt.s32.totalorder %s18, 3
        %s228 = scalar_select %p227, %s18, 3
        %p229 = scmp.lt.s32.totalorder %s225, 7
        %s230 = scalar_select %p229, %s225, 7
        %p231 = scmp.lt.s32.totalorder %s226, 1
        %s232 = scalar_select %p231, %s226, 1
        %s233 = smul.addr %s230, 2
        %s234 = sadd.s32 %s232, %s233
        %s235 = smul.addr %s228, 16
        %s236 = sadd.s32 %s234, %s235
        %s237 = smul.addr %s236, 4
        %s238 = scalar_lea.vmem %s0, %s237
        %s239 = smul.u32 8, %s19
        %s240 = smul.u32 2, %s20
      $region24: #{batch_wideresnet_forward.11} parent=19 // pred_fallthru
        _
      // Predicated region
      $region25: #{batch_wideresnet_forward.11} parent=19 // pred_check
        %p241 = pneg %p82
      $region26: #{batch_wideresnet_forward.11} parent=19 // pred_check_branch
        %243 = sbr.rel (%p241) target = $region28
      $region27: #{batch_wideresnet_forward.11} parent=19 // pred_region
        %s244 = smul.u32 32, %s20
        %p245 = scmp.lt.s32.totalorder %s18, 3
        %s246 = scalar_select %p245, %s18, 3
        %p247 = scmp.lt.s32.totalorder %s244, 31
        %s248 = scalar_select %p247, %s244, 31
        %s249 = smul.addr %s246, 32
        %s250 = sadd.s32 %s248, %s249
        %s251 = smul.addr %s250, 8
        %s252 = scalar_lea.vmem %s1, %s251
        %s253 = smul.u32 32, %s20
      $region28: #{batch_wideresnet_forward.11} parent=19 // pred_fallthru
        _
      // Predicated region
      $region29: #{batch_wideresnet_forward.11} parent=19 // pred_check
        %p254 = pneg %p134
      $region30: #{batch_wideresnet_forward.11} parent=19 // pred_check_branch
        %256 = sbr.rel (%p254) target = $region32
      $region31: #{batch_wideresnet_forward.11} parent=19 // pred_region
        %p257 = scmp.lt.s32.totalorder %s18, 3
        %s258 = scalar_select %p257, %s18, 3
        %s259 = scalar_lea.vmem %s3, %s258
      $region32: #{batch_wideresnet_forward.11} parent=19 // pred_fallthru
        _
      // Predicated region
      $region33: #{batch_wideresnet_forward.11} parent=19 // pred_check
        %p260 = pneg %p160
      $region34: #{batch_wideresnet_forward.11} parent=19 // pred_check_branch
        %262 = sbr.rel (%p260) target = $region36
      $region35: #{batch_wideresnet_forward.11} parent=19 // pred_region
        %p263 = scmp.lt.s32.totalorder %s18, 3
        %s264 = scalar_select %p263, %s18, 3
        %s265 = scalar_lea.vmem %s4, %s264
      $region36: #{batch_wideresnet_forward.11} parent=19 // pred_fallthru
        _
    $region20: #{batch_wideresnet_forward.11} parent=5 // pred_fallthru
      _
    %p266 = scmp.le.s32.totalorder 1, %s11
    %p267 = scmp.lt.s32.totalorder %s11, 5
    %p268 = pnand %p266, %p267
    %p269 = pneg %p268
    // Predicated region
    $region37: #{batch_wideresnet_forward.11} parent=5 // pred_check
      _
    $region38: #{batch_wideresnet_forward.11} parent=5 // pred_check_branch
      %271 = sbr.rel (%p268) target = $region40
    $region39: #{batch_wideresnet_forward.11} parent=5 // pred_region
      %s272 = ssub.s32 %s11, 1
      %s273 = smul.u32 8, %s22
      %s274 = smul.u32 2, %s23
      %p275 = scmp.lt.s32.totalorder %s21, 3
      %s276 = scalar_select %p275, %s21, 3
      %p277 = scmp.lt.s32.totalorder %s273, 7
      %s278 = scalar_select %p277, %s273, 7
      %p279 = scmp.lt.s32.totalorder %s274, 1
      %s280 = scalar_select %p279, %s274, 1
      %s281 = smul.addr %s278, 2
      %s282 = sadd.s32 %s280, %s281
      %s283 = smul.addr %s276, 16
      %s284 = sadd.s32 %s282, %s283
      %s285 = smul.addr %s284, 4
      %s286 = scalar_lea.vmem %s0, %s285
      %p287 = pneg %p60
      %p288 = pneg %p57
      %s289 = smul.u32 32, %s23
      %p290 = scmp.lt.s32.totalorder %s21, 3
      %s291 = scalar_select %p290, %s21, 3
      %p292 = scmp.lt.s32.totalorder %s289, 31
      %s293 = scalar_select %p292, %s289, 31
      %s294 = smul.addr %s291, 32
      %s295 = sadd.s32 %s293, %s294
      %s296 = smul.addr %s295, 8
      %s297 = scalar_lea.vmem %s1, %s296
      %p298 = pneg %p88
      %p299 = pneg %p85
      %s300 = smul.u32 32, %s23
      %p301 = scmp.lt.s32.totalorder %s300, 31
      %s302 = scalar_select %p301, %s300, 31
      %s303 = smul.addr %s302, 4
      %s304 = scalar_lea.vmem %s2, %s303
      %p305 = pneg %p114
      %p306 = pneg %p111
      %p307 = scmp.lt.s32.totalorder %s21, 3
      %s308 = scalar_select %p307, %s21, 3
      %s309 = scalar_lea.vmem %s3, %s308
      %p310 = pneg %p140
      %p311 = pneg %p137
      %p312 = scmp.lt.s32.totalorder %s21, 3
      %s313 = scalar_select %p312, %s21, 3
      %s314 = scalar_lea.vmem %s4, %s313
      %p315 = pneg %p166
      %p316 = pneg %p163
      %p317 = pneg %p194
      %p318 = pneg %p191
      %s319 = smul.u32 8, %s22
      %p320 = scmp.lt.s32.totalorder %s21, 3
      %s321 = scalar_select %p320, %s21, 3
      %p322 = scmp.lt.s32.totalorder %s319, 7
      %s323 = scalar_select %p322, %s319, 7
      %s324 = smul.addr %s321, 8
      %s325 = sadd.s32 %s323, %s324
      %s326 = smul.addr %s325, 4
      %s327 = scalar_lea.vmem %s5, %s326
      %s328 = smul.u32 8, %s22
      %s329 = smul.u32 2, %s23
      %p330 = scmp.lt.s32.totalorder %s21, 3
      %s331 = scalar_select %p330, %s21, 3
      %p332 = scmp.lt.s32.totalorder %s328, 7
      %s333 = scalar_select %p332, %s328, 7
      %p334 = scmp.lt.s32.totalorder %s329, 1
      %s335 = scalar_select %p334, %s329, 1
      %s336 = smul.addr %s333, 2
      %s337 = sadd.s32 %s335, %s336
      %s338 = smul.addr %s331, 16
      %s339 = sadd.s32 %s337, %s338
      %s340 = smul.addr %s339, 4
      %s341 = scalar_lea.vmem %s0, %s340
      %s342 = smul.u32 8, %s22
      %s343 = smul.u32 2, %s23
      %s344 = smul.u32 32, %s23
      %p345 = scmp.lt.s32.totalorder %s21, 3
      %s346 = scalar_select %p345, %s21, 3
      %p347 = scmp.lt.s32.totalorder %s344, 31
      %s348 = scalar_select %p347, %s344, 31
      %s349 = smul.addr %s346, 32
      %s350 = sadd.s32 %s348, %s349
      %s351 = smul.addr %s350, 8
      %s352 = scalar_lea.vmem %s1, %s351
      %s353 = smul.u32 32, %s23
      %s354 = smul.u32 32, %s23
      %p355 = scmp.lt.s32.totalorder %s354, 31
      %s356 = scalar_select %p355, %s354, 31
      %s357 = smul.addr %s356, 4
      %s358 = scalar_lea.vmem %s2, %s357
      %s359 = smul.u32 32, %s23
      %p360 = scmp.lt.s32.totalorder %s21, 3
      %s361 = scalar_select %p360, %s21, 3
      %s362 = scalar_lea.vmem %s3, %s361
      %p363 = scmp.lt.s32.totalorder %s21, 3
      %s364 = scalar_select %p363, %s21, 3
      %s365 = scalar_lea.vmem %s4, %s364
      %s366 = smul.u32 8, %s22
      %p367 = scmp.lt.s32.totalorder %s21, 3
      %s368 = scalar_select %p367, %s21, 3
      %p369 = scmp.lt.s32.totalorder %s366, 7
      %s370 = scalar_select %p369, %s366, 7
      %s371 = smul.addr %s368, 8
      %s372 = sadd.s32 %s370, %s371
      %s373 = smul.addr %s372, 4
      %s374 = scalar_lea.vmem %s5, %s373
      %s375 = smul.u32 8, %s22
      %p377 = scmp.eq.s32.totalorder %s23, 0
      // Predicated region
      $region41: #{batch_wideresnet_forward.11} parent=39 // pred_check
        %p378 = pneg %p377
      $region42: #{batch_wideresnet_forward.11} parent=39 // pred_check_branch
        %380 = sbr.rel (%p378) target = $region44
      $region43: #{batch_wideresnet_forward.11} parent=39 // pred_region
        %381 = vst [vmem:[#allocation2] sm:$0xff] 0.0
        %382 = vst [vmem:[#allocation2 + $0x8] sm:$0xff] 0.0
        %383 = vst [vmem:[#allocation2 + $0x10] sm:$0xff] 0.0
        %384 = vst [vmem:[#allocation2 + $0x18] sm:$0xff] 0.0
        %385 = vst [vmem:[#allocation2 + $0x20] sm:$0xff] 0.0
        %386 = vst [vmem:[#allocation2 + $0x28] sm:$0xff] 0.0
        %387 = vst [vmem:[#allocation2 + $0x30] sm:$0xff] 0.0
        %388 = vst [vmem:[#allocation2 + $0x38] sm:$0xff] 0.0
      $region44: #{batch_wideresnet_forward.11} parent=39 // pred_fallthru
        _
      %v389 = vld [vmem:[%s358] sm:$0xf]
      %v390 = vld [vmem:[%s358 + $0x4] sm:$0xf]
      %v391 = vld [vmem:[%s358 + $0x8] sm:$0xf]
      %v392 = vld [vmem:[%s358 + $0xc] sm:$0xf]
      %v393 = vld [vmem:[%s358 + $0x10] sm:$0xf]
      %v394 = vld [vmem:[%s358 + $0x14] sm:$0xf]
      %v395 = vld [vmem:[%s358 + $0x18] sm:$0xf]
      %v396 = vld [vmem:[%s358 + $0x1c] sm:$0xf]
      %v397 = vld [vmem:[%s358 + $0x20] sm:$0xf]
      %v398 = vld [vmem:[%s358 + $0x24] sm:$0xf]
      %v399 = vld [vmem:[%s358 + $0x28] sm:$0xf]
      %v400 = vld [vmem:[%s358 + $0x2c] sm:$0xf]
      %v401 = vld [vmem:[%s358 + $0x30] sm:$0xf]
      %v402 = vld [vmem:[%s358 + $0x34] sm:$0xf]
      %v403 = vld [vmem:[%s358 + $0x38] sm:$0xf]
      %v404 = vld [vmem:[%s358 + $0x3c] sm:$0xf]
      %v405 = vld [vmem:[%s358 + $0x40] sm:$0xf]
      %v406 = vld [vmem:[%s358 + $0x44] sm:$0xf]
      %v407 = vld [vmem:[%s358 + $0x48] sm:$0xf]
      %v408 = vld [vmem:[%s358 + $0x4c] sm:$0xf]
      %v409 = vld [vmem:[%s358 + $0x50] sm:$0xf]
      %v410 = vld [vmem:[%s358 + $0x54] sm:$0xf]
      %v411 = vld [vmem:[%s358 + $0x58] sm:$0xf]
      %v412 = vld [vmem:[%s358 + $0x5c] sm:$0xf]
      %v413 = vld [vmem:[%s358 + $0x60] sm:$0xf]
      %v414 = vld [vmem:[%s358 + $0x64] sm:$0xf]
      %v415 = vld [vmem:[%s358 + $0x68] sm:$0xf]
      %v416 = vld [vmem:[%s358 + $0x6c] sm:$0xf]
      %v417 = vld [vmem:[%s358 + $0x70] sm:$0xf]
      %v418 = vld [vmem:[%s358 + $0x74] sm:$0xf]
      %v419 = vld [vmem:[%s358 + $0x78] sm:$0xf]
      %v420 = vld [vmem:[%s358 + $0x7c] sm:$0xf]
      %v421 = vld [vmem:[%s352] sm:$0xff]
      %v422 = vld [vmem:[%s352 + $0x8] sm:$0xff]
      %v423 = vld [vmem:[%s352 + $0x10] sm:$0xff]
      %v424 = vld [vmem:[%s352 + $0x18] sm:$0xff]
      %v425 = vld [vmem:[%s352 + $0x20] sm:$0xff]
      %v426 = vld [vmem:[%s352 + $0x28] sm:$0xff]
      %v427 = vld [vmem:[%s352 + $0x30] sm:$0xff]
      %v428 = vld [vmem:[%s352 + $0x38] sm:$0xff]
      %v429 = vld [vmem:[%s352 + $0x40] sm:$0xff]
      %v430 = vld [vmem:[%s352 + $0x48] sm:$0xff]
      %v431 = vld [vmem:[%s352 + $0x50] sm:$0xff]
      %v432 = vld [vmem:[%s352 + $0x58] sm:$0xff]
      %v433 = vld [vmem:[%s352 + $0x60] sm:$0xff]
      %v434 = vld [vmem:[%s352 + $0x68] sm:$0xff]
      %v435 = vld [vmem:[%s352 + $0x70] sm:$0xff]
      %v436 = vld [vmem:[%s352 + $0x78] sm:$0xff]
      %v437 = vld [vmem:[%s352 + $0x80] sm:$0xff]
      %v438 = vld [vmem:[%s352 + $0x88] sm:$0xff]
      %v439 = vld [vmem:[%s352 + $0x90] sm:$0xff]
      %v440 = vld [vmem:[%s352 + $0x98] sm:$0xff]
      %v441 = vld [vmem:[%s352 + $0xa0] sm:$0xff]
      %v442 = vld [vmem:[%s352 + $0xa8] sm:$0xff]
      %v443 = vld [vmem:[%s352 + $0xb0] sm:$0xff]
      %v444 = vld [vmem:[%s352 + $0xb8] sm:$0xff]
      %v445 = vld [vmem:[%s352 + $0xc0] sm:$0xff]
      %v446 = vld [vmem:[%s352 + $0xc8] sm:$0xff]
      %v447 = vld [vmem:[%s352 + $0xd0] sm:$0xff]
      %v448 = vld [vmem:[%s352 + $0xd8] sm:$0xff]
      %v449 = vld [vmem:[%s352 + $0xe0] sm:$0xff]
      %v450 = vld [vmem:[%s352 + $0xe8] sm:$0xff]
      %v451 = vld [vmem:[%s352 + $0xf0] sm:$0xff]
      %v452 = vld [vmem:[%s352 + $0xf8] sm:$0xff]
      %v453 = vunpack.c.l.bf16 %v389
      %v454 = vunpack.c.l.bf16 %v390
      %v455 = vunpack.c.l.bf16 %v391
      %v456 = vunpack.c.l.bf16 %v392
      %v457 = vunpack.c.l.bf16 %v393
      %v458 = vunpack.c.l.bf16 %v394
      %v459 = vunpack.c.l.bf16 %v395
      %v460 = vunpack.c.l.bf16 %v396
      %v461 = vunpack.c.l.bf16 %v397
      %v462 = vunpack.c.l.bf16 %v398
      %v463 = vunpack.c.l.bf16 %v399
      %v464 = vunpack.c.l.bf16 %v400
      %v465 = vunpack.c.l.bf16 %v401
      %v466 = vunpack.c.l.bf16 %v402
      %v467 = vunpack.c.l.bf16 %v403
      %v468 = vunpack.c.l.bf16 %v404
      %v469 = vunpack.c.l.bf16 %v405
      %v470 = vunpack.c.l.bf16 %v406
      %v471 = vunpack.c.l.bf16 %v407
      %v472 = vunpack.c.l.bf16 %v408
      %v473 = vunpack.c.l.bf16 %v409
      %v474 = vunpack.c.l.bf16 %v410
      %v475 = vunpack.c.l.bf16 %v411
      %v476 = vunpack.c.l.bf16 %v412
      %v477 = vunpack.c.l.bf16 %v413
      %v478 = vunpack.c.l.bf16 %v414
      %v479 = vunpack.c.l.bf16 %v415
      %v480 = vunpack.c.l.bf16 %v416
      %v481 = vunpack.c.l.bf16 %v417
      %v482 = vunpack.c.l.bf16 %v418
      %v483 = vunpack.c.l.bf16 %v419
      %v484 = vunpack.c.l.bf16 %v420
      %486 = vset.pattern.permute.xlu0 0
      %487 = vperm.xlu0 %486, %v421
      %v488 = vpop.permute.xlu0 %487
      %491 = vset.pattern.permute.xlu0 0
      %492 = vperm.xlu0 %491, %v422
      %v493 = vpop.permute.xlu0 %492
      %496 = vset.pattern.permute.xlu0 0
      %497 = vperm.xlu0 %496, %v423
      %v498 = vpop.permute.xlu0 %497
      %501 = vset.pattern.permute.xlu0 0
      %502 = vperm.xlu0 %501, %v424
      %v503 = vpop.permute.xlu0 %502
      %506 = vset.pattern.permute.xlu0 0
      %507 = vperm.xlu0 %506, %v425
      %v508 = vpop.permute.xlu0 %507
      %511 = vset.pattern.permute.xlu0 0
      %512 = vperm.xlu0 %511, %v426
      %v513 = vpop.permute.xlu0 %512
      %516 = vset.pattern.permute.xlu0 0
      %517 = vperm.xlu0 %516, %v427
      %v518 = vpop.permute.xlu0 %517
      %521 = vset.pattern.permute.xlu0 0
      %522 = vperm.xlu0 %521, %v428
      %v523 = vpop.permute.xlu0 %522
      %526 = vset.pattern.permute.xlu0 0
      %527 = vperm.xlu0 %526, %v429
      %v528 = vpop.permute.xlu0 %527
      %531 = vset.pattern.permute.xlu0 0
      %532 = vperm.xlu0 %531, %v430
      %v533 = vpop.permute.xlu0 %532
      %536 = vset.pattern.permute.xlu0 0
      %537 = vperm.xlu0 %536, %v431
      %v538 = vpop.permute.xlu0 %537
      %541 = vset.pattern.permute.xlu0 0
      %542 = vperm.xlu0 %541, %v432
      %v543 = vpop.permute.xlu0 %542
      %546 = vset.pattern.permute.xlu0 0
      %547 = vperm.xlu0 %546, %v433
      %v548 = vpop.permute.xlu0 %547
      %551 = vset.pattern.permute.xlu0 0
      %552 = vperm.xlu0 %551, %v434
      %v553 = vpop.permute.xlu0 %552
      %556 = vset.pattern.permute.xlu0 0
      %557 = vperm.xlu0 %556, %v435
      %v558 = vpop.permute.xlu0 %557
      %561 = vset.pattern.permute.xlu0 0
      %562 = vperm.xlu0 %561, %v436
      %v563 = vpop.permute.xlu0 %562
      %566 = vset.pattern.permute.xlu0 0
      %567 = vperm.xlu0 %566, %v437
      %v568 = vpop.permute.xlu0 %567
      %571 = vset.pattern.permute.xlu0 0
      %572 = vperm.xlu0 %571, %v438
      %v573 = vpop.permute.xlu0 %572
      %576 = vset.pattern.permute.xlu0 0
      %577 = vperm.xlu0 %576, %v439
      %v578 = vpop.permute.xlu0 %577
      %581 = vset.pattern.permute.xlu0 0
      %582 = vperm.xlu0 %581, %v440
      %v583 = vpop.permute.xlu0 %582
      %586 = vset.pattern.permute.xlu0 0
      %587 = vperm.xlu0 %586, %v441
      %v588 = vpop.permute.xlu0 %587
      %591 = vset.pattern.permute.xlu0 0
      %592 = vperm.xlu0 %591, %v442
      %v593 = vpop.permute.xlu0 %592
      %596 = vset.pattern.permute.xlu0 0
      %597 = vperm.xlu0 %596, %v443
      %v598 = vpop.permute.xlu0 %597
      %601 = vset.pattern.permute.xlu0 0
      %602 = vperm.xlu0 %601, %v444
      %v603 = vpop.permute.xlu0 %602
      %606 = vset.pattern.permute.xlu0 0
      %607 = vperm.xlu0 %606, %v445
      %v608 = vpop.permute.xlu0 %607
      %611 = vset.pattern.permute.xlu0 0
      %612 = vperm.xlu0 %611, %v446
      %v613 = vpop.permute.xlu0 %612
      %616 = vset.pattern.permute.xlu0 0
      %617 = vperm.xlu0 %616, %v447
      %v618 = vpop.permute.xlu0 %617
      %621 = vset.pattern.permute.xlu0 0
      %622 = vperm.xlu0 %621, %v448
      %v623 = vpop.permute.xlu0 %622
      %626 = vset.pattern.permute.xlu0 0
      %627 = vperm.xlu0 %626, %v449
      %v628 = vpop.permute.xlu0 %627
      %631 = vset.pattern.permute.xlu0 0
      %632 = vperm.xlu0 %631, %v450
      %v633 = vpop.permute.xlu0 %632
      %636 = vset.pattern.permute.xlu0 0
      %637 = vperm.xlu0 %636, %v451
      %v638 = vpop.permute.xlu0 %637
      %641 = vset.pattern.permute.xlu0 0
      %642 = vperm.xlu0 %641, %v452
      %v643 = vpop.permute.xlu0 %642
      %v645 = vmul.f32 %v453, %v488
      %v646 = vmul.f32 %v454, %v493
      %v647 = vmul.f32 %v455, %v498
      %v648 = vmul.f32 %v456, %v503
      %v649 = vmul.f32 %v457, %v508
      %v650 = vmul.f32 %v458, %v513
      %v651 = vmul.f32 %v459, %v518
      %v652 = vmul.f32 %v460, %v523
      %v653 = vmul.f32 %v461, %v528
      %v654 = vmul.f32 %v462, %v533
      %v655 = vmul.f32 %v463, %v538
      %v656 = vmul.f32 %v464, %v543
      %v657 = vmul.f32 %v465, %v548
      %v658 = vmul.f32 %v466, %v553
      %v659 = vmul.f32 %v467, %v558
      %v660 = vmul.f32 %v468, %v563
      %v661 = vmul.f32 %v469, %v568
      %v662 = vmul.f32 %v470, %v573
      %v663 = vmul.f32 %v471, %v578
      %v664 = vmul.f32 %v472, %v583
      %v665 = vmul.f32 %v473, %v588
      %v666 = vmul.f32 %v474, %v593
      %v667 = vmul.f32 %v475, %v598
      %v668 = vmul.f32 %v476, %v603
      %v669 = vmul.f32 %v477, %v608
      %v670 = vmul.f32 %v478, %v613
      %v671 = vmul.f32 %v479, %v618
      %v672 = vmul.f32 %v480, %v623
      %v673 = vmul.f32 %v481, %v628
      %v674 = vmul.f32 %v482, %v633
      %v675 = vmul.f32 %v483, %v638
      %v676 = vmul.f32 %v484, %v643
      %v677 = vpack.c.bf16 %v646, %v645
      %v678 = vpack.c.bf16 %v648, %v647
      %v679 = vpack.c.bf16 %v650, %v649
      %v680 = vpack.c.bf16 %v652, %v651
      %v681 = vpack.c.bf16 %v654, %v653
      %v682 = vpack.c.bf16 %v656, %v655
      %v683 = vpack.c.bf16 %v658, %v657
      %v684 = vpack.c.bf16 %v660, %v659
      %v685 = vpack.c.bf16 %v662, %v661
      %v686 = vpack.c.bf16 %v664, %v663
      %v687 = vpack.c.bf16 %v666, %v665
      %v688 = vpack.c.bf16 %v668, %v667
      %v689 = vpack.c.bf16 %v670, %v669
      %v690 = vpack.c.bf16 %v672, %v671
      %v691 = vpack.c.bf16 %v674, %v673
      %v692 = vpack.c.bf16 %v676, %v675
      %v693 = vld [vmem:[#allocation2] sm:$0xff]
      %v694 = vld [vmem:[#allocation2 + $0x8] sm:$0xff]
      %v695 = vld [vmem:[#allocation2 + $0x10] sm:$0xff]
      %v696 = vld [vmem:[#allocation2 + $0x18] sm:$0xff]
      %v697 = vld [vmem:[#allocation2 + $0x20] sm:$0xff]
      %v698 = vld [vmem:[#allocation2 + $0x28] sm:$0xff]
      %v699 = vld [vmem:[#allocation2 + $0x30] sm:$0xff]
      %v700 = vld [vmem:[#allocation2 + $0x38] sm:$0xff]
      %v701 = vld [vmem:[%s341] sm:$0xff]
      %v702 = vld [vmem:[%s341 + $0x8] sm:$0xff]
      %v703 = vld [vmem:[%s341 + $0x10] sm:$0xff]
      %v704 = vld [vmem:[%s341 + $0x18] sm:$0xff]
      %v705 = vld [vmem:[%s341 + $0x20] sm:$0xff]
      %v706 = vld [vmem:[%s341 + $0x28] sm:$0xff]
      %v707 = vld [vmem:[%s341 + $0x30] sm:$0xff]
      %v708 = vld [vmem:[%s341 + $0x38] sm:$0xff]
      %v717 = vunpack.c.l.b16 %v701
      %v718 = vunpack.c.h.b16 %v701
      %v719 = vunpack.c.l.b16 %v702
      %v720 = vunpack.c.h.b16 %v702
      %v721 = vunpack.c.l.b16 %v703
      %v722 = vunpack.c.h.b16 %v703
      %v723 = vunpack.c.l.b16 %v704
      %v724 = vunpack.c.h.b16 %v704
      %v725 = vunpack.c.l.b16 %v705
      %v726 = vunpack.c.h.b16 %v705
      %v727 = vunpack.c.l.b16 %v706
      %v728 = vunpack.c.h.b16 %v706
      %v729 = vunpack.c.l.b16 %v707
      %v730 = vunpack.c.h.b16 %v707
      %v731 = vunpack.c.l.b16 %v708
      %v732 = vunpack.c.h.b16 %v708
      %v733 = vpack.c.b16 %v719, %v717
      %v734 = vpack.c.b16 %v720, %v718
      %v735 = vpack.c.b16 %v723, %v721
      %v736 = vpack.c.b16 %v724, %v722
      %v737 = vpack.c.b16 %v727, %v725
      %v738 = vpack.c.b16 %v728, %v726
      %v739 = vpack.c.b16 %v731, %v729
      %v740 = vpack.c.b16 %v732, %v730
      %749 = vmatprep.subr.bf16.mxu0 0
      %750 = vmatpush1.bf16.msra.mxu0 %v677
      %751 = vmatprep.subr.bf16.mxu0 0
      %752 = vmatpush1.bf16.msra.mxu0 %v678
      %753 = vmatprep.subr.bf16.mxu0 0
      %754 = vmatpush1.bf16.msra.mxu0 %v679
      %755 = vmatprep.subr.bf16.mxu0 0
      %756 = vmatpush1.bf16.msra.mxu0 %v680
      %757 = vmatprep.subr.bf16.mxu0 0
      %758 = vmatpush1.bf16.msra.mxu0 %v681
      %759 = vmatprep.subr.bf16.mxu0 0
      %760 = vmatpush1.bf16.msra.mxu0 %v682
      %761 = vmatprep.subr.bf16.mxu0 0
      %762 = vmatpush1.bf16.msra.mxu0 %v683
      %763 = vmatprep.subr.bf16.mxu0 0
      %764 = vmatpush1.bf16.msra.mxu0 %v684
      %765 = vmatprep.subr.bf16.mxu0 0
      %766 = vmatpush1.bf16.msra.mxu0 %v685
      %767 = vmatprep.subr.bf16.mxu0 0
      %768 = vmatpush1.bf16.msra.mxu0 %v686
      %769 = vmatprep.subr.bf16.mxu0 0
      %770 = vmatpush1.bf16.msra.mxu0 %v687
      %771 = vmatprep.subr.bf16.mxu0 0
      %772 = vmatpush1.bf16.msra.mxu0 %v688
      %773 = vmatprep.subr.bf16.mxu0 0
      %774 = vmatpush1.bf16.msra.mxu0 %v689
      %775 = vmatprep.subr.bf16.mxu0 0
      %776 = vmatpush1.bf16.msra.mxu0 %v690
      %777 = vmatprep.subr.bf16.mxu0 0
      %778 = vmatpush1.bf16.msra.mxu0 %v691
      %779 = vmatprep.subr.bf16.mxu0 0
      %780 = vmatpush1.bf16.msra.mxu0 %v692
      %781 = vmatprep.mubr.bf16.mxu0 %v734
      %782 = vmatmul.mubr.bf16.gmra.mrb[0].mxu0 %v733
      %v783 = vpop.f32.mrb[0].mxu0
      %v784 = vadd.f32 0.0, %v783
      %v785 = vpop.f32.mrb[0].mxu0
      %v786 = vpop.f32.mrb[0].mxu0
      %v787 = vadd.f32 0.0, %v786
      %v788 = vpop.f32.mrb[0].mxu0
      %789 = vmatprep.mubr.bf16.mxu0 %v736
      %790 = vmatmul.mubr.bf16.gmra.mrb[0].mxu0 %v735
      %v791 = vpop.f32.mrb[0].mxu0
      %v792 = vadd.f32 0.0, %v791
      %v793 = vpop.f32.mrb[0].mxu0
      %v794 = vpop.f32.mrb[0].mxu0
      %v795 = vadd.f32 0.0, %v794
      %v796 = vpop.f32.mrb[0].mxu0
      %797 = vmatprep.mubr.bf16.mxu0 %v738
      %798 = vmatmul.mubr.bf16.gmra.mrb[0].mxu0 %v737
      %v799 = vpop.f32.mrb[0].mxu0
      %v800 = vadd.f32 0.0, %v799
      %v801 = vpop.f32.mrb[0].mxu0
      %v802 = vpop.f32.mrb[0].mxu0
      %v803 = vadd.f32 0.0, %v802
      %v804 = vpop.f32.mrb[0].mxu0
      %805 = vmatprep.mubr.bf16.mxu0 %v740
      %806 = vmatmul.mubr.bf16.gmra.mrb[0].mxu0 %v739
      %v807 = vpop.f32.mrb[0].mxu0
      %v808 = vadd.f32 0.0, %v807
      %v809 = vpop.f32.mrb[0].mxu0
      %v810 = vpop.f32.mrb[0].mxu0
      %v811 = vadd.f32 0.0, %v810
      %v812 = vpop.f32.mrb[0].mxu0
      %813 = vdwg.mxu0
      %v814 = vadd.f32 %v693, %v784
      %v815 = vadd.f32 %v694, %v787
      %v816 = vadd.f32 %v695, %v792
      %v817 = vadd.f32 %v696, %v795
      %v818 = vadd.f32 %v697, %v800
      %v819 = vadd.f32 %v698, %v803
      %v820 = vadd.f32 %v699, %v808
      %v821 = vadd.f32 %v700, %v811
      %822 = vst [vmem:[#allocation2] sm:$0xff] %v814
      %823 = vst [vmem:[#allocation2 + $0x8] sm:$0xff] %v815
      %824 = vst [vmem:[#allocation2 + $0x10] sm:$0xff] %v816
      %825 = vst [vmem:[#allocation2 + $0x18] sm:$0xff] %v817
      %826 = vst [vmem:[#allocation2 + $0x20] sm:$0xff] %v818
      %827 = vst [vmem:[#allocation2 + $0x28] sm:$0xff] %v819
      %828 = vst [vmem:[#allocation2 + $0x30] sm:$0xff] %v820
      %829 = vst [vmem:[#allocation2 + $0x38] sm:$0xff] %v821
      // Predicated region
      $region45: #{batch_wideresnet_forward.11} parent=39 // pred_check
        %p830 = pneg %p377
      $region46: #{batch_wideresnet_forward.11} parent=39 // pred_check_branch
        %832 = sbr.rel (%p830) target = $region48
      $region47: #{batch_wideresnet_forward.11} parent=39 // pred_region
        %v833 = vld [vmem:[#allocation2] sm:$0xff]
        %v834 = vld [vmem:[#allocation2 + $0x8] sm:$0xff]
        %v835 = vld [vmem:[#allocation2 + $0x10] sm:$0xff]
        %v836 = vld [vmem:[#allocation2 + $0x18] sm:$0xff]
        %v837 = vld [vmem:[#allocation2 + $0x20] sm:$0xff]
        %v838 = vld [vmem:[#allocation2 + $0x28] sm:$0xff]
        %v839 = vld [vmem:[#allocation2 + $0x30] sm:$0xff]
        %v840 = vld [vmem:[#allocation2 + $0x38] sm:$0xff]
        %v841 = vld [vmem:[%s362] sm:$0x1]
        %v843 = vlaneseq
        %v844 = vshrl.u32 %v843, 7
        %v845 = vsub.s32 0, %v844
        %v846 = vrot.slane %v841, %v845
        %v848 = vmul.f32 %v833, %v846
        %v849 = vmul.f32 %v834, %v846
        %v850 = vmul.f32 %v835, %v846
        %v851 = vmul.f32 %v836, %v846
        %v852 = vmul.f32 %v837, %v846
        %v853 = vmul.f32 %v838, %v846
        %v854 = vmul.f32 %v839, %v846
        %v855 = vmul.f32 %v840, %v846
        %v856 = vld [vmem:[%s365] sm:$0x1]
        %v858 = vlaneseq
        %v859 = vshrl.u32 %v858, 7
        %v860 = vsub.s32 0, %v859
        %v861 = vrot.slane %v856, %v860
        %v863 = vadd.f32 %v848, %v861
        %v864 = vadd.f32 %v849, %v861
        %v865 = vadd.f32 %v850, %v861
        %v866 = vadd.f32 %v851, %v861
        %v867 = vadd.f32 %v852, %v861
        %v868 = vadd.f32 %v853, %v861
        %v869 = vadd.f32 %v854, %v861
        %v870 = vadd.f32 %v855, %v861
        %v871 = vmax.f32 %v863, 0.0
        %v872 = vmax.f32 %v864, 0.0
        %v873 = vmax.f32 %v865, 0.0
        %v874 = vmax.f32 %v866, 0.0
        %v875 = vmax.f32 %v867, 0.0
        %v876 = vmax.f32 %v868, 0.0
        %v877 = vmax.f32 %v869, 0.0
        %v878 = vmax.f32 %v870, 0.0
        %v879 = vpack.c.bf16 %v872, %v871
        %v880 = vpack.c.bf16 %v874, %v873
        %v881 = vpack.c.bf16 %v876, %v875
        %v882 = vpack.c.bf16 %v878, %v877
        %v887 = vunpack.c.l.b16 %v879
        %v888 = vunpack.c.h.b16 %v879
        %v889 = vunpack.c.l.b16 %v880
        %v890 = vunpack.c.h.b16 %v880
        %v891 = vunpack.c.l.b16 %v881
        %v892 = vunpack.c.h.b16 %v881
        %v893 = vunpack.c.l.b16 %v882
        %v894 = vunpack.c.h.b16 %v882
        %v895 = vpack.c.b16 %v887, %v887
        %v896 = vpack.c.b16 %v888, %v888
        %v897 = vpack.c.b16 %v889, %v889
        %v898 = vpack.c.b16 %v890, %v890
        %v899 = vpack.c.b16 %v891, %v891
        %v900 = vpack.c.b16 %v892, %v892
        %v901 = vpack.c.b16 %v893, %v893
        %v902 = vpack.c.b16 %v894, %v894
        %911 = vst [vmem:[%s374] sm:$0xf] %v895
        %912 = vst [vmem:[%s374 + $0x4] sm:$0xf] %v896
        %913 = vst [vmem:[%s374 + $0x8] sm:$0xf] %v897
        %914 = vst [vmem:[%s374 + $0xc] sm:$0xf] %v898
        %915 = vst [vmem:[%s374 + $0x10] sm:$0xf] %v899
        %916 = vst [vmem:[%s374 + $0x14] sm:$0xf] %v900
        %917 = vst [vmem:[%s374 + $0x18] sm:$0xf] %v901
        %918 = vst [vmem:[%s374 + $0x1c] sm:$0xf] %v902
      $region48: #{batch_wideresnet_forward.11} parent=39 // pred_fallthru
        _
      %s919 = smul.u32 8, %s22
      %p920 = scmp.lt.s32.totalorder %s21, 3
      %s921 = scalar_select %p920, %s21, 3
      %p922 = scmp.lt.s32.totalorder %s919, 7
      %s923 = scalar_select %p922, %s919, 7
      %s924 = smul.addr %s921, 8
      %s925 = sadd.s32 %s923, %s924
      %s926 = smul.addr %s925, 4
      %s927 = scalar_lea.vmem %s5, %s926
      // Predicated region
      $region49: #{batch_wideresnet_forward.11} parent=39 // pred_check
        %p928 = pneg %p191
      $region50: #{batch_wideresnet_forward.11} parent=39 // pred_check_branch
        %930 = sbr.rel (%p928) target = $region52
      $region51: #{batch_wideresnet_forward.11} parent=39 // pred_region
        %s931 = smul.u32 8, %s22
      $region52: #{batch_wideresnet_forward.11} parent=39 // pred_fallthru
        _
    $region40: #{batch_wideresnet_forward.11} parent=5 // pred_fallthru
      _
    %p932 = scmp.le.s32.totalorder 2, %s11
    // Predicated region
    $region53: #{batch_wideresnet_forward.11} parent=5 // pred_check
      %p933 = pneg %p932
    $region54: #{batch_wideresnet_forward.11} parent=5 // pred_check_branch
      %935 = sbr.rel (%p933) target = $region56
    $region55: #{batch_wideresnet_forward.11} parent=5 // pred_region
      %s936 = ssub.s32 %s11, 2
      // Predicated region
      $region57: #{batch_wideresnet_forward.11} parent=55 // pred_check
        %p937 = pneg %p197
      $region58: #{batch_wideresnet_forward.11} parent=55 // pred_check_branch
        %939 = sbr.rel (%p937) target = $region60
      $region59: #{batch_wideresnet_forward.11} parent=55 // pred_region
        %s940 = smul.u32 8, %s25
        %p941 = scmp.lt.s32.totalorder %s24, 3
        %s942 = scalar_select %p941, %s24, 3
        %p943 = scmp.lt.s32.totalorder %s940, 7
        %s944 = scalar_select %p943, %s940, 7
        %s945 = smul.addr %s942, 8
        %s946 = sadd.s32 %s944, %s945
        %s947 = smul.addr %s946, 4
        %s948 = scalar_lea.vmem %s5, %s947
      $region60: #{batch_wideresnet_forward.11} parent=55 // pred_fallthru
        _
    $region56: #{batch_wideresnet_forward.11} parent=5 // pred_fallthru
      _
  $region6: #{batch_wideresnet_forward.11} parent=0 // loop_footer
    %s15 = sadd.s32 1, %s11
  $region7: #{batch_wideresnet_forward.11} parent=0 // loop_footer_branch
    %10 = sbr.rel target = $region3
  $region8: #{batch_wideresnet_forward.11} parent=0 // loop_exit
    _

// kernel: batch_wideresnet_forward.12
$region0: #{batch_wideresnet_forward.12}
  #allocation0 [shape = 'u32[]', space=smem, size = 0x4, offset = 0x4, fixed_abs, tag = 'smem constant byte address 0x4 - core index']
  #allocation1 [shape = 'u32[144,128]{1,0:T(1,128)}', space=vmem, size = 0x12000, scoped, tag = 'internal scratch']
  %s0 = inlined_call_operand.vmem [shape: bf16[4,5,5,128], index: 0, kind: input, shape index: {}]
  %s1 = inlined_call_operand.vmem [shape: bf16[4,5,5,128], index: 1, kind: input, shape index: {}]
  %s2 = inlined_call_operand.vmem [shape: bf16[4,5,5,128], index: 2, kind: input, shape index: {}]
  %s3 = inlined_call_operand.vmem [shape: bf16[4,5,5,128], index: 3, kind: input, shape index: {}]
  %s4 = inlined_call_operand.vmem [shape: bf16[4,4,4,128], index: 4, kind: output, shape index: {}]
  %s5 = sld [smem:[#allocation0]]
  $region49: #{batch_wideresnet_forward.12} parent=0
    _
  %s7 = ssub.s32 1, %s5
  %s8 = scalar_select 0, %s7, %s5
  loop: start=0, step=1, limit=6
  $region2: #{batch_wideresnet_forward.12} parent=0 // loop_pre_header
    _
  $region3: #{batch_wideresnet_forward.12} parent=0 // loop_header
    %s10 = sphi 0, %s14
    %p11 = scmp.ge.s32.totalorder %s10, 6
    %s20 = sphi 0, %s22
    %s23 = sphi 0, %s20
    %s24 = sphi 0, %s23
    %s40 = sphi 0, %s24
    %s46 = sphi 0, %s48
    %s49 = sphi 0, %s46
    %s50 = sphi 0, %s49
    %s66 = sphi 0, %s50
    %s72 = sphi 0, %s74
    %s75 = sphi 0, %s72
    %s76 = sphi 0, %s75
    %s92 = sphi 0, %s76
    %s98 = sphi 0, %s100
    %s101 = sphi 0, %s98
    %s102 = sphi 0, %s101
    %s118 = sphi 0, %s102
    %s124 = sphi 0, %s126
    %s127 = sphi 0, %s124
    %s128 = sphi 0, %s127
    %s144 = sphi 0, %s128
  $region4: #{batch_wideresnet_forward.12} parent=0 // loop_header_branch
    %13 = sbr.rel (%p11) target = $region8
  $region5: #{batch_wideresnet_forward.12} parent=0 // loop_body
    %s15 = ssub.s32 %s10, 1
    %s16 = ssub.s32 %s10, 2
    %s17 = sadd.s32 %s10, 1
    %s18 = ssub.s32 %s10, %s17
    %p19 = scmp.eq.s32.totalorder %s18, 0
    %s21 = sadd.s32 %s20, 1
    %s22 = scalar_select %p19, %s20, %s21
    %p25 = pneg %p19
    %p26 = scmp.eq.s32.totalorder %s10, 3
    %p27 = por %p25, %p26
    %p28 = scmp.ne.s32.totalorder %s20, %s23
    %p29 = scmp.eq.s32.totalorder %s10, 0
    %p30 = por %p28, %p29
    %p31 = scmp.ne.s32.totalorder %s20, %s23
    %p32 = scmp.eq.s32.totalorder %s15, 3
    %p33 = por %p31, %p32
    %p34 = scmp.ne.s32.totalorder %s23, %s24
    %p35 = scmp.eq.s32.totalorder %s15, 0
    %p36 = por %p34, %p35
    %p37 = scmp.ne.s32.totalorder %s23, %s24
    %p38 = scmp.eq.s32.totalorder %s16, 3
    %p39 = por %p37, %p38
    %p41 = scmp.ne.s32.totalorder %s24, %s40
    %p42 = scmp.eq.s32.totalorder %s16, 0
    %p43 = por %p41, %p42
    %s44 = ssub.s32 %s10, %s17
    %p45 = scmp.eq.s32.totalorder %s44, 0
    %s47 = sadd.s32 %s46, 1
    %s48 = scalar_select %p45, %s46, %s47
    %p51 = pneg %p45
    %p52 = scmp.eq.s32.totalorder %s10, 3
    %p53 = por %p51, %p52
    %p54 = scmp.ne.s32.totalorder %s46, %s49
    %p55 = scmp.eq.s32.totalorder %s10, 0
    %p56 = por %p54, %p55
    %p57 = scmp.ne.s32.totalorder %s46, %s49
    %p58 = scmp.eq.s32.totalorder %s15, 3
    %p59 = por %p57, %p58
    %p60 = scmp.ne.s32.totalorder %s49, %s50
    %p61 = scmp.eq.s32.totalorder %s15, 0
    %p62 = por %p60, %p61
    %p63 = scmp.ne.s32.totalorder %s49, %s50
    %p64 = scmp.eq.s32.totalorder %s16, 3
    %p65 = por %p63, %p64
    %p67 = scmp.ne.s32.totalorder %s50, %s66
    %p68 = scmp.eq.s32.totalorder %s16, 0
    %p69 = por %p67, %p68
    %s70 = ssub.s32 %s10, %s17
    %p71 = scmp.eq.s32.totalorder %s70, 0
    %s73 = sadd.s32 %s72, 1
    %s74 = scalar_select %p71, %s72, %s73
    %p77 = pneg %p71
    %p78 = scmp.eq.s32.totalorder %s10, 3
    %p79 = por %p77, %p78
    %p80 = scmp.ne.s32.totalorder %s72, %s75
    %p81 = scmp.eq.s32.totalorder %s10, 0
    %p82 = por %p80, %p81
    %p83 = scmp.ne.s32.totalorder %s72, %s75
    %p84 = scmp.eq.s32.totalorder %s15, 3
    %p85 = por %p83, %p84
    %p86 = scmp.ne.s32.totalorder %s75, %s76
    %p87 = scmp.eq.s32.totalorder %s15, 0
    %p88 = por %p86, %p87
    %p89 = scmp.ne.s32.totalorder %s75, %s76
    %p90 = scmp.eq.s32.totalorder %s16, 3
    %p91 = por %p89, %p90
    %p93 = scmp.ne.s32.totalorder %s76, %s92
    %p94 = scmp.eq.s32.totalorder %s16, 0
    %p95 = por %p93, %p94
    %s96 = ssub.s32 %s10, %s17
    %p97 = scmp.eq.s32.totalorder %s96, 0
    %s99 = sadd.s32 %s98, 1
    %s100 = scalar_select %p97, %s98, %s99
    %p103 = pneg %p97
    %p104 = scmp.eq.s32.totalorder %s10, 3
    %p105 = por %p103, %p104
    %p106 = scmp.ne.s32.totalorder %s98, %s101
    %p107 = scmp.eq.s32.totalorder %s10, 0
    %p108 = por %p106, %p107
    %p109 = scmp.ne.s32.totalorder %s98, %s101
    %p110 = scmp.eq.s32.totalorder %s15, 3
    %p111 = por %p109, %p110
    %p112 = scmp.ne.s32.totalorder %s101, %s102
    %p113 = scmp.eq.s32.totalorder %s15, 0
    %p114 = por %p112, %p113
    %p115 = scmp.ne.s32.totalorder %s101, %s102
    %p116 = scmp.eq.s32.totalorder %s16, 3
    %p117 = por %p115, %p116
    %p119 = scmp.ne.s32.totalorder %s102, %s118
    %p120 = scmp.eq.s32.totalorder %s16, 0
    %p121 = por %p119, %p120
    %s122 = ssub.s32 %s10, %s17
    %p123 = scmp.eq.s32.totalorder %s122, 0
    %s125 = sadd.s32 %s124, 1
    %s126 = scalar_select %p123, %s124, %s125
    %p129 = pneg %p123
    %p130 = scmp.eq.s32.totalorder %s10, 3
    %p131 = por %p129, %p130
    %p132 = scmp.ne.s32.totalorder %s124, %s127
    %p133 = scmp.eq.s32.totalorder %s10, 0
    %p134 = por %p132, %p133
    %p135 = scmp.ne.s32.totalorder %s124, %s127
    %p136 = scmp.eq.s32.totalorder %s15, 3
    %p137 = por %p135, %p136
    %p138 = scmp.ne.s32.totalorder %s127, %s128
    %p139 = scmp.eq.s32.totalorder %s15, 0
    %p140 = por %p138, %p139
    %p141 = scmp.ne.s32.totalorder %s127, %s128
    %p142 = scmp.eq.s32.totalorder %s16, 3
    %p143 = por %p141, %p142
    %p145 = scmp.ne.s32.totalorder %s128, %s144
    %p146 = scmp.eq.s32.totalorder %s16, 0
    %p147 = por %p145, %p146
    %p148 = scmp.le.s32.totalorder 1, %s10
    %p149 = scmp.lt.s32.totalorder %s10, 5
    %p150 = pnand %p148, %p149
    %p151 = pneg %p150
    // Predicated region
    $region9: #{batch_wideresnet_forward.12} parent=5 // pred_check
      _
    $region10: #{batch_wideresnet_forward.12} parent=5 // pred_check_branch
      %153 = sbr.rel (%p150) target = $region12
    $region11: #{batch_wideresnet_forward.12} parent=5 // pred_region
      %s154 = ssub.s32 %s10, 1
    $region12: #{batch_wideresnet_forward.12} parent=5 // pred_fallthru
      _
    %p155 = scmp.lt.s32.totalorder %s10, 4
    // Predicated region
    $region13: #{batch_wideresnet_forward.12} parent=5 // pred_check
      %p156 = pneg %p155
    $region14: #{batch_wideresnet_forward.12} parent=5 // pred_check_branch
      %158 = sbr.rel (%p156) target = $region16
    $region15: #{batch_wideresnet_forward.12} parent=5 // pred_region
      // Predicated region
      $region17: #{batch_wideresnet_forward.12} parent=15 // pred_check
        %p159 = pneg %p30
      $region18: #{batch_wideresnet_forward.12} parent=15 // pred_check_branch
        %161 = sbr.rel (%p159) target = $region20
      $region19: #{batch_wideresnet_forward.12} parent=15 // pred_region
        %p162 = scmp.lt.s32.totalorder %s10, 3
        %s163 = scalar_select %p162, %s10, 3
        %s164 = smul.addr %s163, 5
        %s165 = smul.addr %s164, 4
        %s166 = scalar_lea.vmem %s0, %s165
      $region20: #{batch_wideresnet_forward.12} parent=15 // pred_fallthru
        _
      // Predicated region
      $region21: #{batch_wideresnet_forward.12} parent=15 // pred_check
        %p167 = pneg %p56
      $region22: #{batch_wideresnet_forward.12} parent=15 // pred_check_branch
        %169 = sbr.rel (%p167) target = $region24
      $region23: #{batch_wideresnet_forward.12} parent=15 // pred_region
        %p170 = scmp.lt.s32.totalorder %s10, 3
        %s171 = scalar_select %p170, %s10, 3
        %s172 = smul.addr %s171, 5
        %s173 = smul.addr %s172, 4
        %s174 = scalar_lea.vmem %s1, %s173
      $region24: #{batch_wideresnet_forward.12} parent=15 // pred_fallthru
        _
      // Predicated region
      $region25: #{batch_wideresnet_forward.12} parent=15 // pred_check
        %p175 = pneg %p82
      $region26: #{batch_wideresnet_forward.12} parent=15 // pred_check_branch
        %177 = sbr.rel (%p175) target = $region28
      $region27: #{batch_wideresnet_forward.12} parent=15 // pred_region
        %p178 = scmp.lt.s32.totalorder %s10, 3
        %s179 = scalar_select %p178, %s10, 3
        %s180 = smul.addr %s179, 5
        %s181 = smul.addr %s180, 4
        %s182 = scalar_lea.vmem %s2, %s181
      $region28: #{batch_wideresnet_forward.12} parent=15 // pred_fallthru
        _
      // Predicated region
      $region29: #{batch_wideresnet_forward.12} parent=15 // pred_check
        %p183 = pneg %p108
      $region30: #{batch_wideresnet_forward.12} parent=15 // pred_check_branch
        %185 = sbr.rel (%p183) target = $region32
      $region31: #{batch_wideresnet_forward.12} parent=15 // pred_region
        %p186 = scmp.lt.s32.totalorder %s10, 3
        %s187 = scalar_select %p186, %s10, 3
        %s188 = smul.addr %s187, 5
        %s189 = smul.addr %s188, 4
        %s190 = scalar_lea.vmem %s3, %s189
      $region32: #{batch_wideresnet_forward.12} parent=15 // pred_fallthru
        _
    $region16: #{batch_wideresnet_forward.12} parent=5 // pred_fallthru
      _
    %p191 = scmp.le.s32.totalorder 1, %s10
    %p192 = scmp.lt.s32.totalorder %s10, 5
    %p193 = pnand %p191, %p192
    %p194 = pneg %p193
    // Predicated region
    $region33: #{batch_wideresnet_forward.12} parent=5 // pred_check
      _
    $region34: #{batch_wideresnet_forward.12} parent=5 // pred_check_branch
      %196 = sbr.rel (%p193) target = $region36
    $region35: #{batch_wideresnet_forward.12} parent=5 // pred_region
      %s197 = ssub.s32 %s10, 1
      %p198 = scmp.lt.s32.totalorder %s15, 3
      %s199 = scalar_select %p198, %s15, 3
      %s200 = smul.addr %s199, 5
      %s201 = smul.addr %s200, 4
      %s202 = scalar_lea.vmem %s0, %s201
      %p203 = pneg %p36
      %p204 = pneg %p33
      %p205 = scmp.lt.s32.totalorder %s15, 3
      %s206 = scalar_select %p205, %s15, 3
      %s207 = smul.addr %s206, 5
      %s208 = smul.addr %s207, 4
      %s209 = scalar_lea.vmem %s1, %s208
      %p210 = pneg %p62
      %p211 = pneg %p59
      %p212 = scmp.lt.s32.totalorder %s15, 3
      %s213 = scalar_select %p212, %s15, 3
      %s214 = smul.addr %s213, 5
      %s215 = smul.addr %s214, 4
      %s216 = scalar_lea.vmem %s2, %s215
      %p217 = pneg %p88
      %p218 = pneg %p85
      %p219 = scmp.lt.s32.totalorder %s15, 3
      %s220 = scalar_select %p219, %s15, 3
      %s221 = smul.addr %s220, 5
      %s222 = smul.addr %s221, 4
      %s223 = scalar_lea.vmem %s3, %s222
      %p224 = pneg %p114
      %p225 = pneg %p111
      %p226 = pneg %p140
      %p227 = pneg %p137
      %p228 = scmp.lt.s32.totalorder %s15, 3
      %s229 = scalar_select %p228, %s15, 3
      %s230 = smul.addr %s229, 4
      %s231 = smul.addr %s230, 2
      %s232 = scalar_lea.vmem %s4, %s231
      %p233 = scmp.lt.s32.totalorder %s15, 3
      %s234 = scalar_select %p233, %s15, 3
      %s235 = smul.addr %s234, 5
      %s236 = smul.addr %s235, 4
      %s237 = scalar_lea.vmem %s0, %s236
      %p238 = scmp.lt.s32.totalorder %s15, 3
      %s239 = scalar_select %p238, %s15, 3
      %s240 = smul.addr %s239, 5
      %s241 = smul.addr %s240, 4
      %s242 = scalar_lea.vmem %s1, %s241
      %p243 = scmp.lt.s32.totalorder %s15, 3
      %s244 = scalar_select %p243, %s15, 3
      %s245 = smul.addr %s244, 5
      %s246 = smul.addr %s245, 4
      %s247 = scalar_lea.vmem %s2, %s246
      %p248 = scmp.lt.s32.totalorder %s15, 3
      %s249 = scalar_select %p248, %s15, 3
      %s250 = smul.addr %s249, 5
      %s251 = smul.addr %s250, 4
      %s252 = scalar_lea.vmem %s3, %s251
      %p253 = scmp.lt.s32.totalorder %s15, 3
      %s254 = scalar_select %p253, %s15, 3
      %s255 = smul.addr %s254, 4
      %s256 = smul.addr %s255, 2
      %s257 = scalar_lea.vmem %s4, %s256
      %v258 = vld [vmem:[%s237] sm:$0x7]
      %v259 = vld [vmem:[%s237 + $0x4] sm:$0x7]
      %v260 = vld [vmem:[%s237 + $0x8] sm:$0x7]
      %v261 = vld [vmem:[%s237 + $0xc] sm:$0x7]
      %v262 = vld [vmem:[%s237 + $0x10] sm:$0x7]
      %v263 = vld [vmem:[%s242] sm:$0x7]
      %v264 = vld [vmem:[%s242 + $0x4] sm:$0x7]
      %v265 = vld [vmem:[%s242 + $0x8] sm:$0x7]
      %v266 = vld [vmem:[%s242 + $0xc] sm:$0x7]
      %v267 = vld [vmem:[%s242 + $0x10] sm:$0x7]
      %v268 = vld [vmem:[%s247] sm:$0x7]
      %v269 = vld [vmem:[%s247 + $0x4] sm:$0x7]
      %v270 = vld [vmem:[%s247 + $0x8] sm:$0x7]
      %v271 = vld [vmem:[%s247 + $0xc] sm:$0x7]
      %v272 = vld [vmem:[%s252] sm:$0x7]
      %v273 = vld [vmem:[%s252 + $0x4] sm:$0x7]
      %v274 = vld [vmem:[%s252 + $0x8] sm:$0x7]
      %v275 = vld [vmem:[%s252 + $0xc] sm:$0x7]
      %v277 = vshrl.u32 %v258, 16
      %v279 = vrot.slane %v277, 4
      %v280 = vshll.u32 %v258, 16
      %v282 = vrot.slane %v280, 5
      %v283 = vor.u32 %v279, %v282
      %v284 = vrot.slane %v283, 4
      %v286 = vshrl.u32 %v259, 16
      %v288 = vrot.slane %v286, 4
      %v289 = vshll.u32 %v259, 16
      %v291 = vrot.slane %v289, 5
      %v292 = vor.u32 %v288, %v291
      %v293 = vrot.slane %v292, 4
      %v295 = vshrl.u32 %v260, 16
      %v297 = vrot.slane %v295, 4
      %v298 = vshll.u32 %v260, 16
      %v300 = vrot.slane %v298, 5
      %v301 = vor.u32 %v297, %v300
      %v302 = vrot.slane %v301, 4
      %v304 = vshrl.u32 %v261, 16
      %v306 = vrot.slane %v304, 4
      %v307 = vshll.u32 %v261, 16
      %v309 = vrot.slane %v307, 5
      %v310 = vor.u32 %v306, %v309
      %v311 = vrot.slane %v310, 4
      %v316 = vmax.bf16 %v258, %v284
      %v317 = vmax.bf16 %v259, %v293
      %v318 = vmax.bf16 %v260, %v302
      %v319 = vmax.bf16 %v261, %v311
      %v320 = vmax.bf16 %v316, %v259
      %v321 = vmax.bf16 %v317, %v260
      %v322 = vmax.bf16 %v318, %v261
      %v323 = vmax.bf16 %v319, %v262
      %v325 = vshrl.u32 %v262, 16
      %v327 = vrot.slane %v325, 4
      %v328 = vshll.u32 %v262, 16
      %v330 = vrot.slane %v328, 5
      %v331 = vor.u32 %v327, %v330
      %v332 = vrot.slane %v331, 4
      %v334 = vmax.bf16 %v320, %v293
      %v335 = vmax.bf16 %v321, %v302
      %v336 = vmax.bf16 %v322, %v311
      %v337 = vmax.bf16 %v323, %v332
      %v338 = vmax.bf16 %v334, %v263
      %v339 = vmax.bf16 %v335, %v264
      %v340 = vmax.bf16 %v336, %v265
      %v341 = vmax.bf16 %v337, %v266
      %v342 = vmax.bf16 %v338, %v264
      %v343 = vmax.bf16 %v339, %v265
      %v344 = vmax.bf16 %v340, %v266
      %v345 = vmax.bf16 %v341, %v267
      %v346 = vmax.bf16 %v342, %v268
      %v347 = vmax.bf16 %v343, %v269
      %v348 = vmax.bf16 %v344, %v270
      %v349 = vmax.bf16 %v345, %v271
      %v351 = vshrl.u32 %v268, 16
      %v353 = vrot.slane %v351, 4
      %v354 = vshll.u32 %v268, 16
      %v356 = vrot.slane %v354, 5
      %v357 = vor.u32 %v353, %v356
      %v358 = vrot.slane %v357, 4
      %v360 = vshrl.u32 %v269, 16
      %v362 = vrot.slane %v360, 4
      %v363 = vshll.u32 %v269, 16
      %v365 = vrot.slane %v363, 5
      %v366 = vor.u32 %v362, %v365
      %v367 = vrot.slane %v366, 4
      %v369 = vshrl.u32 %v270, 16
      %v371 = vrot.slane %v369, 4
      %v372 = vshll.u32 %v270, 16
      %v374 = vrot.slane %v372, 5
      %v375 = vor.u32 %v371, %v374
      %v376 = vrot.slane %v375, 4
      %v378 = vshrl.u32 %v271, 16
      %v380 = vrot.slane %v378, 4
      %v381 = vshll.u32 %v271, 16
      %v383 = vrot.slane %v381, 5
      %v384 = vor.u32 %v380, %v383
      %v385 = vrot.slane %v384, 4
      %v390 = vmax.bf16 %v346, %v358
      %v391 = vmax.bf16 %v347, %v367
      %v392 = vmax.bf16 %v348, %v376
      %v393 = vmax.bf16 %v349, %v385
      %v394 = vmax.bf16 %v390, %v272
      %v395 = vmax.bf16 %v391, %v273
      %v396 = vmax.bf16 %v392, %v274
      %v397 = vmax.bf16 %v393, %v275
      %398 = vst [vmem:[%s257] sm:$0x3] %v394
      %399 = vst [vmem:[%s257 + $0x2] sm:$0x3] %v395
      %400 = vst [vmem:[%s257 + $0x4] sm:$0x3] %v396
      %401 = vst [vmem:[%s257 + $0x6] sm:$0x3] %v397
      %p402 = scmp.lt.s32.totalorder %s15, 3
      %s403 = scalar_select %p402, %s15, 3
      %s404 = smul.addr %s403, 4
      %s405 = smul.addr %s404, 2
      %s406 = scalar_lea.vmem %s4, %s405
      // Predicated region
      $region37: #{batch_wideresnet_forward.12} parent=35 // pred_check
        %p407 = pneg %p137
      $region38: #{batch_wideresnet_forward.12} parent=35 // pred_check_branch
        %409 = sbr.rel (%p407) target = $region40
      $region39: #{batch_wideresnet_forward.12} parent=35 // pred_region
        _
      $region40: #{batch_wideresnet_forward.12} parent=35 // pred_fallthru
        _
    $region36: #{batch_wideresnet_forward.12} parent=5 // pred_fallthru
      _
    %p410 = scmp.le.s32.totalorder 2, %s10
    // Predicated region
    $region41: #{batch_wideresnet_forward.12} parent=5 // pred_check
      %p411 = pneg %p410
    $region42: #{batch_wideresnet_forward.12} parent=5 // pred_check_branch
      %413 = sbr.rel (%p411) target = $region44
    $region43: #{batch_wideresnet_forward.12} parent=5 // pred_region
      %s414 = ssub.s32 %s10, 2
      // Predicated region
      $region45: #{batch_wideresnet_forward.12} parent=43 // pred_check
        %p415 = pneg %p143
      $region46: #{batch_wideresnet_forward.12} parent=43 // pred_check_branch
        %417 = sbr.rel (%p415) target = $region48
      $region47: #{batch_wideresnet_forward.12} parent=43 // pred_region
        %p418 = scmp.lt.s32.totalorder %s16, 3
        %s419 = scalar_select %p418, %s16, 3
        %s420 = smul.addr %s419, 4
        %s421 = smul.addr %s420, 2
        %s422 = scalar_lea.vmem %s4, %s421
      $region48: #{batch_wideresnet_forward.12} parent=43 // pred_fallthru
        _
    $region44: #{batch_wideresnet_forward.12} parent=5 // pred_fallthru
      _
  $region6: #{batch_wideresnet_forward.12} parent=0 // loop_footer
    %s14 = sadd.s32 1, %s10
  $region7: #{batch_wideresnet_forward.12} parent=0 // loop_footer_branch
    %9 = sbr.rel target = $region3
  $region8: #{batch_wideresnet_forward.12} parent=0 // loop_exit
    _

// kernel: batch_wideresnet_forward.13
$region0: #{batch_wideresnet_forward.13}
  #allocation0 [shape = 'u32[]', space=smem, size = 0x4, offset = 0x4, fixed_abs, tag = 'smem constant byte address 0x4 - core index']
  #allocation1 [shape = 'u32[144,128]{1,0:T(1,128)}', space=vmem, size = 0x12000, scoped, tag = 'internal scratch']
  #allocation2 [shape = 'f32[16,128]{1,0:T(8,128)}', space=vmem, size = 0x2000, scoped, tag = 'scratch operand']
  %s0 = inlined_call_operand.vmem [shape: bf16[4,16,1152], index: 0, kind: input, shape index: {}]
  %s1 = inlined_call_operand.vmem [shape: f32[4,1152,1], index: 1, kind: input, shape index: {}]
  %s2 = inlined_call_operand.vmem [shape: bf16[1152,128], index: 2, kind: input, shape index: {}]
  %s3 = inlined_call_operand.vmem [shape: f32[4,1,128], index: 3, kind: input, shape index: {}]
  %s4 = inlined_call_operand.vmem [shape: f32[4,1,128], index: 4, kind: input, shape index: {}]
  %s5 = inlined_call_operand.vmem [shape: bf16[4,16,128], index: 5, kind: output, shape index: {}]
  %s6 = sld [smem:[#allocation0]]
  $region87: #{batch_wideresnet_forward.13} parent=0
    _
  %s8 = ssub.s32 1, %s6
  %s9 = scalar_select 0, %s8, %s6
  $region1: #{batch_wideresnet_forward.13} parent=0
    #allocation3 [shape = 'u8[24576]{0}', space=vmem, size = 0x6000, scoped, tag = 'input window, operand 0']
    loop: start=0, step=1, limit=14
    $region2: #{batch_wideresnet_forward.13} parent=1 // loop_pre_header
      _
    $region3: #{batch_wideresnet_forward.13} parent=1 // loop_header
      %s11 = sphi 0, %s15
      %p12 = scmp.ge.s32.totalorder %s11, 14
      %s18 = sphi 0, %s37
      %s19 = sphi 0, %s33
      %s20 = sphi 0, %s29
      %s21 = sphi 0, %s18
      %s22 = sphi 0, %s19
      %s23 = sphi 0, %s20
      %s24 = sphi 0, %s21
      %s25 = sphi 0, %s22
      %s26 = sphi 0, %s23
      %s44 = sphi 0, %s46
      %s47 = sphi 0, %s44
      %s48 = sphi 0, %s47
      %s64 = sphi 0, %s48
      %s72 = sphi 0, %s74
      %s75 = sphi 0, %s72
      %s76 = sphi 0, %s75
      %s92 = sphi 0, %s76
      %s98 = sphi 0, %s100
      %s101 = sphi 0, %s98
      %s102 = sphi 0, %s101
      %s118 = sphi 0, %s102
      %s124 = sphi 0, %s126
      %s127 = sphi 0, %s124
      %s128 = sphi 0, %s127
      %s144 = sphi 0, %s128
      %s150 = sphi 0, %s152
      %s153 = sphi 0, %s150
      %s154 = sphi 0, %s153
      %s170 = sphi 0, %s154
      %s178 = sphi 0, %s180
      %s181 = sphi 0, %s178
      %s182 = sphi 0, %s181
      %s198 = sphi 0, %s182
    $region4: #{batch_wideresnet_forward.13} parent=1 // loop_header_branch
      %14 = sbr.rel (%p12) target = $region8
    $region5: #{batch_wideresnet_forward.13} parent=1 // loop_body
      %s16 = ssub.s32 %s11, 1
      %s17 = ssub.s32 %s11, 2
      %s27 = sadd.s32 1, %s20
      %p28 = scmp.ge.s32.totalorder %s27, 3
      %s29 = scalar_select %p28, 0, %s27
      %s30 = sadd.s32 1, %s19
      %s31 = scalar_select %p28, %s30, %s19
      %p32 = scmp.ge.s32.totalorder %s31, 1
      %s33 = scalar_select %p32, 0, %s31
      %s34 = sadd.s32 1, %s18
      %s35 = scalar_select %p32, %s34, %s18
      %p36 = scmp.ge.s32.totalorder %s35, 4
      %s37 = scalar_select %p36, 0, %s35
      %s38 = ssub.s32 %s18, %s37
      %s39 = ssub.s32 %s19, %s33
      %s40 = sor.u32 %s38, %s39
      %s41 = ssub.s32 %s20, %s29
      %s42 = sor.u32 %s40, %s41
      %p43 = scmp.eq.s32.totalorder %s42, 0
      %s45 = sadd.s32 %s44, 1
      %s46 = scalar_select %p43, %s44, %s45
      %p49 = pneg %p43
      %p50 = scmp.eq.s32.totalorder %s11, 11
      %p51 = por %p49, %p50
      %p52 = scmp.ne.s32.totalorder %s44, %s47
      %p53 = scmp.eq.s32.totalorder %s11, 0
      %p54 = por %p52, %p53
      %p55 = scmp.ne.s32.totalorder %s44, %s47
      %p56 = scmp.eq.s32.totalorder %s16, 11
      %p57 = por %p55, %p56
      %p58 = scmp.ne.s32.totalorder %s47, %s48
      %p59 = scmp.eq.s32.totalorder %s16, 0
      %p60 = por %p58, %p59
      %p61 = scmp.ne.s32.totalorder %s47, %s48
      %p62 = scmp.eq.s32.totalorder %s17, 11
      %p63 = por %p61, %p62
      %p65 = scmp.ne.s32.totalorder %s48, %s64
      %p66 = scmp.eq.s32.totalorder %s17, 0
      %p67 = por %p65, %p66
      %s68 = ssub.s32 %s18, %s37
      %s69 = ssub.s32 %s20, %s29
      %s70 = sor.u32 %s68, %s69
      %p71 = scmp.eq.s32.totalorder %s70, 0
      %s73 = sadd.s32 %s72, 1
      %s74 = scalar_select %p71, %s72, %s73
      %p77 = pneg %p71
      %p78 = scmp.eq.s32.totalorder %s11, 11
      %p79 = por %p77, %p78
      %p80 = scmp.ne.s32.totalorder %s72, %s75
      %p81 = scmp.eq.s32.totalorder %s11, 0
      %p82 = por %p80, %p81
      %p83 = scmp.ne.s32.totalorder %s72, %s75
      %p84 = scmp.eq.s32.totalorder %s16, 11
      %p85 = por %p83, %p84
      %p86 = scmp.ne.s32.totalorder %s75, %s76
      %p87 = scmp.eq.s32.totalorder %s16, 0
      %p88 = por %p86, %p87
      %p89 = scmp.ne.s32.totalorder %s75, %s76
      %p90 = scmp.eq.s32.totalorder %s17, 11
      %p91 = por %p89, %p90
      %p93 = scmp.ne.s32.totalorder %s76, %s92
      %p94 = scmp.eq.s32.totalorder %s17, 0
      %p95 = por %p93, %p94
      %s96 = ssub.s32 %s20, %s29
      %p97 = scmp.eq.s32.totalorder %s96, 0
      %s99 = sadd.s32 %s98, 1
      %s100 = scalar_select %p97, %s98, %s99
      %p103 = pneg %p97
      %p104 = scmp.eq.s32.totalorder %s11, 11
      %p105 = por %p103, %p104
      %p106 = scmp.ne.s32.totalorder %s98, %s101
      %p107 = scmp.eq.s32.totalorder %s11, 0
      %p108 = por %p106, %p107
      %p109 = scmp.ne.s32.totalorder %s98, %s101
      %p110 = scmp.eq.s32.totalorder %s16, 11
      %p111 = por %p109, %p110
      %p112 = scmp.ne.s32.totalorder %s101, %s102
      %p113 = scmp.eq.s32.totalorder %s16, 0
      %p114 = por %p112, %p113
      %p115 = scmp.ne.s32.totalorder %s101, %s102
      %p116 = scmp.eq.s32.totalorder %s17, 11
      %p117 = por %p115, %p116
      %p119 = scmp.ne.s32.totalorder %s102, %s118
      %p120 = scmp.eq.s32.totalorder %s17, 0
      %p121 = por %p119, %p120
      %s122 = ssub.s32 %s18, %s37
      %p123 = scmp.eq.s32.totalorder %s122, 0
      %s125 = sadd.s32 %s124, 1
      %s126 = scalar_select %p123, %s124, %s125
      %p129 = pneg %p123
      %p130 = scmp.eq.s32.totalorder %s11, 11
      %p131 = por %p129, %p130
      %p132 = scmp.ne.s32.totalorder %s124, %s127
      %p133 = scmp.eq.s32.totalorder %s11, 0
      %p134 = por %p132, %p133
      %p135 = scmp.ne.s32.totalorder %s124, %s127
      %p136 = scmp.eq.s32.totalorder %s16, 11
      %p137 = por %p135, %p136
      %p138 = scmp.ne.s32.totalorder %s127, %s128
      %p139 = scmp.eq.s32.totalorder %s16, 0
      %p140 = por %p138, %p139
      %p141 = scmp.ne.s32.totalorder %s127, %s128
      %p142 = scmp.eq.s32.totalorder %s17, 11
      %p143 = por %p141, %p142
      %p145 = scmp.ne.s32.totalorder %s128, %s144
      %p146 = scmp.eq.s32.totalorder %s17, 0
      %p147 = por %p145, %p146
      %s148 = ssub.s32 %s18, %s37
      %p149 = scmp.eq.s32.totalorder %s148, 0
      %s151 = sadd.s32 %s150, 1
      %s152 = scalar_select %p149, %s150, %s151
      %p155 = pneg %p149
      %p156 = scmp.eq.s32.totalorder %s11, 11
      %p157 = por %p155, %p156
      %p158 = scmp.ne.s32.totalorder %s150, %s153
      %p159 = scmp.eq.s32.totalorder %s11, 0
      %p160 = por %p158, %p159
      %p161 = scmp.ne.s32.totalorder %s150, %s153
      %p162 = scmp.eq.s32.totalorder %s16, 11
      %p163 = por %p161, %p162
      %p164 = scmp.ne.s32.totalorder %s153, %s154
      %p165 = scmp.eq.s32.totalorder %s16, 0
      %p166 = por %p164, %p165
      %p167 = scmp.ne.s32.totalorder %s153, %s154
      %p168 = scmp.eq.s32.totalorder %s17, 11
      %p169 = por %p167, %p168
      %p171 = scmp.ne.s32.totalorder %s154, %s170
      %p172 = scmp.eq.s32.totalorder %s17, 0
      %p173 = por %p171, %p172
      %s174 = ssub.s32 %s18, %s37
      %s175 = ssub.s32 %s19, %s33
      %s176 = sor.u32 %s174, %s175
      %p177 = scmp.eq.s32.totalorder %s176, 0
      %s179 = sadd.s32 %s178, 1
      %s180 = scalar_select %p177, %s178, %s179
      %p183 = pneg %p177
      %p184 = scmp.eq.s32.totalorder %s11, 11
      %p185 = por %p183, %p184
      %p186 = scmp.ne.s32.totalorder %s178, %s181
      %p187 = scmp.eq.s32.totalorder %s11, 0
      %p188 = por %p186, %p187
      %p189 = scmp.ne.s32.totalorder %s178, %s181
      %p190 = scmp.eq.s32.totalorder %s16, 11
      %p191 = por %p189, %p190
      %p192 = scmp.ne.s32.totalorder %s181, %s182
      %p193 = scmp.eq.s32.totalorder %s16, 0
      %p194 = por %p192, %p193
      %p195 = scmp.ne.s32.totalorder %s181, %s182
      %p196 = scmp.eq.s32.totalorder %s17, 11
      %p197 = por %p195, %p196
      %p199 = scmp.ne.s32.totalorder %s182, %s198
      %p200 = scmp.eq.s32.totalorder %s17, 0
      %p201 = por %p199, %p200
      %p202 = scmp.le.s32.totalorder 1, %s11
      %p203 = scmp.lt.s32.totalorder %s11, 13
      %p204 = pnand %p202, %p203
      %p205 = pneg %p204
      // Predicated region
      $region9: #{batch_wideresnet_forward.13} parent=5 // pred_check
        _
      $region10: #{batch_wideresnet_forward.13} parent=5 // pred_check_branch
        %207 = sbr.rel (%p204) target = $region12
      $region11: #{batch_wideresnet_forward.13} parent=5 // pred_region
        %s208 = ssub.s32 %s11, 1
      $region12: #{batch_wideresnet_forward.13} parent=5 // pred_fallthru
        _
      %p209 = scmp.lt.s32.totalorder %s11, 12
      // Predicated region
      $region13: #{batch_wideresnet_forward.13} parent=5 // pred_check
        %p210 = pneg %p209
      $region14: #{batch_wideresnet_forward.13} parent=5 // pred_check_branch
        %212 = sbr.rel (%p210) target = $region16
      $region15: #{batch_wideresnet_forward.13} parent=5 // pred_region
        // Predicated region
        $region17: #{batch_wideresnet_forward.13} parent=15 // pred_check
          %p213 = pneg %p54
        $region18: #{batch_wideresnet_forward.13} parent=15 // pred_check_branch
          %215 = sbr.rel (%p213) target = $region20
        $region19: #{batch_wideresnet_forward.13} parent=15 // pred_region
          %s216 = sand.u32 %s44, 1
          %s217 = sand.u32 %s44, 1
          %s218 = smul.addr %s217, 24
          %s219 = scalar_lea.vmem [#allocation3], %s218
          %s220 = smul.u32 2, %s19
          %s221 = smul.u32 3, %s20
          %s222 = smul.addr %s220, 9
          %s223 = sadd.s32 %s221, %s222
          %s224 = smul.addr %s18, 18
          %s225 = sadd.s32 %s223, %s224
          %s226 = smul.addr %s225, 4
          %s227 = scalar_lea.vmem %s0, %s226
          // Predicated region
          $region21: #{batch_wideresnet_forward.13} parent=19 // pred_check
            _
          $region22: #{batch_wideresnet_forward.13} parent=19 // pred_check_branch
            %229 = sbr.rel (0) target = $region24
          $region23: #{batch_wideresnet_forward.13} parent=19 // pred_region
            // Predicated region
            $region25: #{batch_wideresnet_forward.13} parent=23 // pred_check
              _
            $region26: #{batch_wideresnet_forward.13} parent=23 // pred_check_branch
              %231 = sbr.rel (0) target = $region28
            $region27: #{batch_wideresnet_forward.13} parent=23 // pred_region
              %s232 = scalar_lea.vmem %s227, 8
              %s233 = scalar_lea.vmem %s219, 8 [#allocation3]
              loop: start=0, step=1, limit=1
              $region29: #{batch_wideresnet_forward.13} parent=27 // loop_pre_header
                _
              $region30: #{batch_wideresnet_forward.13} parent=27 // loop_header
                %s235 = sphi 0, %s239
                %p236 = scmp.ge.s32.totalorder %s235, 1
                %s240 = sphi %s227, %s227
                %s241 = sphi %s219, %s219
              $region31: #{batch_wideresnet_forward.13} parent=27 // loop_header_branch
                %238 = sbr.rel (%p236) target = $region35
              $region32: #{batch_wideresnet_forward.13} parent=27 // loop_body
                %v242 = vld [vmem:[%s240] sm:$0xff]
                %243 = vst [vmem:[%s241] sm:$0xff] %v242
                %v244 = vld [vmem:[%s240 + $0x24] sm:$0xff]
                %245 = vst [vmem:[%s241 + $0xc] sm:$0xff] %v244
              $region33: #{batch_wideresnet_forward.13} parent=27 // loop_footer
                %s239 = sadd.s32 1, %s235
              $region34: #{batch_wideresnet_forward.13} parent=27 // loop_footer_branch
                %234 = sbr.rel target = $region30
              $region35: #{batch_wideresnet_forward.13} parent=27 // loop_exit
                _
              loop: start=0, step=1, limit=1
              $region36: #{batch_wideresnet_forward.13} parent=27 // loop_pre_header
                _
              $region37: #{batch_wideresnet_forward.13} parent=27 // loop_header
                %s248 = sphi 0, %s252
                %p249 = scmp.ge.s32.totalorder %s248, 1
                %s253 = sphi %s232, %s232
                %s254 = sphi %s233, %s233
              $region38: #{batch_wideresnet_forward.13} parent=27 // loop_header_branch
                %251 = sbr.rel (%p249) target = $region42
              $region39: #{batch_wideresnet_forward.13} parent=27 // loop_body
                %v255 = vld [vmem:[%s253] sm:$0xf]
                %256 = vst [vmem:[%s254] sm:$0xf] %v255
                %v257 = vld [vmem:[%s253 + $0x24] sm:$0xf]
                %258 = vst [vmem:[%s254 + $0xc] sm:$0xf] %v257
              $region40: #{batch_wideresnet_forward.13} parent=27 // loop_footer
                %s252 = sadd.s32 1, %s248
              $region41: #{batch_wideresnet_forward.13} parent=27 // loop_footer_branch
                %247 = sbr.rel target = $region37
              $region42: #{batch_wideresnet_forward.13} parent=27 // loop_exit
                _
            $region28: #{batch_wideresnet_forward.13} parent=23 // pred_fallthru
              _
          $region24: #{batch_wideresnet_forward.13} parent=19 // pred_fallthru
            _
          %259 = vnop
        $region20: #{batch_wideresnet_forward.13} parent=15 // pred_fallthru
          _
        // Predicated region
        $region43: #{batch_wideresnet_forward.13} parent=15 // pred_check
          %p260 = pneg %p82
        $region44: #{batch_wideresnet_forward.13} parent=15 // pred_check_branch
          %262 = sbr.rel (%p260) target = $region46
        $region45: #{batch_wideresnet_forward.13} parent=15 // pred_region
          %s263 = smul.u32 48, %s20
          %p264 = scmp.lt.s32.totalorder %s18, 3
          %s265 = scalar_select %p264, %s18, 3
          %p266 = scmp.lt.s32.totalorder %s263, 143
          %s267 = scalar_select %p266, %s263, 143
          %s268 = smul.addr %s265, 144
          %s269 = sadd.s32 %s267, %s268
          %s270 = smul.addr %s269, 8
          %s271 = scalar_lea.vmem %s1, %s270
          %s272 = smul.u32 48, %s20
        $region46: #{batch_wideresnet_forward.13} parent=15 // pred_fallthru
          _
        // Predicated region
        $region47: #{batch_wideresnet_forward.13} parent=15 // pred_check
          %p273 = pneg %p108
        $region48: #{batch_wideresnet_forward.13} parent=15 // pred_check_branch
          %275 = sbr.rel (%p273) target = $region50
        $region49: #{batch_wideresnet_forward.13} parent=15 // pred_region
          %s276 = smul.u32 48, %s20
          %p277 = scmp.lt.s32.totalorder %s276, 143
          %s278 = scalar_select %p277, %s276, 143
          %s279 = smul.addr %s278, 4
          %s280 = scalar_lea.vmem %s2, %s279
          %s281 = smul.u32 48, %s20
        $region50: #{batch_wideresnet_forward.13} parent=15 // pred_fallthru
          _
        // Predicated region
        $region51: #{batch_wideresnet_forward.13} parent=15 // pred_check
          %p282 = pneg %p134
        $region52: #{batch_wideresnet_forward.13} parent=15 // pred_check_branch
          %284 = sbr.rel (%p282) target = $region54
        $region53: #{batch_wideresnet_forward.13} parent=15 // pred_region
          %p285 = scmp.lt.s32.totalorder %s18, 3
          %s286 = scalar_select %p285, %s18, 3
          %s287 = scalar_lea.vmem %s3, %s286
        $region54: #{batch_wideresnet_forward.13} parent=15 // pred_fallthru
          _
        // Predicated region
        $region55: #{batch_wideresnet_forward.13} parent=15 // pred_check
          %p288 = pneg %p160
        $region56: #{batch_wideresnet_forward.13} parent=15 // pred_check_branch
          %290 = sbr.rel (%p288) target = $region58
        $region57: #{batch_wideresnet_forward.13} parent=15 // pred_region
          %p291 = scmp.lt.s32.totalorder %s18, 3
          %s292 = scalar_select %p291, %s18, 3
          %s293 = scalar_lea.vmem %s4, %s292
        $region58: #{batch_wideresnet_forward.13} parent=15 // pred_fallthru
          _
      $region16: #{batch_wideresnet_forward.13} parent=5 // pred_fallthru
        _
      %p294 = scmp.le.s32.totalorder 1, %s11
      %p295 = scmp.lt.s32.totalorder %s11, 13
      %p296 = pnand %p294, %p295
      %p297 = pneg %p296
      // Predicated region
      $region59: #{batch_wideresnet_forward.13} parent=5 // pred_check
        _
      $region60: #{batch_wideresnet_forward.13} parent=5 // pred_check_branch
        %299 = sbr.rel (%p296) target = $region62
      $region61: #{batch_wideresnet_forward.13} parent=5 // pred_region
        %s300 = ssub.s32 %s11, 1
        %s301 = sand.u32 %s47, 1
        %s302 = sand.u32 %s47, 1
        %s303 = smul.addr %s302, 24
        %s304 = scalar_lea.vmem [#allocation3], %s303
        // Predicated region
        $region63: #{batch_wideresnet_forward.13} parent=61 // pred_check
          %p305 = pneg %p60
        $region64: #{batch_wideresnet_forward.13} parent=61 // pred_check_branch
          %307 = sbr.rel (%p305) target = $region66
        $region65: #{batch_wideresnet_forward.13} parent=61 // pred_region
          _
        $region66: #{batch_wideresnet_forward.13} parent=61 // pred_fallthru
          _
        %s308 = sand.u32 %s47, 1
        %s309 = sand.u32 %s47, 1
        %s310 = smul.addr %s309, 24
        %s311 = scalar_lea.vmem [#allocation3], %s310
        %p312 = pneg %p60
        %p313 = pneg %p57
        %s314 = smul.u32 48, %s23
        %p315 = scmp.lt.s32.totalorder %s21, 3
        %s316 = scalar_select %p315, %s21, 3
        %p317 = scmp.lt.s32.totalorder %s314, 143
        %s318 = scalar_select %p317, %s314, 143
        %s319 = smul.addr %s316, 144
        %s320 = sadd.s32 %s318, %s319
        %s321 = smul.addr %s320, 8
        %s322 = scalar_lea.vmem %s1, %s321
        %p323 = pneg %p88
        %p324 = pneg %p85
        %s325 = smul.u32 48, %s23
        %p326 = scmp.lt.s32.totalorder %s325, 143
        %s327 = scalar_select %p326, %s325, 143
        %s328 = smul.addr %s327, 4
        %s329 = scalar_lea.vmem %s2, %s328
        %p330 = pneg %p114
        %p331 = pneg %p111
        %p332 = scmp.lt.s32.totalorder %s21, 3
        %s333 = scalar_select %p332, %s21, 3
        %s334 = scalar_lea.vmem %s3, %s333
        %p335 = pneg %p140
        %p336 = pneg %p137
        %p337 = scmp.lt.s32.totalorder %s21, 3
        %s338 = scalar_select %p337, %s21, 3
        %s339 = scalar_lea.vmem %s4, %s338
        %p340 = pneg %p166
        %p341 = pneg %p163
        %p342 = pneg %p194
        %p343 = pneg %p191
        %s344 = smul.u32 2, %s22
        %p345 = scmp.lt.s32.totalorder %s21, 3
        %s346 = scalar_select %p345, %s21, 3
        %p347 = scmp.lt.s32.totalorder %s344, 1
        %s348 = scalar_select %p347, %s344, 1
        %s349 = smul.addr %s346, 2
        %s350 = sadd.s32 %s348, %s349
        %s351 = smul.addr %s350, 4
        %s352 = scalar_lea.vmem %s5, %s351
        %s353 = smul.u32 2, %s22
        %s354 = smul.u32 3, %s23
        %s355 = smul.u32 48, %s23
        %p356 = scmp.lt.s32.totalorder %s21, 3
        %s357 = scalar_select %p356, %s21, 3
        %p358 = scmp.lt.s32.totalorder %s355, 143
        %s359 = scalar_select %p358, %s355, 143
        %s360 = smul.addr %s357, 144
        %s361 = sadd.s32 %s359, %s360
        %s362 = smul.addr %s361, 8
        %s363 = scalar_lea.vmem %s1, %s362
        %s364 = smul.u32 48, %s23
        %s365 = smul.u32 48, %s23
        %p366 = scmp.lt.s32.totalorder %s365, 143
        %s367 = scalar_select %p366, %s365, 143
        %s368 = smul.addr %s367, 4
        %s369 = scalar_lea.vmem %s2, %s368
        %s370 = smul.u32 48, %s23
        %p371 = scmp.lt.s32.totalorder %s21, 3
        %s372 = scalar_select %p371, %s21, 3
        %s373 = scalar_lea.vmem %s3, %s372
        %p374 = scmp.lt.s32.totalorder %s21, 3
        %s375 = scalar_select %p374, %s21, 3
        %s376 = scalar_lea.vmem %s4, %s375
        %s377 = smul.u32 2, %s22
        %p378 = scmp.lt.s32.totalorder %s21, 3
        %s379 = scalar_select %p378, %s21, 3
        %p380 = scmp.lt.s32.totalorder %s377, 1
        %s381 = scalar_select %p380, %s377, 1
        %s382 = smul.addr %s379, 2
        %s383 = sadd.s32 %s381, %s382
        %s384 = smul.addr %s383, 4
        %s385 = scalar_lea.vmem %s5, %s384
        %s386 = smul.u32 2, %s22
        %p388 = scmp.eq.s32.totalorder %s23, 0
        // Predicated region
        $region67: #{batch_wideresnet_forward.13} parent=61 // pred_check
          %p389 = pneg %p388
        $region68: #{batch_wideresnet_forward.13} parent=61 // pred_check_branch
          %391 = sbr.rel (%p389) target = $region70
        $region69: #{batch_wideresnet_forward.13} parent=61 // pred_region
          %392 = vst [vmem:[#allocation2] sm:$0xff] 0.0
          %393 = vst [vmem:[#allocation2 + $0x8] sm:$0xff] 0.0
        $region70: #{batch_wideresnet_forward.13} parent=61 // pred_fallthru
          _
        %v394 = vld [vmem:[%s369] sm:$0xf]
        %v395 = vld [vmem:[%s369 + $0x4] sm:$0xf]
        %v396 = vld [vmem:[%s369 + $0x8] sm:$0xf]
        %v397 = vld [vmem:[%s369 + $0xc] sm:$0xf]
        %v398 = vld [vmem:[%s369 + $0x10] sm:$0xf]
        %v399 = vld [vmem:[%s369 + $0x14] sm:$0xf]
        %v400 = vld [vmem:[%s369 + $0x18] sm:$0xf]
        %v401 = vld [vmem:[%s369 + $0x1c] sm:$0xf]
        %v402 = vld [vmem:[%s369 + $0x20] sm:$0xf]
        %v403 = vld [vmem:[%s369 + $0x24] sm:$0xf]
        %v404 = vld [vmem:[%s369 + $0x28] sm:$0xf]
        %v405 = vld [vmem:[%s369 + $0x2c] sm:$0xf]
        %v406 = vld [vmem:[%s369 + $0x30] sm:$0xf]
        %v407 = vld [vmem:[%s369 + $0x34] sm:$0xf]
        %v408 = vld [vmem:[%s369 + $0x38] sm:$0xf]
        %v409 = vld [vmem:[%s369 + $0x3c] sm:$0xf]
        %v410 = vld [vmem:[%s369 + $0x40] sm:$0xf]
        %v411 = vld [vmem:[%s369 + $0x44] sm:$0xf]
        %v412 = vld [vmem:[%s369 + $0x48] sm:$0xf]
        %v413 = vld [vmem:[%s369 + $0x4c] sm:$0xf]
        %v414 = vld [vmem:[%s369 + $0x50] sm:$0xf]
        %v415 = vld [vmem:[%s369 + $0x54] sm:$0xf]
        %v416 = vld [vmem:[%s369 + $0x58] sm:$0xf]
        %v417 = vld [vmem:[%s369 + $0x5c] sm:$0xf]
        %v418 = vld [vmem:[%s369 + $0x60] sm:$0xf]
        %v419 = vld [vmem:[%s369 + $0x64] sm:$0xf]
        %v420 = vld [vmem:[%s369 + $0x68] sm:$0xf]
        %v421 = vld [vmem:[%s369 + $0x6c] sm:$0xf]
        %v422 = vld [vmem:[%s369 + $0x70] sm:$0xf]
        %v423 = vld [vmem:[%s369 + $0x74] sm:$0xf]
        %v424 = vld [vmem:[%s369 + $0x78] sm:$0xf]
        %v425 = vld [vmem:[%s369 + $0x7c] sm:$0xf]
        %v426 = vld [vmem:[%s369 + $0x80] sm:$0xf]
        %v427 = vld [vmem:[%s369 + $0x84] sm:$0xf]
        %v428 = vld [vmem:[%s369 + $0x88] sm:$0xf]
        %v429 = vld [vmem:[%s369 + $0x8c] sm:$0xf]
        %v430 = vld [vmem:[%s369 + $0x90] sm:$0xf]
        %v431 = vld [vmem:[%s369 + $0x94] sm:$0xf]
        %v432 = vld [vmem:[%s369 + $0x98] sm:$0xf]
        %v433 = vld [vmem:[%s369 + $0x9c] sm:$0xf]
        %v434 = vld [vmem:[%s369 + $0xa0] sm:$0xf]
        %v435 = vld [vmem:[%s369 + $0xa4] sm:$0xf]
        %v436 = vld [vmem:[%s369 + $0xa8] sm:$0xf]
        %v437 = vld [vmem:[%s369 + $0xac] sm:$0xf]
        %v438 = vld [vmem:[%s369 + $0xb0] sm:$0xf]
        %v439 = vld [vmem:[%s369 + $0xb4] sm:$0xf]
        %v440 = vld [vmem:[%s369 + $0xb8] sm:$0xf]
        %v441 = vld [vmem:[%s369 + $0xbc] sm:$0xf]
        %v442 = vld [vmem:[%s363] sm:$0xff]
        %v443 = vld [vmem:[%s363 + $0x8] sm:$0xff]
        %v444 = vld [vmem:[%s363 + $0x10] sm:$0xff]
        %v445 = vld [vmem:[%s363 + $0x18] sm:$0xff]
        %v446 = vld [vmem:[%s363 + $0x20] sm:$0xff]
        %v447 = vld [vmem:[%s363 + $0x28] sm:$0xff]
        %v448 = vld [vmem:[%s363 + $0x30] sm:$0xff]
        %v449 = vld [vmem:[%s363 + $0x38] sm:$0xff]
        %v450 = vld [vmem:[%s363 + $0x40] sm:$0xff]
        %v451 = vld [vmem:[%s363 + $0x48] sm:$0xff]
        %v452 = vld [vmem:[%s363 + $0x50] sm:$0xff]
        %v453 = vld [vmem:[%s363 + $0x58] sm:$0xff]
        %v454 = vld [vmem:[%s363 + $0x60] sm:$0xff]
        %v455 = vld [vmem:[%s363 + $0x68] sm:$0xff]
        %v456 = vld [vmem:[%s363 + $0x70] sm:$0xff]
        %v457 = vld [vmem:[%s363 + $0x78] sm:$0xff]
        %v458 = vld [vmem:[%s363 + $0x80] sm:$0xff]
        %v459 = vld [vmem:[%s363 + $0x88] sm:$0xff]
        %v460 = vld [vmem:[%s363 + $0x90] sm:$0xff]
        %v461 = vld [vmem:[%s363 + $0x98] sm:$0xff]
        %v462 = vld [vmem:[%s363 + $0xa0] sm:$0xff]
        %v463 = vld [vmem:[%s363 + $0xa8] sm:$0xff]
        %v464 = vld [vmem:[%s363 + $0xb0] sm:$0xff]
        %v465 = vld [vmem:[%s363 + $0xb8] sm:$0xff]
        %v466 = vld [vmem:[%s363 + $0xc0] sm:$0xff]
        %v467 = vld [vmem:[%s363 + $0xc8] sm:$0xff]
        %v468 = vld [vmem:[%s363 + $0xd0] sm:$0xff]
        %v469 = vld [vmem:[%s363 + $0xd8] sm:$0xff]
        %v470 = vld [vmem:[%s363 + $0xe0] sm:$0xff]
        %v471 = vld [vmem:[%s363 + $0xe8] sm:$0xff]
        %v472 = vld [vmem:[%s363 + $0xf0] sm:$0xff]
        %v473 = vld [vmem:[%s363 + $0xf8] sm:$0xff]
        %v474 = vld [vmem:[%s363 + $0x100] sm:$0xff]
        %v475 = vld [vmem:[%s363 + $0x108] sm:$0xff]
        %v476 = vld [vmem:[%s363 + $0x110] sm:$0xff]
        %v477 = vld [vmem:[%s363 + $0x118] sm:$0xff]
        %v478 = vld [vmem:[%s363 + $0x120] sm:$0xff]
        %v479 = vld [vmem:[%s363 + $0x128] sm:$0xff]
        %v480 = vld [vmem:[%s363 + $0x130] sm:$0xff]
        %v481 = vld [vmem:[%s363 + $0x138] sm:$0xff]
        %v482 = vld [vmem:[%s363 + $0x140] sm:$0xff]
        %v483 = vld [vmem:[%s363 + $0x148] sm:$0xff]
        %v484 = vld [vmem:[%s363 + $0x150] sm:$0xff]
        %v485 = vld [vmem:[%s363 + $0x158] sm:$0xff]
        %v486 = vld [vmem:[%s363 + $0x160] sm:$0xff]
        %v487 = vld [vmem:[%s363 + $0x168] sm:$0xff]
        %v488 = vld [vmem:[%s363 + $0x170] sm:$0xff]
        %v489 = vld [vmem:[%s363 + $0x178] sm:$0xff]
        %v490 = vunpack.c.l.bf16 %v394
        %v491 = vunpack.c.l.bf16 %v395
        %v492 = vunpack.c.l.bf16 %v396
        %v493 = vunpack.c.l.bf16 %v397
        %v494 = vunpack.c.l.bf16 %v398
        %v495 = vunpack.c.l.bf16 %v399
        %v496 = vunpack.c.l.bf16 %v400
        %v497 = vunpack.c.l.bf16 %v401
        %v498 = vunpack.c.l.bf16 %v402
        %v499 = vunpack.c.l.bf16 %v403
        %v500 = vunpack.c.l.bf16 %v404
        %v501 = vunpack.c.l.bf16 %v405
        %v502 = vunpack.c.l.bf16 %v406
        %v503 = vunpack.c.l.bf16 %v407
        %v504 = vunpack.c.l.bf16 %v408
        %v505 = vunpack.c.l.bf16 %v409
        %v506 = vunpack.c.l.bf16 %v410
        %v507 = vunpack.c.l.bf16 %v411
        %v508 = vunpack.c.l.bf16 %v412
        %v509 = vunpack.c.l.bf16 %v413
        %v510 = vunpack.c.l.bf16 %v414
        %v511 = vunpack.c.l.bf16 %v415
        %v512 = vunpack.c.l.bf16 %v416
        %v513 = vunpack.c.l.bf16 %v417
        %v514 = vunpack.c.l.bf16 %v418
        %v515 = vunpack.c.l.bf16 %v419
        %v516 = vunpack.c.l.bf16 %v420
        %v517 = vunpack.c.l.bf16 %v421
        %v518 = vunpack.c.l.bf16 %v422
        %v519 = vunpack.c.l.bf16 %v423
        %v520 = vunpack.c.l.bf16 %v424
        %v521 = vunpack.c.l.bf16 %v425
        %v522 = vunpack.c.l.bf16 %v426
        %v523 = vunpack.c.l.bf16 %v427
        %v524 = vunpack.c.l.bf16 %v428
        %v525 = vunpack.c.l.bf16 %v429
        %v526 = vunpack.c.l.bf16 %v430
        %v527 = vunpack.c.l.bf16 %v431
        %v528 = vunpack.c.l.bf16 %v432
        %v529 = vunpack.c.l.bf16 %v433
        %v530 = vunpack.c.l.bf16 %v434
        %v531 = vunpack.c.l.bf16 %v435
        %v532 = vunpack.c.l.bf16 %v436
        %v533 = vunpack.c.l.bf16 %v437
        %v534 = vunpack.c.l.bf16 %v438
        %v535 = vunpack.c.l.bf16 %v439
        %v536 = vunpack.c.l.bf16 %v440
        %v537 = vunpack.c.l.bf16 %v441
        %539 = vset.pattern.permute.xlu0 0
        %540 = vperm.xlu0 %539, %v442
        %v541 = vpop.permute.xlu0 %540
        %544 = vset.pattern.permute.xlu0 0
        %545 = vperm.xlu0 %544, %v443
        %v546 = vpop.permute.xlu0 %545
        %549 = vset.pattern.permute.xlu0 0
        %550 = vperm.xlu0 %549, %v444
        %v551 = vpop.permute.xlu0 %550
        %554 = vset.pattern.permute.xlu0 0
        %555 = vperm.xlu0 %554, %v445
        %v556 = vpop.permute.xlu0 %555
        %559 = vset.pattern.permute.xlu0 0
        %560 = vperm.xlu0 %559, %v446
        %v561 = vpop.permute.xlu0 %560
        %564 = vset.pattern.permute.xlu0 0
        %565 = vperm.xlu0 %564, %v447
        %v566 = vpop.permute.xlu0 %565
        %569 = vset.pattern.permute.xlu0 0
        %570 = vperm.xlu0 %569, %v448
        %v571 = vpop.permute.xlu0 %570
        %574 = vset.pattern.permute.xlu0 0
        %575 = vperm.xlu0 %574, %v449
        %v576 = vpop.permute.xlu0 %575
        %579 = vset.pattern.permute.xlu0 0
        %580 = vperm.xlu0 %579, %v450
        %v581 = vpop.permute.xlu0 %580
        %584 = vset.pattern.permute.xlu0 0
        %585 = vperm.xlu0 %584, %v451
        %v586 = vpop.permute.xlu0 %585
        %589 = vset.pattern.permute.xlu0 0
        %590 = vperm.xlu0 %589, %v452
        %v591 = vpop.permute.xlu0 %590
        %594 = vset.pattern.permute.xlu0 0
        %595 = vperm.xlu0 %594, %v453
        %v596 = vpop.permute.xlu0 %595
        %599 = vset.pattern.permute.xlu0 0
        %600 = vperm.xlu0 %599, %v454
        %v601 = vpop.permute.xlu0 %600
        %604 = vset.pattern.permute.xlu0 0
        %605 = vperm.xlu0 %604, %v455
        %v606 = vpop.permute.xlu0 %605
        %609 = vset.pattern.permute.xlu0 0
        %610 = vperm.xlu0 %609, %v456
        %v611 = vpop.permute.xlu0 %610
        %614 = vset.pattern.permute.xlu0 0
        %615 = vperm.xlu0 %614, %v457
        %v616 = vpop.permute.xlu0 %615
        %619 = vset.pattern.permute.xlu0 0
        %620 = vperm.xlu0 %619, %v458
        %v621 = vpop.permute.xlu0 %620
        %624 = vset.pattern.permute.xlu0 0
        %625 = vperm.xlu0 %624, %v459
        %v626 = vpop.permute.xlu0 %625
        %629 = vset.pattern.permute.xlu0 0
        %630 = vperm.xlu0 %629, %v460
        %v631 = vpop.permute.xlu0 %630
        %634 = vset.pattern.permute.xlu0 0
        %635 = vperm.xlu0 %634, %v461
        %v636 = vpop.permute.xlu0 %635
        %639 = vset.pattern.permute.xlu0 0
        %640 = vperm.xlu0 %639, %v462
        %v641 = vpop.permute.xlu0 %640
        %644 = vset.pattern.permute.xlu0 0
        %645 = vperm.xlu0 %644, %v463
        %v646 = vpop.permute.xlu0 %645
        %649 = vset.pattern.permute.xlu0 0
        %650 = vperm.xlu0 %649, %v464
        %v651 = vpop.permute.xlu0 %650
        %654 = vset.pattern.permute.xlu0 0
        %655 = vperm.xlu0 %654, %v465
        %v656 = vpop.permute.xlu0 %655
        %659 = vset.pattern.permute.xlu0 0
        %660 = vperm.xlu0 %659, %v466
        %v661 = vpop.permute.xlu0 %660
        %664 = vset.pattern.permute.xlu0 0
        %665 = vperm.xlu0 %664, %v467
        %v666 = vpop.permute.xlu0 %665
        %669 = vset.pattern.permute.xlu0 0
        %670 = vperm.xlu0 %669, %v468
        %v671 = vpop.permute.xlu0 %670
        %674 = vset.pattern.permute.xlu0 0
        %675 = vperm.xlu0 %674, %v469
        %v676 = vpop.permute.xlu0 %675
        %679 = vset.pattern.permute.xlu0 0
        %680 = vperm.xlu0 %679, %v470
        %v681 = vpop.permute.xlu0 %680
        %684 = vset.pattern.permute.xlu0 0
        %685 = vperm.xlu0 %684, %v471
        %v686 = vpop.permute.xlu0 %685
        %689 = vset.pattern.permute.xlu0 0
        %690 = vperm.xlu0 %689, %v472
        %v691 = vpop.permute.xlu0 %690
        %694 = vset.pattern.permute.xlu0 0
        %695 = vperm.xlu0 %694, %v473
        %v696 = vpop.permute.xlu0 %695
        %699 = vset.pattern.permute.xlu0 0
        %700 = vperm.xlu0 %699, %v474
        %v701 = vpop.permute.xlu0 %700
        %704 = vset.pattern.permute.xlu0 0
        %705 = vperm.xlu0 %704, %v475
        %v706 = vpop.permute.xlu0 %705
        %709 = vset.pattern.permute.xlu0 0
        %710 = vperm.xlu0 %709, %v476
        %v711 = vpop.permute.xlu0 %710
        %714 = vset.pattern.permute.xlu0 0
        %715 = vperm.xlu0 %714, %v477
        %v716 = vpop.permute.xlu0 %715
        %719 = vset.pattern.permute.xlu0 0
        %720 = vperm.xlu0 %719, %v478
        %v721 = vpop.permute.xlu0 %720
        %724 = vset.pattern.permute.xlu0 0
        %725 = vperm.xlu0 %724, %v479
        %v726 = vpop.permute.xlu0 %725
        %729 = vset.pattern.permute.xlu0 0
        %730 = vperm.xlu0 %729, %v480
        %v731 = vpop.permute.xlu0 %730
        %734 = vset.pattern.permute.xlu0 0
        %735 = vperm.xlu0 %734, %v481
        %v736 = vpop.permute.xlu0 %735
        %739 = vset.pattern.permute.xlu0 0
        %740 = vperm.xlu0 %739, %v482
        %v741 = vpop.permute.xlu0 %740
        %744 = vset.pattern.permute.xlu0 0
        %745 = vperm.xlu0 %744, %v483
        %v746 = vpop.permute.xlu0 %745
        %749 = vset.pattern.permute.xlu0 0
        %750 = vperm.xlu0 %749, %v484
        %v751 = vpop.permute.xlu0 %750
        %754 = vset.pattern.permute.xlu0 0
        %755 = vperm.xlu0 %754, %v485
        %v756 = vpop.permute.xlu0 %755
        %759 = vset.pattern.permute.xlu0 0
        %760 = vperm.xlu0 %759, %v486
        %v761 = vpop.permute.xlu0 %760
        %764 = vset.pattern.permute.xlu0 0
        %765 = vperm.xlu0 %764, %v487
        %v766 = vpop.permute.xlu0 %765
        %769 = vset.pattern.permute.xlu0 0
        %770 = vperm.xlu0 %769, %v488
        %v771 = vpop.permute.xlu0 %770
        %774 = vset.pattern.permute.xlu0 0
        %775 = vperm.xlu0 %774, %v489
        %v776 = vpop.permute.xlu0 %775
        %v778 = vmul.f32 %v490, %v541
        %v779 = vmul.f32 %v491, %v546
        %v780 = vmul.f32 %v492, %v551
        %v781 = vmul.f32 %v493, %v556
        %v782 = vmul.f32 %v494, %v561
        %v783 = vmul.f32 %v495, %v566
        %v784 = vmul.f32 %v496, %v571
        %v785 = vmul.f32 %v497, %v576
        %v786 = vmul.f32 %v498, %v581
        %v787 = vmul.f32 %v499, %v586
        %v788 = vmul.f32 %v500, %v591
        %v789 = vmul.f32 %v501, %v596
        %v790 = vmul.f32 %v502, %v601
        %v791 = vmul.f32 %v503, %v606
        %v792 = vmul.f32 %v504, %v611
        %v793 = vmul.f32 %v505, %v616
        %v794 = vmul.f32 %v506, %v621
        %v795 = vmul.f32 %v507, %v626
        %v796 = vmul.f32 %v508, %v631
        %v797 = vmul.f32 %v509, %v636
        %v798 = vmul.f32 %v510, %v641
        %v799 = vmul.f32 %v511, %v646
        %v800 = vmul.f32 %v512, %v651
        %v801 = vmul.f32 %v513, %v656
        %v802 = vmul.f32 %v514, %v661
        %v803 = vmul.f32 %v515, %v666
        %v804 = vmul.f32 %v516, %v671
        %v805 = vmul.f32 %v517, %v676
        %v806 = vmul.f32 %v518, %v681
        %v807 = vmul.f32 %v519, %v686
        %v808 = vmul.f32 %v520, %v691
        %v809 = vmul.f32 %v521, %v696
        %v810 = vmul.f32 %v522, %v701
        %v811 = vmul.f32 %v523, %v706
        %v812 = vmul.f32 %v524, %v711
        %v813 = vmul.f32 %v525, %v716
        %v814 = vmul.f32 %v526, %v721
        %v815 = vmul.f32 %v527, %v726
        %v816 = vmul.f32 %v528, %v731
        %v817 = vmul.f32 %v529, %v736
        %v818 = vmul.f32 %v530, %v741
        %v819 = vmul.f32 %v531, %v746
        %v820 = vmul.f32 %v532, %v751
        %v821 = vmul.f32 %v533, %v756
        %v822 = vmul.f32 %v534, %v761
        %v823 = vmul.f32 %v535, %v766
        %v824 = vmul.f32 %v536, %v771
        %v825 = vmul.f32 %v537, %v776
        %v826 = vpack.c.bf16 %v779, %v778
        %v827 = vpack.c.bf16 %v781, %v780
        %v828 = vpack.c.bf16 %v783, %v782
        %v829 = vpack.c.bf16 %v785, %v784
        %v830 = vpack.c.bf16 %v787, %v786
        %v831 = vpack.c.bf16 %v789, %v788
        %v832 = vpack.c.bf16 %v791, %v790
        %v833 = vpack.c.bf16 %v793, %v792
        %v834 = vpack.c.bf16 %v795, %v794
        %v835 = vpack.c.bf16 %v797, %v796
        %v836 = vpack.c.bf16 %v799, %v798
        %v837 = vpack.c.bf16 %v801, %v800
        %v838 = vpack.c.bf16 %v803, %v802
        %v839 = vpack.c.bf16 %v805, %v804
        %v840 = vpack.c.bf16 %v807, %v806
        %v841 = vpack.c.bf16 %v809, %v808
        %v842 = vpack.c.bf16 %v811, %v810
        %v843 = vpack.c.bf16 %v813, %v812
        %v844 = vpack.c.bf16 %v815, %v814
        %v845 = vpack.c.bf16 %v817, %v816
        %v846 = vpack.c.bf16 %v819, %v818
        %v847 = vpack.c.bf16 %v821, %v820
        %v848 = vpack.c.bf16 %v823, %v822
        %v849 = vpack.c.bf16 %v825, %v824
        %v850 = vld [vmem:[#allocation2] sm:$0xff]
        %v851 = vld [vmem:[#allocation2 + $0x8] sm:$0xff]
        %v852 = vld [vmem:[%s304] sm:$0xff]
        %v853 = vld [vmem:[%s304 + $0x8] sm:$0xf]
        %v854 = vld [vmem:[%s304 + $0xc] sm:$0xff]
        %v855 = vld [vmem:[%s304 + $0x14] sm:$0xf]
        %v860 = vunpack.c.l.b16 %v852
        %v861 = vunpack.c.h.b16 %v852
        %v862 = vunpack.c.l.b16 %v853
        %v863 = vunpack.c.l.b16 %v854
        %v864 = vunpack.c.h.b16 %v854
        %v865 = vunpack.c.l.b16 %v855
        %v866 = vpack.c.b16 %v863, %v860
        %v867 = vpack.c.b16 %v864, %v861
        %v868 = vpack.c.b16 %v865, %v862
        %872 = vmatprep.subr.bf16.mxu0 0
        %873 = vmatpush1.bf16.msra.mxu0 %v826
        %874 = vmatprep.subr.bf16.mxu0 0
        %875 = vmatpush1.bf16.msra.mxu0 %v827
        %876 = vmatprep.subr.bf16.mxu0 0
        %877 = vmatpush1.bf16.msra.mxu0 %v828
        %878 = vmatprep.subr.bf16.mxu0 0
        %879 = vmatpush1.bf16.msra.mxu0 %v829
        %880 = vmatprep.subr.bf16.mxu0 0
        %881 = vmatpush1.bf16.msra.mxu0 %v830
        %882 = vmatprep.subr.bf16.mxu0 0
        %883 = vmatpush1.bf16.msra.mxu0 %v831
        %884 = vmatprep.subr.bf16.mxu0 0
        %885 = vmatpush1.bf16.msra.mxu0 %v832
        %886 = vmatprep.subr.bf16.mxu0 0
        %887 = vmatpush1.bf16.msra.mxu0 %v833
        %888 = vmatprep.subr.bf16.mxu0 0
        %889 = vmatpush1.bf16.msra.mxu0 %v834
        %890 = vmatprep.subr.bf16.mxu0 0
        %891 = vmatpush1.bf16.msra.mxu0 %v835
        %892 = vmatprep.subr.bf16.mxu0 0
        %893 = vmatpush1.bf16.msra.mxu0 %v836
        %894 = vmatprep.subr.bf16.mxu0 0
        %895 = vmatpush1.bf16.msra.mxu0 %v837
        %896 = vmatprep.subr.bf16.mxu0 0
        %897 = vmatpush1.bf16.msra.mxu0 %v838
        %898 = vmatprep.subr.bf16.mxu0 0
        %899 = vmatpush1.bf16.msra.mxu0 %v839
        %900 = vmatprep.subr.bf16.mxu0 0
        %901 = vmatpush1.bf16.msra.mxu0 %v840
        %902 = vmatprep.subr.bf16.mxu0 0
        %903 = vmatpush1.bf16.msra.mxu0 %v841
        %904 = vmatprep.mubr.bf16.mxu0 %v867
        %905 = vmatmul.mubr.bf16.gmra.mrb[0].mxu0 %v866
        %v906 = vpop.f32.mrb[0].mxu0
        %v907 = vadd.f32 0.0, %v906
        %v908 = vpop.f32.mrb[0].mxu0
        %v909 = vpop.f32.mrb[0].mxu0
        %v910 = vadd.f32 0.0, %v909
        %v911 = vpop.f32.mrb[0].mxu0
        %912 = vdwg.mxu0
        %913 = vmatprep.subr.bf16.mxu0 0
        %914 = vmatpush1.bf16.msra.mxu0 %v842
        %915 = vmatprep.subr.bf16.mxu0 0
        %916 = vmatpush1.bf16.msra.mxu0 %v843
        %917 = vmatprep.subr.bf16.mxu0 0
        %918 = vmatpush1.bf16.msra.mxu0 %v844
        %919 = vmatprep.subr.bf16.mxu0 0
        %920 = vmatpush1.bf16.msra.mxu0 %v845
        %921 = vmatprep.subr.bf16.mxu0 0
        %922 = vmatpush1.bf16.msra.mxu0 %v846
        %923 = vmatprep.subr.bf16.mxu0 0
        %924 = vmatpush1.bf16.msra.mxu0 %v847
        %925 = vmatprep.subr.bf16.mxu0 0
        %926 = vmatpush1.bf16.msra.mxu0 %v848
        %927 = vmatprep.subr.bf16.mxu0 0
        %928 = vmatpush1.bf16.msra.mxu0 %v849
        %929 = vmatprep.subr.bf16.mxu0 0
        %930 = vmatpush1.bf16.msra.mxu0 0
        %931 = vmatprep.subr.bf16.mxu0 0
        %932 = vmatpush1.bf16.msra.mxu0 0
        %933 = vmatprep.subr.bf16.mxu0 0
        %934 = vmatpush1.bf16.msra.mxu0 0
        %935 = vmatprep.subr.bf16.mxu0 0
        %936 = vmatpush1.bf16.msra.mxu0 0
        %937 = vmatprep.subr.bf16.mxu0 0
        %938 = vmatpush1.bf16.msra.mxu0 0
        %939 = vmatprep.subr.bf16.mxu0 0
        %940 = vmatpush1.bf16.msra.mxu0 0
        %941 = vmatprep.subr.bf16.mxu0 0
        %942 = vmatpush1.bf16.msra.mxu0 0
        %943 = vmatprep.subr.bf16.mxu0 0
        %944 = vmatpush1.bf16.msra.mxu0 0
        %945 = vmatprep.mubr.bf16.mxu0 0
        %946 = vmatmul.mubr.bf16.gmra.mrb[0].mxu0 %v868
        %v947 = vpop.f32.mrb[0].mxu0
        %v948 = vadd.f32 %v907, %v947
        %v949 = vpop.f32.mrb[0].mxu0
        %v950 = vpop.f32.mrb[0].mxu0
        %v951 = vadd.f32 %v910, %v950
        %v952 = vpop.f32.mrb[0].mxu0
        %953 = vdwg.mxu0
        %v954 = vadd.f32 %v850, %v948
        %v955 = vadd.f32 %v851, %v951
        %956 = vst [vmem:[#allocation2] sm:$0xff] %v954
        %957 = vst [vmem:[#allocation2 + $0x8] sm:$0xff] %v955
        %p958 = scmp.eq.s32.totalorder %s23, 2
        // Predicated region
        $region71: #{batch_wideresnet_forward.13} parent=61 // pred_check
          %p959 = pneg %p958
        $region72: #{batch_wideresnet_forward.13} parent=61 // pred_check_branch
          %961 = sbr.rel (%p959) target = $region74
        $region73: #{batch_wideresnet_forward.13} parent=61 // pred_region
          %v962 = vld [vmem:[#allocation2] sm:$0xff]
          %v963 = vld [vmem:[#allocation2 + $0x8] sm:$0xff]
          %v964 = vld [vmem:[%s373] sm:$0x1]
          %v966 = vlaneseq
          %v967 = vshrl.u32 %v966, 7
          %v968 = vsub.s32 0, %v967
          %v969 = vrot.slane %v964, %v968
          %v971 = vmul.f32 %v962, %v969
          %v972 = vmul.f32 %v963, %v969
          %v973 = vld [vmem:[%s376] sm:$0x1]
          %v975 = vlaneseq
          %v976 = vshrl.u32 %v975, 7
          %v977 = vsub.s32 0, %v976
          %v978 = vrot.slane %v973, %v977
          %v980 = vadd.f32 %v971, %v978
          %v981 = vadd.f32 %v972, %v978
          %v982 = vmax.f32 %v980, 0.0
          %v983 = vmax.f32 %v981, 0.0
          %v984 = vpack.c.bf16 %v983, %v982
          %v986 = vunpack.c.l.b16 %v984
          %v987 = vunpack.c.h.b16 %v984
          %v988 = vpack.c.b16 %v986, %v986
          %v989 = vpack.c.b16 %v987, %v987
          %992 = vst [vmem:[%s385] sm:$0xf] %v988
          %993 = vst [vmem:[%s385 + $0x4] sm:$0xf] %v989
        $region74: #{batch_wideresnet_forward.13} parent=61 // pred_fallthru
          _
        %s994 = smul.u32 2, %s22
        %p995 = scmp.lt.s32.totalorder %s21, 3
        %s996 = scalar_select %p995, %s21, 3
        %p997 = scmp.lt.s32.totalorder %s994, 1
        %s998 = scalar_select %p997, %s994, 1
        %s999 = smul.addr %s996, 2
        %s1000 = sadd.s32 %s998, %s999
        %s1001 = smul.addr %s1000, 4
        %s1002 = scalar_lea.vmem %s5, %s1001
        // Predicated region
        $region75: #{batch_wideresnet_forward.13} parent=61 // pred_check
          %p1003 = pneg %p191
        $region76: #{batch_wideresnet_forward.13} parent=61 // pred_check_branch
          %1005 = sbr.rel (%p1003) target = $region78
        $region77: #{batch_wideresnet_forward.13} parent=61 // pred_region
          %s1006 = smul.u32 2, %s22
        $region78: #{batch_wideresnet_forward.13} parent=61 // pred_fallthru
          _
      $region62: #{batch_wideresnet_forward.13} parent=5 // pred_fallthru
        _
      %p1007 = scmp.le.s32.totalorder 2, %s11
      // Predicated region
      $region79: #{batch_wideresnet_forward.13} parent=5 // pred_check
        %p1008 = pneg %p1007
      $region80: #{batch_wideresnet_forward.13} parent=5 // pred_check_branch
        %1010 = sbr.rel (%p1008) target = $region82
      $region81: #{batch_wideresnet_forward.13} parent=5 // pred_region
        %s1011 = ssub.s32 %s11, 2
        // Predicated region
        $region83: #{batch_wideresnet_forward.13} parent=81 // pred_check
          %p1012 = pneg %p197
        $region84: #{batch_wideresnet_forward.13} parent=81 // pred_check_branch
          %1014 = sbr.rel (%p1012) target = $region86
        $region85: #{batch_wideresnet_forward.13} parent=81 // pred_region
          %s1015 = smul.u32 2, %s25
          %p1016 = scmp.lt.s32.totalorder %s24, 3
          %s1017 = scalar_select %p1016, %s24, 3
          %p1018 = scmp.lt.s32.totalorder %s1015, 1
          %s1019 = scalar_select %p1018, %s1015, 1
          %s1020 = smul.addr %s1017, 2
          %s1021 = sadd.s32 %s1019, %s1020
          %s1022 = smul.addr %s1021, 4
          %s1023 = scalar_lea.vmem %s5, %s1022
        $region86: #{batch_wideresnet_forward.13} parent=81 // pred_fallthru
          _
      $region82: #{batch_wideresnet_forward.13} parent=5 // pred_fallthru
        _
    $region6: #{batch_wideresnet_forward.13} parent=1 // loop_footer
      %s15 = sadd.s32 1, %s11
    $region7: #{batch_wideresnet_forward.13} parent=1 // loop_footer_branch
      %10 = sbr.rel target = $region3
    $region8: #{batch_wideresnet_forward.13} parent=1 // loop_exit
      _

// kernel: batch_wideresnet_forward.14
$region0: #{batch_wideresnet_forward.14}
  #allocation0 [shape = 'u32[]', space=smem, size = 0x4, offset = 0x4, fixed_abs, tag = 'smem constant byte address 0x4 - core index']
  #allocation1 [shape = 'u32[144,128]{1,0:T(1,128)}', space=vmem, size = 0x12000, scoped, tag = 'internal scratch']
  #allocation2 [shape = 'f32[16,128]{1,0:T(8,128)}', space=vmem, size = 0x2000, scoped, tag = 'scratch operand']
  %s0 = inlined_call_operand.vmem [shape: bf16[4,16,1152], index: 0, kind: input, shape index: {}]
  %s1 = inlined_call_operand.vmem [shape: f32[4,1152,1], index: 1, kind: input, shape index: {}]
  %s2 = inlined_call_operand.vmem [shape: bf16[1152,128], index: 2, kind: input, shape index: {}]
  %s3 = inlined_call_operand.vmem [shape: f32[4,1,128], index: 3, kind: input, shape index: {}]
  %s4 = inlined_call_operand.vmem [shape: f32[4,1,128], index: 4, kind: input, shape index: {}]
  %s5 = inlined_call_operand.vmem [shape: bf16[4,16,128], index: 5, kind: input, shape index: {}]
  %s6 = inlined_call_operand.vmem [shape: f32[1,1,128], index: 6, kind: input, shape index: {}]
  %s7 = inlined_call_operand.vmem [shape: f32[1,1,128], index: 7, kind: input, shape index: {}]
  %s8 = inlined_call_operand.vmem [shape: bf16[4,16,128], index: 8, kind: output, shape index: {}]
  %s9 = sld [smem:[#allocation0]]
  $region99: #{batch_wideresnet_forward.14} parent=0
    _
  %s11 = ssub.s32 1, %s9
  %s12 = scalar_select 0, %s11, %s9
  $region1: #{batch_wideresnet_forward.14} parent=0
    #allocation3 [shape = 'u8[24576]{0}', space=vmem, size = 0x6000, scoped, tag = 'input window, operand 0']
    loop: start=0, step=1, limit=14
    $region2: #{batch_wideresnet_forward.14} parent=1 // loop_pre_header
      _
    $region3: #{batch_wideresnet_forward.14} parent=1 // loop_header
      %s14 = sphi 0, %s18
      %p15 = scmp.ge.s32.totalorder %s14, 14
      %s21 = sphi 0, %s40
      %s22 = sphi 0, %s36
      %s23 = sphi 0, %s32
      %s24 = sphi 0, %s21
      %s25 = sphi 0, %s22
      %s26 = sphi 0, %s23
      %s27 = sphi 0, %s24
      %s28 = sphi 0, %s25
      %s29 = sphi 0, %s26
      %s47 = sphi 0, %s49
      %s50 = sphi 0, %s47
      %s51 = sphi 0, %s50
      %s67 = sphi 0, %s51
      %s75 = sphi 0, %s77
      %s78 = sphi 0, %s75
      %s79 = sphi 0, %s78
      %s95 = sphi 0, %s79
      %s101 = sphi 0, %s103
      %s104 = sphi 0, %s101
      %s105 = sphi 0, %s104
      %s121 = sphi 0, %s105
      %s127 = sphi 0, %s129
      %s130 = sphi 0, %s127
      %s131 = sphi 0, %s130
      %s147 = sphi 0, %s131
      %s153 = sphi 0, %s155
      %s156 = sphi 0, %s153
      %s157 = sphi 0, %s156
      %s173 = sphi 0, %s157
      %s181 = sphi 0, %s183
      %s184 = sphi 0, %s181
      %s185 = sphi 0, %s184
      %s201 = sphi 0, %s185
      %s205 = sphi 0, %s205
      %s207 = sphi 0, %s205
      %s208 = sphi 0, %s207
      %s222 = sphi 0, %s208
      %s226 = sphi 0, %s226
      %s228 = sphi 0, %s226
      %s229 = sphi 0, %s228
      %s243 = sphi 0, %s229
      %s251 = sphi 0, %s253
      %s254 = sphi 0, %s251
      %s255 = sphi 0, %s254
      %s271 = sphi 0, %s255
    $region4: #{batch_wideresnet_forward.14} parent=1 // loop_header_branch
      %17 = sbr.rel (%p15) target = $region8
    $region5: #{batch_wideresnet_forward.14} parent=1 // loop_body
      %s19 = ssub.s32 %s14, 1
      %s20 = ssub.s32 %s14, 2
      %s30 = sadd.s32 1, %s23
      %p31 = scmp.ge.s32.totalorder %s30, 3
      %s32 = scalar_select %p31, 0, %s30
      %s33 = sadd.s32 1, %s22
      %s34 = scalar_select %p31, %s33, %s22
      %p35 = scmp.ge.s32.totalorder %s34, 1
      %s36 = scalar_select %p35, 0, %s34
      %s37 = sadd.s32 1, %s21
      %s38 = scalar_select %p35, %s37, %s21
      %p39 = scmp.ge.s32.totalorder %s38, 4
      %s40 = scalar_select %p39, 0, %s38
      %s41 = ssub.s32 %s21, %s40
      %s42 = ssub.s32 %s22, %s36
      %s43 = sor.u32 %s41, %s42
      %s44 = ssub.s32 %s23, %s32
      %s45 = sor.u32 %s43, %s44
      %p46 = scmp.eq.s32.totalorder %s45, 0
      %s48 = sadd.s32 %s47, 1
      %s49 = scalar_select %p46, %s47, %s48
      %p52 = pneg %p46
      %p53 = scmp.eq.s32.totalorder %s14, 11
      %p54 = por %p52, %p53
      %p55 = scmp.ne.s32.totalorder %s47, %s50
      %p56 = scmp.eq.s32.totalorder %s14, 0
      %p57 = por %p55, %p56
      %p58 = scmp.ne.s32.totalorder %s47, %s50
      %p59 = scmp.eq.s32.totalorder %s19, 11
      %p60 = por %p58, %p59
      %p61 = scmp.ne.s32.totalorder %s50, %s51
      %p62 = scmp.eq.s32.totalorder %s19, 0
      %p63 = por %p61, %p62
      %p64 = scmp.ne.s32.totalorder %s50, %s51
      %p65 = scmp.eq.s32.totalorder %s20, 11
      %p66 = por %p64, %p65
      %p68 = scmp.ne.s32.totalorder %s51, %s67
      %p69 = scmp.eq.s32.totalorder %s20, 0
      %p70 = por %p68, %p69
      %s71 = ssub.s32 %s21, %s40
      %s72 = ssub.s32 %s23, %s32
      %s73 = sor.u32 %s71, %s72
      %p74 = scmp.eq.s32.totalorder %s73, 0
      %s76 = sadd.s32 %s75, 1
      %s77 = scalar_select %p74, %s75, %s76
      %p80 = pneg %p74
      %p81 = scmp.eq.s32.totalorder %s14, 11
      %p82 = por %p80, %p81
      %p83 = scmp.ne.s32.totalorder %s75, %s78
      %p84 = scmp.eq.s32.totalorder %s14, 0
      %p85 = por %p83, %p84
      %p86 = scmp.ne.s32.totalorder %s75, %s78
      %p87 = scmp.eq.s32.totalorder %s19, 11
      %p88 = por %p86, %p87
      %p89 = scmp.ne.s32.totalorder %s78, %s79
      %p90 = scmp.eq.s32.totalorder %s19, 0
      %p91 = por %p89, %p90
      %p92 = scmp.ne.s32.totalorder %s78, %s79
      %p93 = scmp.eq.s32.totalorder %s20, 11
      %p94 = por %p92, %p93
      %p96 = scmp.ne.s32.totalorder %s79, %s95
      %p97 = scmp.eq.s32.totalorder %s20, 0
      %p98 = por %p96, %p97
      %s99 = ssub.s32 %s23, %s32
      %p100 = scmp.eq.s32.totalorder %s99, 0
      %s102 = sadd.s32 %s101, 1
      %s103 = scalar_select %p100, %s101, %s102
      %p106 = pneg %p100
      %p107 = scmp.eq.s32.totalorder %s14, 11
      %p108 = por %p106, %p107
      %p109 = scmp.ne.s32.totalorder %s101, %s104
      %p110 = scmp.eq.s32.totalorder %s14, 0
      %p111 = por %p109, %p110
      %p112 = scmp.ne.s32.totalorder %s101, %s104
      %p113 = scmp.eq.s32.totalorder %s19, 11
      %p114 = por %p112, %p113
      %p115 = scmp.ne.s32.totalorder %s104, %s105
      %p116 = scmp.eq.s32.totalorder %s19, 0
      %p117 = por %p115, %p116
      %p118 = scmp.ne.s32.totalorder %s104, %s105
      %p119 = scmp.eq.s32.totalorder %s20, 11
      %p120 = por %p118, %p119
      %p122 = scmp.ne.s32.totalorder %s105, %s121
      %p123 = scmp.eq.s32.totalorder %s20, 0
      %p124 = por %p122, %p123
      %s125 = ssub.s32 %s21, %s40
      %p126 = scmp.eq.s32.totalorder %s125, 0
      %s128 = sadd.s32 %s127, 1
      %s129 = scalar_select %p126, %s127, %s128
      %p132 = pneg %p126
      %p133 = scmp.eq.s32.totalorder %s14, 11
      %p134 = por %p132, %p133
      %p135 = scmp.ne.s32.totalorder %s127, %s130
      %p136 = scmp.eq.s32.totalorder %s14, 0
      %p137 = por %p135, %p136
      %p138 = scmp.ne.s32.totalorder %s127, %s130
      %p139 = scmp.eq.s32.totalorder %s19, 11
      %p140 = por %p138, %p139
      %p141 = scmp.ne.s32.totalorder %s130, %s131
      %p142 = scmp.eq.s32.totalorder %s19, 0
      %p143 = por %p141, %p142
      %p144 = scmp.ne.s32.totalorder %s130, %s131
      %p145 = scmp.eq.s32.totalorder %s20, 11
      %p146 = por %p144, %p145
      %p148 = scmp.ne.s32.totalorder %s131, %s147
      %p149 = scmp.eq.s32.totalorder %s20, 0
      %p150 = por %p148, %p149
      %s151 = ssub.s32 %s21, %s40
      %p152 = scmp.eq.s32.totalorder %s151, 0
      %s154 = sadd.s32 %s153, 1
      %s155 = scalar_select %p152, %s153, %s154
      %p158 = pneg %p152
      %p159 = scmp.eq.s32.totalorder %s14, 11
      %p160 = por %p158, %p159
      %p161 = scmp.ne.s32.totalorder %s153, %s156
      %p162 = scmp.eq.s32.totalorder %s14, 0
      %p163 = por %p161, %p162
      %p164 = scmp.ne.s32.totalorder %s153, %s156
      %p165 = scmp.eq.s32.totalorder %s19, 11
      %p166 = por %p164, %p165
      %p167 = scmp.ne.s32.totalorder %s156, %s157
      %p168 = scmp.eq.s32.totalorder %s19, 0
      %p169 = por %p167, %p168
      %p170 = scmp.ne.s32.totalorder %s156, %s157
      %p171 = scmp.eq.s32.totalorder %s20, 11
      %p172 = por %p170, %p171
      %p174 = scmp.ne.s32.totalorder %s157, %s173
      %p175 = scmp.eq.s32.totalorder %s20, 0
      %p176 = por %p174, %p175
      %s177 = ssub.s32 %s21, %s40
      %s178 = ssub.s32 %s22, %s36
      %s179 = sor.u32 %s177, %s178
      %p180 = scmp.eq.s32.totalorder %s179, 0
      %s182 = sadd.s32 %s181, 1
      %s183 = scalar_select %p180, %s181, %s182
      %p186 = pneg %p180
      %p187 = scmp.eq.s32.totalorder %s14, 11
      %p188 = por %p186, %p187
      %p189 = scmp.ne.s32.totalorder %s181, %s184
      %p190 = scmp.eq.s32.totalorder %s14, 0
      %p191 = por %p189, %p190
      %p192 = scmp.ne.s32.totalorder %s181, %s184
      %p193 = scmp.eq.s32.totalorder %s19, 11
      %p194 = por %p192, %p193
      %p195 = scmp.ne.s32.totalorder %s184, %s185
      %p196 = scmp.eq.s32.totalorder %s19, 0
      %p197 = por %p195, %p196
      %p198 = scmp.ne.s32.totalorder %s184, %s185
      %p199 = scmp.eq.s32.totalorder %s20, 11
      %p200 = por %p198, %p199
      %p202 = scmp.ne.s32.totalorder %s185, %s201
      %p203 = scmp.eq.s32.totalorder %s20, 0
      %p204 = por %p202, %p203
      %s206 = sadd.s32 %s205, 1
      %p209 = scmp.eq.s32.totalorder %s14, 11
      %p210 = scmp.ne.s32.totalorder %s205, %s207
      %p211 = scmp.eq.s32.totalorder %s14, 0
      %p212 = por %p210, %p211
      %p213 = scmp.ne.s32.totalorder %s205, %s207
      %p214 = scmp.eq.s32.totalorder %s19, 11
      %p215 = por %p213, %p214
      %p216 = scmp.ne.s32.totalorder %s207, %s208
      %p217 = scmp.eq.s32.totalorder %s19, 0
      %p218 = por %p216, %p217
      %p219 = scmp.ne.s32.totalorder %s207, %s208
      %p220 = scmp.eq.s32.totalorder %s20, 11
      %p221 = por %p219, %p220
      %p223 = scmp.ne.s32.totalorder %s208, %s222
      %p224 = scmp.eq.s32.totalorder %s20, 0
      %p225 = por %p223, %p224
      %s227 = sadd.s32 %s226, 1
      %p230 = scmp.eq.s32.totalorder %s14, 11
      %p231 = scmp.ne.s32.totalorder %s226, %s228
      %p232 = scmp.eq.s32.totalorder %s14, 0
      %p233 = por %p231, %p232
      %p234 = scmp.ne.s32.totalorder %s226, %s228
      %p235 = scmp.eq.s32.totalorder %s19, 11
      %p236 = por %p234, %p235
      %p237 = scmp.ne.s32.totalorder %s228, %s229
      %p238 = scmp.eq.s32.totalorder %s19, 0
      %p239 = por %p237, %p238
      %p240 = scmp.ne.s32.totalorder %s228, %s229
      %p241 = scmp.eq.s32.totalorder %s20, 11
      %p242 = por %p240, %p241
      %p244 = scmp.ne.s32.totalorder %s229, %s243
      %p245 = scmp.eq.s32.totalorder %s20, 0
      %p246 = por %p244, %p245
      %s247 = ssub.s32 %s21, %s40
      %s248 = ssub.s32 %s22, %s36
      %s249 = sor.u32 %s247, %s248
      %p250 = scmp.eq.s32.totalorder %s249, 0
      %s252 = sadd.s32 %s251, 1
      %s253 = scalar_select %p250, %s251, %s252
      %p256 = pneg %p250
      %p257 = scmp.eq.s32.totalorder %s14, 11
      %p258 = por %p256, %p257
      %p259 = scmp.ne.s32.totalorder %s251, %s254
      %p260 = scmp.eq.s32.totalorder %s14, 0
      %p261 = por %p259, %p260
      %p262 = scmp.ne.s32.totalorder %s251, %s254
      %p263 = scmp.eq.s32.totalorder %s19, 11
      %p264 = por %p262, %p263
      %p265 = scmp.ne.s32.totalorder %s254, %s255
      %p266 = scmp.eq.s32.totalorder %s19, 0
      %p267 = por %p265, %p266
      %p268 = scmp.ne.s32.totalorder %s254, %s255
      %p269 = scmp.eq.s32.totalorder %s20, 11
      %p270 = por %p268, %p269
      %p272 = scmp.ne.s32.totalorder %s255, %s271
      %p273 = scmp.eq.s32.totalorder %s20, 0
      %p274 = por %p272, %p273
      %p275 = scmp.le.s32.totalorder 1, %s14
      %p276 = scmp.lt.s32.totalorder %s14, 13
      %p277 = pnand %p275, %p276
      %p278 = pneg %p277
      // Predicated region
      $region9: #{batch_wideresnet_forward.14} parent=5 // pred_check
        _
      $region10: #{batch_wideresnet_forward.14} parent=5 // pred_check_branch
        %280 = sbr.rel (%p277) target = $region12
      $region11: #{batch_wideresnet_forward.14} parent=5 // pred_region
        %s281 = ssub.s32 %s14, 1
        // Predicated region
        $region13: #{batch_wideresnet_forward.14} parent=11 // pred_check
          %p282 = pneg %p218
        $region14: #{batch_wideresnet_forward.14} parent=11 // pred_check_branch
          %284 = sbr.rel (%p282) target = $region16
        $region15: #{batch_wideresnet_forward.14} parent=11 // pred_region
          _
        $region16: #{batch_wideresnet_forward.14} parent=11 // pred_fallthru
          _
        // Predicated region
        $region17: #{batch_wideresnet_forward.14} parent=11 // pred_check
          %p285 = pneg %p239
        $region18: #{batch_wideresnet_forward.14} parent=11 // pred_check_branch
          %287 = sbr.rel (%p285) target = $region20
        $region19: #{batch_wideresnet_forward.14} parent=11 // pred_region
          _
        $region20: #{batch_wideresnet_forward.14} parent=11 // pred_fallthru
          _
      $region12: #{batch_wideresnet_forward.14} parent=5 // pred_fallthru
        _
      %p288 = scmp.lt.s32.totalorder %s14, 12
      // Predicated region
      $region21: #{batch_wideresnet_forward.14} parent=5 // pred_check
        %p289 = pneg %p288
      $region22: #{batch_wideresnet_forward.14} parent=5 // pred_check_branch
        %291 = sbr.rel (%p289) target = $region24
      $region23: #{batch_wideresnet_forward.14} parent=5 // pred_region
        // Predicated region
        $region25: #{batch_wideresnet_forward.14} parent=23 // pred_check
          %p292 = pneg %p57
        $region26: #{batch_wideresnet_forward.14} parent=23 // pred_check_branch
          %294 = sbr.rel (%p292) target = $region28
        $region27: #{batch_wideresnet_forward.14} parent=23 // pred_region
          %s295 = sand.u32 %s47, 1
          %s296 = sand.u32 %s47, 1
          %s297 = smul.addr %s296, 24
          %s298 = scalar_lea.vmem [#allocation3], %s297
          %s299 = smul.u32 2, %s22
          %s300 = smul.u32 3, %s23
          %s301 = smul.addr %s299, 9
          %s302 = sadd.s32 %s300, %s301
          %s303 = smul.addr %s21, 18
          %s304 = sadd.s32 %s302, %s303
          %s305 = smul.addr %s304, 4
          %s306 = scalar_lea.vmem %s0, %s305
          // Predicated region
          $region29: #{batch_wideresnet_forward.14} parent=27 // pred_check
            _
          $region30: #{batch_wideresnet_forward.14} parent=27 // pred_check_branch
            %308 = sbr.rel (0) target = $region32
          $region31: #{batch_wideresnet_forward.14} parent=27 // pred_region
            // Predicated region
            $region33: #{batch_wideresnet_forward.14} parent=31 // pred_check
              _
            $region34: #{batch_wideresnet_forward.14} parent=31 // pred_check_branch
              %310 = sbr.rel (0) target = $region36
            $region35: #{batch_wideresnet_forward.14} parent=31 // pred_region
              %s311 = scalar_lea.vmem %s306, 8
              %s312 = scalar_lea.vmem %s298, 8 [#allocation3]
              loop: start=0, step=1, limit=1
              $region37: #{batch_wideresnet_forward.14} parent=35 // loop_pre_header
                _
              $region38: #{batch_wideresnet_forward.14} parent=35 // loop_header
                %s314 = sphi 0, %s318
                %p315 = scmp.ge.s32.totalorder %s314, 1
                %s319 = sphi %s306, %s306
                %s320 = sphi %s298, %s298
              $region39: #{batch_wideresnet_forward.14} parent=35 // loop_header_branch
                %317 = sbr.rel (%p315) target = $region43
              $region40: #{batch_wideresnet_forward.14} parent=35 // loop_body
                %v321 = vld [vmem:[%s319] sm:$0xff]
                %322 = vst [vmem:[%s320] sm:$0xff] %v321
                %v323 = vld [vmem:[%s319 + $0x24] sm:$0xff]
                %324 = vst [vmem:[%s320 + $0xc] sm:$0xff] %v323
              $region41: #{batch_wideresnet_forward.14} parent=35 // loop_footer
                %s318 = sadd.s32 1, %s314
              $region42: #{batch_wideresnet_forward.14} parent=35 // loop_footer_branch
                %313 = sbr.rel target = $region38
              $region43: #{batch_wideresnet_forward.14} parent=35 // loop_exit
                _
              loop: start=0, step=1, limit=1
              $region44: #{batch_wideresnet_forward.14} parent=35 // loop_pre_header
                _
              $region45: #{batch_wideresnet_forward.14} parent=35 // loop_header
                %s327 = sphi 0, %s331
                %p328 = scmp.ge.s32.totalorder %s327, 1
                %s332 = sphi %s311, %s311
                %s333 = sphi %s312, %s312
              $region46: #{batch_wideresnet_forward.14} parent=35 // loop_header_branch
                %330 = sbr.rel (%p328) target = $region50
              $region47: #{batch_wideresnet_forward.14} parent=35 // loop_body
                %v334 = vld [vmem:[%s332] sm:$0xf]
                %335 = vst [vmem:[%s333] sm:$0xf] %v334
                %v336 = vld [vmem:[%s332 + $0x24] sm:$0xf]
                %337 = vst [vmem:[%s333 + $0xc] sm:$0xf] %v336
              $region48: #{batch_wideresnet_forward.14} parent=35 // loop_footer
                %s331 = sadd.s32 1, %s327
              $region49: #{batch_wideresnet_forward.14} parent=35 // loop_footer_branch
                %326 = sbr.rel target = $region45
              $region50: #{batch_wideresnet_forward.14} parent=35 // loop_exit
                _
            $region36: #{batch_wideresnet_forward.14} parent=31 // pred_fallthru
              _
          $region32: #{batch_wideresnet_forward.14} parent=27 // pred_fallthru
            _
          %338 = vnop
        $region28: #{batch_wideresnet_forward.14} parent=23 // pred_fallthru
          _
        // Predicated region
        $region51: #{batch_wideresnet_forward.14} parent=23 // pred_check
          %p339 = pneg %p85
        $region52: #{batch_wideresnet_forward.14} parent=23 // pred_check_branch
          %341 = sbr.rel (%p339) target = $region54
        $region53: #{batch_wideresnet_forward.14} parent=23 // pred_region
          %s342 = smul.u32 48, %s23
          %p343 = scmp.lt.s32.totalorder %s21, 3
          %s344 = scalar_select %p343, %s21, 3
          %p345 = scmp.lt.s32.totalorder %s342, 143
          %s346 = scalar_select %p345, %s342, 143
          %s347 = smul.addr %s344, 144
          %s348 = sadd.s32 %s346, %s347
          %s349 = smul.addr %s348, 8
          %s350 = scalar_lea.vmem %s1, %s349
          %s351 = smul.u32 48, %s23
        $region54: #{batch_wideresnet_forward.14} parent=23 // pred_fallthru
          _
        // Predicated region
        $region55: #{batch_wideresnet_forward.14} parent=23 // pred_check
          %p352 = pneg %p111
        $region56: #{batch_wideresnet_forward.14} parent=23 // pred_check_branch
          %354 = sbr.rel (%p352) target = $region58
        $region57: #{batch_wideresnet_forward.14} parent=23 // pred_region
          %s355 = smul.u32 48, %s23
          %p356 = scmp.lt.s32.totalorder %s355, 143
          %s357 = scalar_select %p356, %s355, 143
          %s358 = smul.addr %s357, 4
          %s359 = scalar_lea.vmem %s2, %s358
          %s360 = smul.u32 48, %s23
        $region58: #{batch_wideresnet_forward.14} parent=23 // pred_fallthru
          _
        // Predicated region
        $region59: #{batch_wideresnet_forward.14} parent=23 // pred_check
          %p361 = pneg %p137
        $region60: #{batch_wideresnet_forward.14} parent=23 // pred_check_branch
          %363 = sbr.rel (%p361) target = $region62
        $region61: #{batch_wideresnet_forward.14} parent=23 // pred_region
          %p364 = scmp.lt.s32.totalorder %s21, 3
          %s365 = scalar_select %p364, %s21, 3
          %s366 = scalar_lea.vmem %s3, %s365
        $region62: #{batch_wideresnet_forward.14} parent=23 // pred_fallthru
          _
        // Predicated region
        $region63: #{batch_wideresnet_forward.14} parent=23 // pred_check
          %p367 = pneg %p163
        $region64: #{batch_wideresnet_forward.14} parent=23 // pred_check_branch
          %369 = sbr.rel (%p367) target = $region66
        $region65: #{batch_wideresnet_forward.14} parent=23 // pred_region
          %p370 = scmp.lt.s32.totalorder %s21, 3
          %s371 = scalar_select %p370, %s21, 3
          %s372 = scalar_lea.vmem %s4, %s371
        $region66: #{batch_wideresnet_forward.14} parent=23 // pred_fallthru
          _
        // Predicated region
        $region67: #{batch_wideresnet_forward.14} parent=23 // pred_check
          %p373 = pneg %p191
        $region68: #{batch_wideresnet_forward.14} parent=23 // pred_check_branch
          %375 = sbr.rel (%p373) target = $region70
        $region69: #{batch_wideresnet_forward.14} parent=23 // pred_region
          %s376 = smul.u32 2, %s22
          %p377 = scmp.lt.s32.totalorder %s21, 3
          %s378 = scalar_select %p377, %s21, 3
          %p379 = scmp.lt.s32.totalorder %s376, 1
          %s380 = scalar_select %p379, %s376, 1
          %s381 = smul.addr %s378, 2
          %s382 = sadd.s32 %s380, %s381
          %s383 = smul.addr %s382, 4
          %s384 = scalar_lea.vmem %s5, %s383
          %s385 = smul.u32 2, %s22
        $region70: #{batch_wideresnet_forward.14} parent=23 // pred_fallthru
          _
      $region24: #{batch_wideresnet_forward.14} parent=5 // pred_fallthru
        _
      %p386 = scmp.le.s32.totalorder 1, %s14
      %p387 = scmp.lt.s32.totalorder %s14, 13
      %p388 = pnand %p386, %p387
      %p389 = pneg %p388
      // Predicated region
      $region71: #{batch_wideresnet_forward.14} parent=5 // pred_check
        _
      $region72: #{batch_wideresnet_forward.14} parent=5 // pred_check_branch
        %391 = sbr.rel (%p388) target = $region74
      $region73: #{batch_wideresnet_forward.14} parent=5 // pred_region
        %s392 = ssub.s32 %s14, 1
        %s393 = sand.u32 %s50, 1
        %s394 = sand.u32 %s50, 1
        %s395 = smul.addr %s394, 24
        %s396 = scalar_lea.vmem [#allocation3], %s395
        // Predicated region
        $region75: #{batch_wideresnet_forward.14} parent=73 // pred_check
          %p397 = pneg %p63
        $region76: #{batch_wideresnet_forward.14} parent=73 // pred_check_branch
          %399 = sbr.rel (%p397) target = $region78
        $region77: #{batch_wideresnet_forward.14} parent=73 // pred_region
          _
        $region78: #{batch_wideresnet_forward.14} parent=73 // pred_fallthru
          _
        %s400 = sand.u32 %s50, 1
        %s401 = sand.u32 %s50, 1
        %s402 = smul.addr %s401, 24
        %s403 = scalar_lea.vmem [#allocation3], %s402
        %p404 = pneg %p63
        %p405 = pneg %p60
        %s406 = smul.u32 48, %s26
        %p407 = scmp.lt.s32.totalorder %s24, 3
        %s408 = scalar_select %p407, %s24, 3
        %p409 = scmp.lt.s32.totalorder %s406, 143
        %s410 = scalar_select %p409, %s406, 143
        %s411 = smul.addr %s408, 144
        %s412 = sadd.s32 %s410, %s411
        %s413 = smul.addr %s412, 8
        %s414 = scalar_lea.vmem %s1, %s413
        %p415 = pneg %p91
        %p416 = pneg %p88
        %s417 = smul.u32 48, %s26
        %p418 = scmp.lt.s32.totalorder %s417, 143
        %s419 = scalar_select %p418, %s417, 143
        %s420 = smul.addr %s419, 4
        %s421 = scalar_lea.vmem %s2, %s420
        %p422 = pneg %p117
        %p423 = pneg %p114
        %p424 = scmp.lt.s32.totalorder %s24, 3
        %s425 = scalar_select %p424, %s24, 3
        %s426 = scalar_lea.vmem %s3, %s425
        %p427 = pneg %p143
        %p428 = pneg %p140
        %p429 = scmp.lt.s32.totalorder %s24, 3
        %s430 = scalar_select %p429, %s24, 3
        %s431 = scalar_lea.vmem %s4, %s430
        %p432 = pneg %p169
        %p433 = pneg %p166
        %s434 = smul.u32 2, %s25
        %p435 = scmp.lt.s32.totalorder %s24, 3
        %s436 = scalar_select %p435, %s24, 3
        %p437 = scmp.lt.s32.totalorder %s434, 1
        %s438 = scalar_select %p437, %s434, 1
        %s439 = smul.addr %s436, 2
        %s440 = sadd.s32 %s438, %s439
        %s441 = smul.addr %s440, 4
        %s442 = scalar_lea.vmem %s5, %s441
        %p443 = pneg %p197
        %p444 = pneg %p194
        %p445 = pneg %p218
        %p446 = pneg %p215
        %p447 = pneg %p239
        %p448 = pneg %p236
        %p449 = pneg %p267
        %p450 = pneg %p264
        %s451 = smul.u32 2, %s25
        %p452 = scmp.lt.s32.totalorder %s24, 3
        %s453 = scalar_select %p452, %s24, 3
        %p454 = scmp.lt.s32.totalorder %s451, 1
        %s455 = scalar_select %p454, %s451, 1
        %s456 = smul.addr %s453, 2
        %s457 = sadd.s32 %s455, %s456
        %s458 = smul.addr %s457, 4
        %s459 = scalar_lea.vmem %s8, %s458
        %s460 = smul.u32 2, %s25
        %s461 = smul.u32 3, %s26
        %s462 = smul.u32 48, %s26
        %p463 = scmp.lt.s32.totalorder %s24, 3
        %s464 = scalar_select %p463, %s24, 3
        %p465 = scmp.lt.s32.totalorder %s462, 143
        %s466 = scalar_select %p465, %s462, 143
        %s467 = smul.addr %s464, 144
        %s468 = sadd.s32 %s466, %s467
        %s469 = smul.addr %s468, 8
        %s470 = scalar_lea.vmem %s1, %s469
        %s471 = smul.u32 48, %s26
        %s472 = smul.u32 48, %s26
        %p473 = scmp.lt.s32.totalorder %s472, 143
        %s474 = scalar_select %p473, %s472, 143
        %s475 = smul.addr %s474, 4
        %s476 = scalar_lea.vmem %s2, %s475
        %s477 = smul.u32 48, %s26
        %p478 = scmp.lt.s32.totalorder %s24, 3
        %s479 = scalar_select %p478, %s24, 3
        %s480 = scalar_lea.vmem %s3, %s479
        %p481 = scmp.lt.s32.totalorder %s24, 3
        %s482 = scalar_select %p481, %s24, 3
        %s483 = scalar_lea.vmem %s4, %s482
        %s484 = smul.u32 2, %s25
        %p485 = scmp.lt.s32.totalorder %s24, 3
        %s486 = scalar_select %p485, %s24, 3
        %p487 = scmp.lt.s32.totalorder %s484, 1
        %s488 = scalar_select %p487, %s484, 1
        %s489 = smul.addr %s486, 2
        %s490 = sadd.s32 %s488, %s489
        %s491 = smul.addr %s490, 4
        %s492 = scalar_lea.vmem %s5, %s491
        %s493 = smul.u32 2, %s25
        %s494 = smul.u32 2, %s25
        %p495 = scmp.lt.s32.totalorder %s24, 3
        %s496 = scalar_select %p495, %s24, 3
        %p497 = scmp.lt.s32.totalorder %s494, 1
        %s498 = scalar_select %p497, %s494, 1
        %s499 = smul.addr %s496, 2
        %s500 = sadd.s32 %s498, %s499
        %s501 = smul.addr %s500, 4
        %s502 = scalar_lea.vmem %s8, %s501
        %s503 = smul.u32 2, %s25
        %p505 = scmp.eq.s32.totalorder %s26, 0
        // Predicated region
        $region79: #{batch_wideresnet_forward.14} parent=73 // pred_check
          %p506 = pneg %p505
        $region80: #{batch_wideresnet_forward.14} parent=73 // pred_check_branch
          %508 = sbr.rel (%p506) target = $region82
        $region81: #{batch_wideresnet_forward.14} parent=73 // pred_region
          %509 = vst [vmem:[#allocation2] sm:$0xff] 0.0
          %510 = vst [vmem:[#allocation2 + $0x8] sm:$0xff] 0.0
        $region82: #{batch_wideresnet_forward.14} parent=73 // pred_fallthru
          _
        %v511 = vld [vmem:[%s476] sm:$0xf]
        %v512 = vld [vmem:[%s476 + $0x4] sm:$0xf]
        %v513 = vld [vmem:[%s476 + $0x8] sm:$0xf]
        %v514 = vld [vmem:[%s476 + $0xc] sm:$0xf]
        %v515 = vld [vmem:[%s476 + $0x10] sm:$0xf]
        %v516 = vld [vmem:[%s476 + $0x14] sm:$0xf]
        %v517 = vld [vmem:[%s476 + $0x18] sm:$0xf]
        %v518 = vld [vmem:[%s476 + $0x1c] sm:$0xf]
        %v519 = vld [vmem:[%s476 + $0x20] sm:$0xf]
        %v520 = vld [vmem:[%s476 + $0x24] sm:$0xf]
        %v521 = vld [vmem:[%s476 + $0x28] sm:$0xf]
        %v522 = vld [vmem:[%s476 + $0x2c] sm:$0xf]
        %v523 = vld [vmem:[%s476 + $0x30] sm:$0xf]
        %v524 = vld [vmem:[%s476 + $0x34] sm:$0xf]
        %v525 = vld [vmem:[%s476 + $0x38] sm:$0xf]
        %v526 = vld [vmem:[%s476 + $0x3c] sm:$0xf]
        %v527 = vld [vmem:[%s476 + $0x40] sm:$0xf]
        %v528 = vld [vmem:[%s476 + $0x44] sm:$0xf]
        %v529 = vld [vmem:[%s476 + $0x48] sm:$0xf]
        %v530 = vld [vmem:[%s476 + $0x4c] sm:$0xf]
        %v531 = vld [vmem:[%s476 + $0x50] sm:$0xf]
        %v532 = vld [vmem:[%s476 + $0x54] sm:$0xf]
        %v533 = vld [vmem:[%s476 + $0x58] sm:$0xf]
        %v534 = vld [vmem:[%s476 + $0x5c] sm:$0xf]
        %v535 = vld [vmem:[%s476 + $0x60] sm:$0xf]
        %v536 = vld [vmem:[%s476 + $0x64] sm:$0xf]
        %v537 = vld [vmem:[%s476 + $0x68] sm:$0xf]
        %v538 = vld [vmem:[%s476 + $0x6c] sm:$0xf]
        %v539 = vld [vmem:[%s476 + $0x70] sm:$0xf]
        %v540 = vld [vmem:[%s476 + $0x74] sm:$0xf]
        %v541 = vld [vmem:[%s476 + $0x78] sm:$0xf]
        %v542 = vld [vmem:[%s476 + $0x7c] sm:$0xf]
        %v543 = vld [vmem:[%s476 + $0x80] sm:$0xf]
        %v544 = vld [vmem:[%s476 + $0x84] sm:$0xf]
        %v545 = vld [vmem:[%s476 + $0x88] sm:$0xf]
        %v546 = vld [vmem:[%s476 + $0x8c] sm:$0xf]
        %v547 = vld [vmem:[%s476 + $0x90] sm:$0xf]
        %v548 = vld [vmem:[%s476 + $0x94] sm:$0xf]
        %v549 = vld [vmem:[%s476 + $0x98] sm:$0xf]
        %v550 = vld [vmem:[%s476 + $0x9c] sm:$0xf]
        %v551 = vld [vmem:[%s476 + $0xa0] sm:$0xf]
        %v552 = vld [vmem:[%s476 + $0xa4] sm:$0xf]
        %v553 = vld [vmem:[%s476 + $0xa8] sm:$0xf]
        %v554 = vld [vmem:[%s476 + $0xac] sm:$0xf]
        %v555 = vld [vmem:[%s476 + $0xb0] sm:$0xf]
        %v556 = vld [vmem:[%s476 + $0xb4] sm:$0xf]
        %v557 = vld [vmem:[%s476 + $0xb8] sm:$0xf]
        %v558 = vld [vmem:[%s476 + $0xbc] sm:$0xf]
        %v559 = vld [vmem:[%s470] sm:$0xff]
        %v560 = vld [vmem:[%s470 + $0x8] sm:$0xff]
        %v561 = vld [vmem:[%s470 + $0x10] sm:$0xff]
        %v562 = vld [vmem:[%s470 + $0x18] sm:$0xff]
        %v563 = vld [vmem:[%s470 + $0x20] sm:$0xff]
        %v564 = vld [vmem:[%s470 + $0x28] sm:$0xff]
        %v565 = vld [vmem:[%s470 + $0x30] sm:$0xff]
        %v566 = vld [vmem:[%s470 + $0x38] sm:$0xff]
        %v567 = vld [vmem:[%s470 + $0x40] sm:$0xff]
        %v568 = vld [vmem:[%s470 + $0x48] sm:$0xff]
        %v569 = vld [vmem:[%s470 + $0x50] sm:$0xff]
        %v570 = vld [vmem:[%s470 + $0x58] sm:$0xff]
        %v571 = vld [vmem:[%s470 + $0x60] sm:$0xff]
        %v572 = vld [vmem:[%s470 + $0x68] sm:$0xff]
        %v573 = vld [vmem:[%s470 + $0x70] sm:$0xff]
        %v574 = vld [vmem:[%s470 + $0x78] sm:$0xff]
        %v575 = vld [vmem:[%s470 + $0x80] sm:$0xff]
        %v576 = vld [vmem:[%s470 + $0x88] sm:$0xff]
        %v577 = vld [vmem:[%s470 + $0x90] sm:$0xff]
        %v578 = vld [vmem:[%s470 + $0x98] sm:$0xff]
        %v579 = vld [vmem:[%s470 + $0xa0] sm:$0xff]
        %v580 = vld [vmem:[%s470 + $0xa8] sm:$0xff]
        %v581 = vld [vmem:[%s470 + $0xb0] sm:$0xff]
        %v582 = vld [vmem:[%s470 + $0xb8] sm:$0xff]
        %v583 = vld [vmem:[%s470 + $0xc0] sm:$0xff]
        %v584 = vld [vmem:[%s470 + $0xc8] sm:$0xff]
        %v585 = vld [vmem:[%s470 + $0xd0] sm:$0xff]
        %v586 = vld [vmem:[%s470 + $0xd8] sm:$0xff]
        %v587 = vld [vmem:[%s470 + $0xe0] sm:$0xff]
        %v588 = vld [vmem:[%s470 + $0xe8] sm:$0xff]
        %v589 = vld [vmem:[%s470 + $0xf0] sm:$0xff]
        %v590 = vld [vmem:[%s470 + $0xf8] sm:$0xff]
        %v591 = vld [vmem:[%s470 + $0x100] sm:$0xff]
        %v592 = vld [vmem:[%s470 + $0x108] sm:$0xff]
        %v593 = vld [vmem:[%s470 + $0x110] sm:$0xff]
        %v594 = vld [vmem:[%s470 + $0x118] sm:$0xff]
        %v595 = vld [vmem:[%s470 + $0x120] sm:$0xff]
        %v596 = vld [vmem:[%s470 + $0x128] sm:$0xff]
        %v597 = vld [vmem:[%s470 + $0x130] sm:$0xff]
        %v598 = vld [vmem:[%s470 + $0x138] sm:$0xff]
        %v599 = vld [vmem:[%s470 + $0x140] sm:$0xff]
        %v600 = vld [vmem:[%s470 + $0x148] sm:$0xff]
        %v601 = vld [vmem:[%s470 + $0x150] sm:$0xff]
        %v602 = vld [vmem:[%s470 + $0x158] sm:$0xff]
        %v603 = vld [vmem:[%s470 + $0x160] sm:$0xff]
        %v604 = vld [vmem:[%s470 + $0x168] sm:$0xff]
        %v605 = vld [vmem:[%s470 + $0x170] sm:$0xff]
        %v606 = vld [vmem:[%s470 + $0x178] sm:$0xff]
        %v607 = vunpack.c.l.bf16 %v511
        %v608 = vunpack.c.l.bf16 %v512
        %v609 = vunpack.c.l.bf16 %v513
        %v610 = vunpack.c.l.bf16 %v514
        %v611 = vunpack.c.l.bf16 %v515
        %v612 = vunpack.c.l.bf16 %v516
        %v613 = vunpack.c.l.bf16 %v517
        %v614 = vunpack.c.l.bf16 %v518
        %v615 = vunpack.c.l.bf16 %v519
        %v616 = vunpack.c.l.bf16 %v520
        %v617 = vunpack.c.l.bf16 %v521
        %v618 = vunpack.c.l.bf16 %v522
        %v619 = vunpack.c.l.bf16 %v523
        %v620 = vunpack.c.l.bf16 %v524
        %v621 = vunpack.c.l.bf16 %v525
        %v622 = vunpack.c.l.bf16 %v526
        %v623 = vunpack.c.l.bf16 %v527
        %v624 = vunpack.c.l.bf16 %v528
        %v625 = vunpack.c.l.bf16 %v529
        %v626 = vunpack.c.l.bf16 %v530
        %v627 = vunpack.c.l.bf16 %v531
        %v628 = vunpack.c.l.bf16 %v532
        %v629 = vunpack.c.l.bf16 %v533
        %v630 = vunpack.c.l.bf16 %v534
        %v631 = vunpack.c.l.bf16 %v535
        %v632 = vunpack.c.l.bf16 %v536
        %v633 = vunpack.c.l.bf16 %v537
        %v634 = vunpack.c.l.bf16 %v538
        %v635 = vunpack.c.l.bf16 %v539
        %v636 = vunpack.c.l.bf16 %v540
        %v637 = vunpack.c.l.bf16 %v541
        %v638 = vunpack.c.l.bf16 %v542
        %v639 = vunpack.c.l.bf16 %v543
        %v640 = vunpack.c.l.bf16 %v544
        %v641 = vunpack.c.l.bf16 %v545
        %v642 = vunpack.c.l.bf16 %v546
        %v643 = vunpack.c.l.bf16 %v547
        %v644 = vunpack.c.l.bf16 %v548
        %v645 = vunpack.c.l.bf16 %v549
        %v646 = vunpack.c.l.bf16 %v550
        %v647 = vunpack.c.l.bf16 %v551
        %v648 = vunpack.c.l.bf16 %v552
        %v649 = vunpack.c.l.bf16 %v553
        %v650 = vunpack.c.l.bf16 %v554
        %v651 = vunpack.c.l.bf16 %v555
        %v652 = vunpack.c.l.bf16 %v556
        %v653 = vunpack.c.l.bf16 %v557
        %v654 = vunpack.c.l.bf16 %v558
        %656 = vset.pattern.permute.xlu0 0
        %657 = vperm.xlu0 %656, %v559
        %v658 = vpop.permute.xlu0 %657
        %661 = vset.pattern.permute.xlu0 0
        %662 = vperm.xlu0 %661, %v560
        %v663 = vpop.permute.xlu0 %662
        %666 = vset.pattern.permute.xlu0 0
        %667 = vperm.xlu0 %666, %v561
        %v668 = vpop.permute.xlu0 %667
        %671 = vset.pattern.permute.xlu0 0
        %672 = vperm.xlu0 %671, %v562
        %v673 = vpop.permute.xlu0 %672
        %676 = vset.pattern.permute.xlu0 0
        %677 = vperm.xlu0 %676, %v563
        %v678 = vpop.permute.xlu0 %677
        %681 = vset.pattern.permute.xlu0 0
        %682 = vperm.xlu0 %681, %v564
        %v683 = vpop.permute.xlu0 %682
        %686 = vset.pattern.permute.xlu0 0
        %687 = vperm.xlu0 %686, %v565
        %v688 = vpop.permute.xlu0 %687
        %691 = vset.pattern.permute.xlu0 0
        %692 = vperm.xlu0 %691, %v566
        %v693 = vpop.permute.xlu0 %692
        %696 = vset.pattern.permute.xlu0 0
        %697 = vperm.xlu0 %696, %v567
        %v698 = vpop.permute.xlu0 %697
        %701 = vset.pattern.permute.xlu0 0
        %702 = vperm.xlu0 %701, %v568
        %v703 = vpop.permute.xlu0 %702
        %706 = vset.pattern.permute.xlu0 0
        %707 = vperm.xlu0 %706, %v569
        %v708 = vpop.permute.xlu0 %707
        %711 = vset.pattern.permute.xlu0 0
        %712 = vperm.xlu0 %711, %v570
        %v713 = vpop.permute.xlu0 %712
        %716 = vset.pattern.permute.xlu0 0
        %717 = vperm.xlu0 %716, %v571
        %v718 = vpop.permute.xlu0 %717
        %721 = vset.pattern.permute.xlu0 0
        %722 = vperm.xlu0 %721, %v572
        %v723 = vpop.permute.xlu0 %722
        %726 = vset.pattern.permute.xlu0 0
        %727 = vperm.xlu0 %726, %v573
        %v728 = vpop.permute.xlu0 %727
        %731 = vset.pattern.permute.xlu0 0
        %732 = vperm.xlu0 %731, %v574
        %v733 = vpop.permute.xlu0 %732
        %736 = vset.pattern.permute.xlu0 0
        %737 = vperm.xlu0 %736, %v575
        %v738 = vpop.permute.xlu0 %737
        %741 = vset.pattern.permute.xlu0 0
        %742 = vperm.xlu0 %741, %v576
        %v743 = vpop.permute.xlu0 %742
        %746 = vset.pattern.permute.xlu0 0
        %747 = vperm.xlu0 %746, %v577
        %v748 = vpop.permute.xlu0 %747
        %751 = vset.pattern.permute.xlu0 0
        %752 = vperm.xlu0 %751, %v578
        %v753 = vpop.permute.xlu0 %752
        %756 = vset.pattern.permute.xlu0 0
        %757 = vperm.xlu0 %756, %v579
        %v758 = vpop.permute.xlu0 %757
        %761 = vset.pattern.permute.xlu0 0
        %762 = vperm.xlu0 %761, %v580
        %v763 = vpop.permute.xlu0 %762
        %766 = vset.pattern.permute.xlu0 0
        %767 = vperm.xlu0 %766, %v581
        %v768 = vpop.permute.xlu0 %767
        %771 = vset.pattern.permute.xlu0 0
        %772 = vperm.xlu0 %771, %v582
        %v773 = vpop.permute.xlu0 %772
        %776 = vset.pattern.permute.xlu0 0
        %777 = vperm.xlu0 %776, %v583
        %v778 = vpop.permute.xlu0 %777
        %781 = vset.pattern.permute.xlu0 0
        %782 = vperm.xlu0 %781, %v584
        %v783 = vpop.permute.xlu0 %782
        %786 = vset.pattern.permute.xlu0 0
        %787 = vperm.xlu0 %786, %v585
        %v788 = vpop.permute.xlu0 %787
        %791 = vset.pattern.permute.xlu0 0
        %792 = vperm.xlu0 %791, %v586
        %v793 = vpop.permute.xlu0 %792
        %796 = vset.pattern.permute.xlu0 0
        %797 = vperm.xlu0 %796, %v587
        %v798 = vpop.permute.xlu0 %797
        %801 = vset.pattern.permute.xlu0 0
        %802 = vperm.xlu0 %801, %v588
        %v803 = vpop.permute.xlu0 %802
        %806 = vset.pattern.permute.xlu0 0
        %807 = vperm.xlu0 %806, %v589
        %v808 = vpop.permute.xlu0 %807
        %811 = vset.pattern.permute.xlu0 0
        %812 = vperm.xlu0 %811, %v590
        %v813 = vpop.permute.xlu0 %812
        %816 = vset.pattern.permute.xlu0 0
        %817 = vperm.xlu0 %816, %v591
        %v818 = vpop.permute.xlu0 %817
        %821 = vset.pattern.permute.xlu0 0
        %822 = vperm.xlu0 %821, %v592
        %v823 = vpop.permute.xlu0 %822
        %826 = vset.pattern.permute.xlu0 0
        %827 = vperm.xlu0 %826, %v593
        %v828 = vpop.permute.xlu0 %827
        %831 = vset.pattern.permute.xlu0 0
        %832 = vperm.xlu0 %831, %v594
        %v833 = vpop.permute.xlu0 %832
        %836 = vset.pattern.permute.xlu0 0
        %837 = vperm.xlu0 %836, %v595
        %v838 = vpop.permute.xlu0 %837
        %841 = vset.pattern.permute.xlu0 0
        %842 = vperm.xlu0 %841, %v596
        %v843 = vpop.permute.xlu0 %842
        %846 = vset.pattern.permute.xlu0 0
        %847 = vperm.xlu0 %846, %v597
        %v848 = vpop.permute.xlu0 %847
        %851 = vset.pattern.permute.xlu0 0
        %852 = vperm.xlu0 %851, %v598
        %v853 = vpop.permute.xlu0 %852
        %856 = vset.pattern.permute.xlu0 0
        %857 = vperm.xlu0 %856, %v599
        %v858 = vpop.permute.xlu0 %857
        %861 = vset.pattern.permute.xlu0 0
        %862 = vperm.xlu0 %861, %v600
        %v863 = vpop.permute.xlu0 %862
        %866 = vset.pattern.permute.xlu0 0
        %867 = vperm.xlu0 %866, %v601
        %v868 = vpop.permute.xlu0 %867
        %871 = vset.pattern.permute.xlu0 0
        %872 = vperm.xlu0 %871, %v602
        %v873 = vpop.permute.xlu0 %872
        %876 = vset.pattern.permute.xlu0 0
        %877 = vperm.xlu0 %876, %v603
        %v878 = vpop.permute.xlu0 %877
        %881 = vset.pattern.permute.xlu0 0
        %882 = vperm.xlu0 %881, %v604
        %v883 = vpop.permute.xlu0 %882
        %886 = vset.pattern.permute.xlu0 0
        %887 = vperm.xlu0 %886, %v605
        %v888 = vpop.permute.xlu0 %887
        %891 = vset.pattern.permute.xlu0 0
        %892 = vperm.xlu0 %891, %v606
        %v893 = vpop.permute.xlu0 %892
        %v895 = vmul.f32 %v607, %v658
        %v896 = vmul.f32 %v608, %v663
        %v897 = vmul.f32 %v609, %v668
        %v898 = vmul.f32 %v610, %v673
        %v899 = vmul.f32 %v611, %v678
        %v900 = vmul.f32 %v612, %v683
        %v901 = vmul.f32 %v613, %v688
        %v902 = vmul.f32 %v614, %v693
        %v903 = vmul.f32 %v615, %v698
        %v904 = vmul.f32 %v616, %v703
        %v905 = vmul.f32 %v617, %v708
        %v906 = vmul.f32 %v618, %v713
        %v907 = vmul.f32 %v619, %v718
        %v908 = vmul.f32 %v620, %v723
        %v909 = vmul.f32 %v621, %v728
        %v910 = vmul.f32 %v622, %v733
        %v911 = vmul.f32 %v623, %v738
        %v912 = vmul.f32 %v624, %v743
        %v913 = vmul.f32 %v625, %v748
        %v914 = vmul.f32 %v626, %v753
        %v915 = vmul.f32 %v627, %v758
        %v916 = vmul.f32 %v628, %v763
        %v917 = vmul.f32 %v629, %v768
        %v918 = vmul.f32 %v630, %v773
        %v919 = vmul.f32 %v631, %v778
        %v920 = vmul.f32 %v632, %v783
        %v921 = vmul.f32 %v633, %v788
        %v922 = vmul.f32 %v634, %v793
        %v923 = vmul.f32 %v635, %v798
        %v924 = vmul.f32 %v636, %v803
        %v925 = vmul.f32 %v637, %v808
        %v926 = vmul.f32 %v638, %v813
        %v927 = vmul.f32 %v639, %v818
        %v928 = vmul.f32 %v640, %v823
        %v929 = vmul.f32 %v641, %v828
        %v930 = vmul.f32 %v642, %v833
        %v931 = vmul.f32 %v643, %v838
        %v932 = vmul.f32 %v644, %v843
        %v933 = vmul.f32 %v645, %v848
        %v934 = vmul.f32 %v646, %v853
        %v935 = vmul.f32 %v647, %v858
        %v936 = vmul.f32 %v648, %v863
        %v937 = vmul.f32 %v649, %v868
        %v938 = vmul.f32 %v650, %v873
        %v939 = vmul.f32 %v651, %v878
        %v940 = vmul.f32 %v652, %v883
        %v941 = vmul.f32 %v653, %v888
        %v942 = vmul.f32 %v654, %v893
        %v943 = vpack.c.bf16 %v896, %v895
        %v944 = vpack.c.bf16 %v898, %v897
        %v945 = vpack.c.bf16 %v900, %v899
        %v946 = vpack.c.bf16 %v902, %v901
        %v947 = vpack.c.bf16 %v904, %v903
        %v948 = vpack.c.bf16 %v906, %v905
        %v949 = vpack.c.bf16 %v908, %v907
        %v950 = vpack.c.bf16 %v910, %v909
        %v951 = vpack.c.bf16 %v912, %v911
        %v952 = vpack.c.bf16 %v914, %v913
        %v953 = vpack.c.bf16 %v916, %v915
        %v954 = vpack.c.bf16 %v918, %v917
        %v955 = vpack.c.bf16 %v920, %v919
        %v956 = vpack.c.bf16 %v922, %v921
        %v957 = vpack.c.bf16 %v924, %v923
        %v958 = vpack.c.bf16 %v926, %v925
        %v959 = vpack.c.bf16 %v928, %v927
        %v960 = vpack.c.bf16 %v930, %v929
        %v961 = vpack.c.bf16 %v932, %v931
        %v962 = vpack.c.bf16 %v934, %v933
        %v963 = vpack.c.bf16 %v936, %v935
        %v964 = vpack.c.bf16 %v938, %v937
        %v965 = vpack.c.bf16 %v940, %v939
        %v966 = vpack.c.bf16 %v942, %v941
        %v967 = vld [vmem:[#allocation2] sm:$0xff]
        %v968 = vld [vmem:[#allocation2 + $0x8] sm:$0xff]
        %v969 = vld [vmem:[%s396] sm:$0xff]
        %v970 = vld [vmem:[%s396 + $0x8] sm:$0xf]
        %v971 = vld [vmem:[%s396 + $0xc] sm:$0xff]
        %v972 = vld [vmem:[%s396 + $0x14] sm:$0xf]
        %v977 = vunpack.c.l.b16 %v969
        %v978 = vunpack.c.h.b16 %v969
        %v979 = vunpack.c.l.b16 %v970
        %v980 = vunpack.c.l.b16 %v971
        %v981 = vunpack.c.h.b16 %v971
        %v982 = vunpack.c.l.b16 %v972
        %v983 = vpack.c.b16 %v980, %v977
        %v984 = vpack.c.b16 %v981, %v978
        %v985 = vpack.c.b16 %v982, %v979
        %989 = vmatprep.subr.bf16.mxu0 0
        %990 = vmatpush1.bf16.msra.mxu0 %v943
        %991 = vmatprep.subr.bf16.mxu0 0
        %992 = vmatpush1.bf16.msra.mxu0 %v944
        %993 = vmatprep.subr.bf16.mxu0 0
        %994 = vmatpush1.bf16.msra.mxu0 %v945
        %995 = vmatprep.subr.bf16.mxu0 0
        %996 = vmatpush1.bf16.msra.mxu0 %v946
        %997 = vmatprep.subr.bf16.mxu0 0
        %998 = vmatpush1.bf16.msra.mxu0 %v947
        %999 = vmatprep.subr.bf16.mxu0 0
        %1000 = vmatpush1.bf16.msra.mxu0 %v948
        %1001 = vmatprep.subr.bf16.mxu0 0
        %1002 = vmatpush1.bf16.msra.mxu0 %v949
        %1003 = vmatprep.subr.bf16.mxu0 0
        %1004 = vmatpush1.bf16.msra.mxu0 %v950
        %1005 = vmatprep.subr.bf16.mxu0 0
        %1006 = vmatpush1.bf16.msra.mxu0 %v951
        %1007 = vmatprep.subr.bf16.mxu0 0
        %1008 = vmatpush1.bf16.msra.mxu0 %v952
        %1009 = vmatprep.subr.bf16.mxu0 0
        %1010 = vmatpush1.bf16.msra.mxu0 %v953
        %1011 = vmatprep.subr.bf16.mxu0 0
        %1012 = vmatpush1.bf16.msra.mxu0 %v954
        %1013 = vmatprep.subr.bf16.mxu0 0
        %1014 = vmatpush1.bf16.msra.mxu0 %v955
        %1015 = vmatprep.subr.bf16.mxu0 0
        %1016 = vmatpush1.bf16.msra.mxu0 %v956
        %1017 = vmatprep.subr.bf16.mxu0 0
        %1018 = vmatpush1.bf16.msra.mxu0 %v957
        %1019 = vmatprep.subr.bf16.mxu0 0
        %1020 = vmatpush1.bf16.msra.mxu0 %v958
        %1021 = vmatprep.mubr.bf16.mxu0 %v984
        %1022 = vmatmul.mubr.bf16.gmra.mrb[0].mxu0 %v983
        %v1023 = vpop.f32.mrb[0].mxu0
        %v1024 = vadd.f32 0.0, %v1023
        %v1025 = vpop.f32.mrb[0].mxu0
        %v1026 = vpop.f32.mrb[0].mxu0
        %v1027 = vadd.f32 0.0, %v1026
        %v1028 = vpop.f32.mrb[0].mxu0
        %1029 = vdwg.mxu0
        %1030 = vmatprep.subr.bf16.mxu0 0
        %1031 = vmatpush1.bf16.msra.mxu0 %v959
        %1032 = vmatprep.subr.bf16.mxu0 0
        %1033 = vmatpush1.bf16.msra.mxu0 %v960
        %1034 = vmatprep.subr.bf16.mxu0 0
        %1035 = vmatpush1.bf16.msra.mxu0 %v961
        %1036 = vmatprep.subr.bf16.mxu0 0
        %1037 = vmatpush1.bf16.msra.mxu0 %v962
        %1038 = vmatprep.subr.bf16.mxu0 0
        %1039 = vmatpush1.bf16.msra.mxu0 %v963
        %1040 = vmatprep.subr.bf16.mxu0 0
        %1041 = vmatpush1.bf16.msra.mxu0 %v964
        %1042 = vmatprep.subr.bf16.mxu0 0
        %1043 = vmatpush1.bf16.msra.mxu0 %v965
        %1044 = vmatprep.subr.bf16.mxu0 0
        %1045 = vmatpush1.bf16.msra.mxu0 %v966
        %1046 = vmatprep.subr.bf16.mxu0 0
        %1047 = vmatpush1.bf16.msra.mxu0 0
        %1048 = vmatprep.subr.bf16.mxu0 0
        %1049 = vmatpush1.bf16.msra.mxu0 0
        %1050 = vmatprep.subr.bf16.mxu0 0
        %1051 = vmatpush1.bf16.msra.mxu0 0
        %1052 = vmatprep.subr.bf16.mxu0 0
        %1053 = vmatpush1.bf16.msra.mxu0 0
        %1054 = vmatprep.subr.bf16.mxu0 0
        %1055 = vmatpush1.bf16.msra.mxu0 0
        %1056 = vmatprep.subr.bf16.mxu0 0
        %1057 = vmatpush1.bf16.msra.mxu0 0
        %1058 = vmatprep.subr.bf16.mxu0 0
        %1059 = vmatpush1.bf16.msra.mxu0 0
        %1060 = vmatprep.subr.bf16.mxu0 0
        %1061 = vmatpush1.bf16.msra.mxu0 0
        %1062 = vmatprep.mubr.bf16.mxu0 0
        %1063 = vmatmul.mubr.bf16.gmra.mrb[0].mxu0 %v985
        %v1064 = vpop.f32.mrb[0].mxu0
        %v1065 = vadd.f32 %v1024, %v1064
        %v1066 = vpop.f32.mrb[0].mxu0
        %v1067 = vpop.f32.mrb[0].mxu0
        %v1068 = vadd.f32 %v1027, %v1067
        %v1069 = vpop.f32.mrb[0].mxu0
        %1070 = vdwg.mxu0
        %v1071 = vadd.f32 %v967, %v1065
        %v1072 = vadd.f32 %v968, %v1068
        %1073 = vst [vmem:[#allocation2] sm:$0xff] %v1071
        %1074 = vst [vmem:[#allocation2 + $0x8] sm:$0xff] %v1072
        %p1075 = scmp.eq.s32.totalorder %s26, 2
        // Predicated region
        $region83: #{batch_wideresnet_forward.14} parent=73 // pred_check
          %p1076 = pneg %p1075
        $region84: #{batch_wideresnet_forward.14} parent=73 // pred_check_branch
          %1078 = sbr.rel (%p1076) target = $region86
        $region85: #{batch_wideresnet_forward.14} parent=73 // pred_region
          %v1079 = vld [vmem:[#allocation2] sm:$0xff]
          %v1080 = vld [vmem:[#allocation2 + $0x8] sm:$0xff]
          %v1081 = vld [vmem:[%s480] sm:$0x1]
          %v1083 = vlaneseq
          %v1084 = vshrl.u32 %v1083, 7
          %v1085 = vsub.s32 0, %v1084
          %v1086 = vrot.slane %v1081, %v1085
          %v1088 = vmul.f32 %v1079, %v1086
          %v1089 = vmul.f32 %v1080, %v1086
          %v1090 = vld [vmem:[%s483] sm:$0x1]
          %v1092 = vlaneseq
          %v1093 = vshrl.u32 %v1092, 7
          %v1094 = vsub.s32 0, %v1093
          %v1095 = vrot.slane %v1090, %v1094
          %v1097 = vadd.f32 %v1088, %v1095
          %v1098 = vadd.f32 %v1089, %v1095
          %v1099 = vld [vmem:[%s492] sm:$0xf]
          %v1100 = vld [vmem:[%s492 + $0x4] sm:$0xf]
          %v1101 = vunpack.c.l.bf16 %v1099
          %v1102 = vunpack.c.l.bf16 %v1100
          %v1103 = vadd.f32 %v1097, %v1101
          %v1104 = vadd.f32 %v1098, %v1102
          %v1105 = vld [vmem:[%s6] sm:$0x1]
          %v1107 = vlaneseq
          %v1108 = vshrl.u32 %v1107, 7
          %v1109 = vsub.s32 0, %v1108
          %v1110 = vrot.slane %v1105, %v1109
          %v1112 = vmul.f32 %v1103, %v1110
          %v1113 = vmul.f32 %v1104, %v1110
          %v1114 = vld [vmem:[%s7] sm:$0x1]
          %v1116 = vlaneseq
          %v1117 = vshrl.u32 %v1116, 7
          %v1118 = vsub.s32 0, %v1117
          %v1119 = vrot.slane %v1114, %v1118
          %v1121 = vadd.f32 %v1112, %v1119
          %v1122 = vadd.f32 %v1113, %v1119
          %v1123 = vmax.f32 %v1121, 0.0
          %v1124 = vmax.f32 %v1122, 0.0
          %v1125 = vpack.c.bf16 %v1124, %v1123
          %v1127 = vunpack.c.l.b16 %v1125
          %v1128 = vunpack.c.h.b16 %v1125
          %v1129 = vpack.c.b16 %v1127, %v1127
          %v1130 = vpack.c.b16 %v1128, %v1128
          %1133 = vst [vmem:[%s502] sm:$0xf] %v1129
          %1134 = vst [vmem:[%s502 + $0x4] sm:$0xf] %v1130
        $region86: #{batch_wideresnet_forward.14} parent=73 // pred_fallthru
          _
        %s1135 = smul.u32 2, %s25
        %p1136 = scmp.lt.s32.totalorder %s24, 3
        %s1137 = scalar_select %p1136, %s24, 3
        %p1138 = scmp.lt.s32.totalorder %s1135, 1
        %s1139 = scalar_select %p1138, %s1135, 1
        %s1140 = smul.addr %s1137, 2
        %s1141 = sadd.s32 %s1139, %s1140
        %s1142 = smul.addr %s1141, 4
        %s1143 = scalar_lea.vmem %s8, %s1142
        // Predicated region
        $region87: #{batch_wideresnet_forward.14} parent=73 // pred_check
          %p1144 = pneg %p264
        $region88: #{batch_wideresnet_forward.14} parent=73 // pred_check_branch
          %1146 = sbr.rel (%p1144) target = $region90
        $region89: #{batch_wideresnet_forward.14} parent=73 // pred_region
          %s1147 = smul.u32 2, %s25
        $region90: #{batch_wideresnet_forward.14} parent=73 // pred_fallthru
          _
      $region74: #{batch_wideresnet_forward.14} parent=5 // pred_fallthru
        _
      %p1148 = scmp.le.s32.totalorder 2, %s14
      // Predicated region
      $region91: #{batch_wideresnet_forward.14} parent=5 // pred_check
        %p1149 = pneg %p1148
      $region92: #{batch_wideresnet_forward.14} parent=5 // pred_check_branch
        %1151 = sbr.rel (%p1149) target = $region94
      $region93: #{batch_wideresnet_forward.14} parent=5 // pred_region
        %s1152 = ssub.s32 %s14, 2
        // Predicated region
        $region95: #{batch_wideresnet_forward.14} parent=93 // pred_check
          %p1153 = pneg %p270
        $region96: #{batch_wideresnet_forward.14} parent=93 // pred_check_branch
          %1155 = sbr.rel (%p1153) target = $region98
        $region97: #{batch_wideresnet_forward.14} parent=93 // pred_region
          %s1156 = smul.u32 2, %s28
          %p1157 = scmp.lt.s32.totalorder %s27, 3
          %s1158 = scalar_select %p1157, %s27, 3
          %p1159 = scmp.lt.s32.totalorder %s1156, 1
          %s1160 = scalar_select %p1159, %s1156, 1
          %s1161 = smul.addr %s1158, 2
          %s1162 = sadd.s32 %s1160, %s1161
          %s1163 = smul.addr %s1162, 4
          %s1164 = scalar_lea.vmem %s8, %s1163
        $region98: #{batch_wideresnet_forward.14} parent=93 // pred_fallthru
          _
      $region94: #{batch_wideresnet_forward.14} parent=5 // pred_fallthru
        _
    $region6: #{batch_wideresnet_forward.14} parent=1 // loop_footer
      %s18 = sadd.s32 1, %s14
    $region7: #{batch_wideresnet_forward.14} parent=1 // loop_footer_branch
      %13 = sbr.rel target = $region3
    $region8: #{batch_wideresnet_forward.14} parent=1 // loop_exit
      _

// kernel: batch_wideresnet_forward.16
$region0: #{batch_wideresnet_forward.16}
  #allocation0 [shape = 'u32[]', space=smem, size = 0x4, offset = 0x4, fixed_abs, tag = 'smem constant byte address 0x4 - core index']
  #allocation1 [shape = 'u32[144,128]{1,0:T(1,128)}', space=vmem, size = 0x12000, scoped, tag = 'internal scratch']
  #allocation2 [shape = 'f32[16,128]{1,0:T(8,128)}', space=vmem, size = 0x2000, scoped, tag = 'scratch operand']
  %s0 = inlined_call_operand.vmem [shape: bf16[4,16,128], index: 0, kind: input, shape index: {}]
  %s1 = inlined_call_operand.vmem [shape: f32[4,128,1], index: 1, kind: input, shape index: {}]
  %s2 = inlined_call_operand.vmem [shape: bf16[128,128], index: 2, kind: input, shape index: {}]
  %s3 = inlined_call_operand.vmem [shape: f32[4,1,128], index: 3, kind: input, shape index: {}]
  %s4 = inlined_call_operand.vmem [shape: f32[4,1,128], index: 4, kind: input, shape index: {}]
  %s5 = inlined_call_operand.vmem [shape: bf16[4,16,128], index: 5, kind: output, shape index: {}]
  %s6 = sld [smem:[#allocation0]]
  $region61: #{batch_wideresnet_forward.16} parent=0
    _
  %s8 = ssub.s32 1, %s6
  %s9 = scalar_select 0, %s8, %s6
  loop: start=0, step=1, limit=6
  $region2: #{batch_wideresnet_forward.16} parent=0 // loop_pre_header
    _
  $region3: #{batch_wideresnet_forward.16} parent=0 // loop_header
    %s11 = sphi 0, %s15
    %p12 = scmp.ge.s32.totalorder %s11, 6
    %s18 = sphi 0, %s37
    %s19 = sphi 0, %s33
    %s20 = sphi 0, %s29
    %s21 = sphi 0, %s18
    %s22 = sphi 0, %s19
    %s23 = sphi 0, %s20
    %s24 = sphi 0, %s21
    %s25 = sphi 0, %s22
    %s26 = sphi 0, %s23
    %s44 = sphi 0, %s46
    %s47 = sphi 0, %s44
    %s48 = sphi 0, %s47
    %s64 = sphi 0, %s48
    %s72 = sphi 0, %s74
    %s75 = sphi 0, %s72
    %s76 = sphi 0, %s75
    %s92 = sphi 0, %s76
    %s98 = sphi 0, %s100
    %s101 = sphi 0, %s98
    %s102 = sphi 0, %s101
    %s118 = sphi 0, %s102
    %s124 = sphi 0, %s126
    %s127 = sphi 0, %s124
    %s128 = sphi 0, %s127
    %s144 = sphi 0, %s128
    %s150 = sphi 0, %s152
    %s153 = sphi 0, %s150
    %s154 = sphi 0, %s153
    %s170 = sphi 0, %s154
    %s178 = sphi 0, %s180
    %s181 = sphi 0, %s178
    %s182 = sphi 0, %s181
    %s198 = sphi 0, %s182
  $region4: #{batch_wideresnet_forward.16} parent=0 // loop_header_branch
    %14 = sbr.rel (%p12) target = $region8
  $region5: #{batch_wideresnet_forward.16} parent=0 // loop_body
    %s16 = ssub.s32 %s11, 1
    %s17 = ssub.s32 %s11, 2
    %s27 = sadd.s32 1, %s20
    %p28 = scmp.ge.s32.totalorder %s27, 1
    %s29 = scalar_select %p28, 0, %s27
    %s30 = sadd.s32 1, %s19
    %s31 = scalar_select %p28, %s30, %s19
    %p32 = scmp.ge.s32.totalorder %s31, 1
    %s33 = scalar_select %p32, 0, %s31
    %s34 = sadd.s32 1, %s18
    %s35 = scalar_select %p32, %s34, %s18
    %p36 = scmp.ge.s32.totalorder %s35, 4
    %s37 = scalar_select %p36, 0, %s35
    %s38 = ssub.s32 %s18, %s37
    %s39 = ssub.s32 %s19, %s33
    %s40 = sor.u32 %s38, %s39
    %s41 = ssub.s32 %s20, %s29
    %s42 = sor.u32 %s40, %s41
    %p43 = scmp.eq.s32.totalorder %s42, 0
    %s45 = sadd.s32 %s44, 1
    %s46 = scalar_select %p43, %s44, %s45
    %p49 = pneg %p43
    %p50 = scmp.eq.s32.totalorder %s11, 3
    %p51 = por %p49, %p50
    %p52 = scmp.ne.s32.totalorder %s44, %s47
    %p53 = scmp.eq.s32.totalorder %s11, 0
    %p54 = por %p52, %p53
    %p55 = scmp.ne.s32.totalorder %s44, %s47
    %p56 = scmp.eq.s32.totalorder %s16, 3
    %p57 = por %p55, %p56
    %p58 = scmp.ne.s32.totalorder %s47, %s48
    %p59 = scmp.eq.s32.totalorder %s16, 0
    %p60 = por %p58, %p59
    %p61 = scmp.ne.s32.totalorder %s47, %s48
    %p62 = scmp.eq.s32.totalorder %s17, 3
    %p63 = por %p61, %p62
    %p65 = scmp.ne.s32.totalorder %s48, %s64
    %p66 = scmp.eq.s32.totalorder %s17, 0
    %p67 = por %p65, %p66
    %s68 = ssub.s32 %s18, %s37
    %s69 = ssub.s32 %s20, %s29
    %s70 = sor.u32 %s68, %s69
    %p71 = scmp.eq.s32.totalorder %s70, 0
    %s73 = sadd.s32 %s72, 1
    %s74 = scalar_select %p71, %s72, %s73
    %p77 = pneg %p71
    %p78 = scmp.eq.s32.totalorder %s11, 3
    %p79 = por %p77, %p78
    %p80 = scmp.ne.s32.totalorder %s72, %s75
    %p81 = scmp.eq.s32.totalorder %s11, 0
    %p82 = por %p80, %p81
    %p83 = scmp.ne.s32.totalorder %s72, %s75
    %p84 = scmp.eq.s32.totalorder %s16, 3
    %p85 = por %p83, %p84
    %p86 = scmp.ne.s32.totalorder %s75, %s76
    %p87 = scmp.eq.s32.totalorder %s16, 0
    %p88 = por %p86, %p87
    %p89 = scmp.ne.s32.totalorder %s75, %s76
    %p90 = scmp.eq.s32.totalorder %s17, 3
    %p91 = por %p89, %p90
    %p93 = scmp.ne.s32.totalorder %s76, %s92
    %p94 = scmp.eq.s32.totalorder %s17, 0
    %p95 = por %p93, %p94
    %s96 = ssub.s32 %s20, %s29
    %p97 = scmp.eq.s32.totalorder %s96, 0
    %s99 = sadd.s32 %s98, 1
    %s100 = scalar_select %p97, %s98, %s99
    %p103 = pneg %p97
    %p104 = scmp.eq.s32.totalorder %s11, 3
    %p105 = por %p103, %p104
    %p106 = scmp.ne.s32.totalorder %s98, %s101
    %p107 = scmp.eq.s32.totalorder %s11, 0
    %p108 = por %p106, %p107
    %p109 = scmp.ne.s32.totalorder %s98, %s101
    %p110 = scmp.eq.s32.totalorder %s16, 3
    %p111 = por %p109, %p110
    %p112 = scmp.ne.s32.totalorder %s101, %s102
    %p113 = scmp.eq.s32.totalorder %s16, 0
    %p114 = por %p112, %p113
    %p115 = scmp.ne.s32.totalorder %s101, %s102
    %p116 = scmp.eq.s32.totalorder %s17, 3
    %p117 = por %p115, %p116
    %p119 = scmp.ne.s32.totalorder %s102, %s118
    %p120 = scmp.eq.s32.totalorder %s17, 0
    %p121 = por %p119, %p120
    %s122 = ssub.s32 %s18, %s37
    %p123 = scmp.eq.s32.totalorder %s122, 0
    %s125 = sadd.s32 %s124, 1
    %s126 = scalar_select %p123, %s124, %s125
    %p129 = pneg %p123
    %p130 = scmp.eq.s32.totalorder %s11, 3
    %p131 = por %p129, %p130
    %p132 = scmp.ne.s32.totalorder %s124, %s127
    %p133 = scmp.eq.s32.totalorder %s11, 0
    %p134 = por %p132, %p133
    %p135 = scmp.ne.s32.totalorder %s124, %s127
    %p136 = scmp.eq.s32.totalorder %s16, 3
    %p137 = por %p135, %p136
    %p138 = scmp.ne.s32.totalorder %s127, %s128
    %p139 = scmp.eq.s32.totalorder %s16, 0
    %p140 = por %p138, %p139
    %p141 = scmp.ne.s32.totalorder %s127, %s128
    %p142 = scmp.eq.s32.totalorder %s17, 3
    %p143 = por %p141, %p142
    %p145 = scmp.ne.s32.totalorder %s128, %s144
    %p146 = scmp.eq.s32.totalorder %s17, 0
    %p147 = por %p145, %p146
    %s148 = ssub.s32 %s18, %s37
    %p149 = scmp.eq.s32.totalorder %s148, 0
    %s151 = sadd.s32 %s150, 1
    %s152 = scalar_select %p149, %s150, %s151
    %p155 = pneg %p149
    %p156 = scmp.eq.s32.totalorder %s11, 3
    %p157 = por %p155, %p156
    %p158 = scmp.ne.s32.totalorder %s150, %s153
    %p159 = scmp.eq.s32.totalorder %s11, 0
    %p160 = por %p158, %p159
    %p161 = scmp.ne.s32.totalorder %s150, %s153
    %p162 = scmp.eq.s32.totalorder %s16, 3
    %p163 = por %p161, %p162
    %p164 = scmp.ne.s32.totalorder %s153, %s154
    %p165 = scmp.eq.s32.totalorder %s16, 0
    %p166 = por %p164, %p165
    %p167 = scmp.ne.s32.totalorder %s153, %s154
    %p168 = scmp.eq.s32.totalorder %s17, 3
    %p169 = por %p167, %p168
    %p171 = scmp.ne.s32.totalorder %s154, %s170
    %p172 = scmp.eq.s32.totalorder %s17, 0
    %p173 = por %p171, %p172
    %s174 = ssub.s32 %s18, %s37
    %s175 = ssub.s32 %s19, %s33
    %s176 = sor.u32 %s174, %s175
    %p177 = scmp.eq.s32.totalorder %s176, 0
    %s179 = sadd.s32 %s178, 1
    %s180 = scalar_select %p177, %s178, %s179
    %p183 = pneg %p177
    %p184 = scmp.eq.s32.totalorder %s11, 3
    %p185 = por %p183, %p184
    %p186 = scmp.ne.s32.totalorder %s178, %s181
    %p187 = scmp.eq.s32.totalorder %s11, 0
    %p188 = por %p186, %p187
    %p189 = scmp.ne.s32.totalorder %s178, %s181
    %p190 = scmp.eq.s32.totalorder %s16, 3
    %p191 = por %p189, %p190
    %p192 = scmp.ne.s32.totalorder %s181, %s182
    %p193 = scmp.eq.s32.totalorder %s16, 0
    %p194 = por %p192, %p193
    %p195 = scmp.ne.s32.totalorder %s181, %s182
    %p196 = scmp.eq.s32.totalorder %s17, 3
    %p197 = por %p195, %p196
    %p199 = scmp.ne.s32.totalorder %s182, %s198
    %p200 = scmp.eq.s32.totalorder %s17, 0
    %p201 = por %p199, %p200
    %p202 = scmp.le.s32.totalorder 1, %s11
    %p203 = scmp.lt.s32.totalorder %s11, 5
    %p204 = pnand %p202, %p203
    %p205 = pneg %p204
    // Predicated region
    $region9: #{batch_wideresnet_forward.16} parent=5 // pred_check
      _
    $region10: #{batch_wideresnet_forward.16} parent=5 // pred_check_branch
      %207 = sbr.rel (%p204) target = $region12
    $region11: #{batch_wideresnet_forward.16} parent=5 // pred_region
      %s208 = ssub.s32 %s11, 1
      // Predicated region
      $region13: #{batch_wideresnet_forward.16} parent=11 // pred_check
        %p209 = pneg %p114
      $region14: #{batch_wideresnet_forward.16} parent=11 // pred_check_branch
        %211 = sbr.rel (%p209) target = $region16
      $region15: #{batch_wideresnet_forward.16} parent=11 // pred_region
        %s212 = smul.u32 16, %s23
        %p213 = scmp.lt.s32.totalorder %s212, 15
        %s214 = scalar_select %p213, %s212, 15
        %s215 = smul.addr %s214, 4
        %s216 = scalar_lea.vmem %s2, %s215
        %s217 = smul.u32 16, %s23
      $region16: #{batch_wideresnet_forward.16} parent=11 // pred_fallthru
        _
    $region12: #{batch_wideresnet_forward.16} parent=5 // pred_fallthru
      _
    %p218 = scmp.lt.s32.totalorder %s11, 4
    // Predicated region
    $region17: #{batch_wideresnet_forward.16} parent=5 // pred_check
      %p219 = pneg %p218
    $region18: #{batch_wideresnet_forward.16} parent=5 // pred_check_branch
      %221 = sbr.rel (%p219) target = $region20
    $region19: #{batch_wideresnet_forward.16} parent=5 // pred_region
      // Predicated region
      $region21: #{batch_wideresnet_forward.16} parent=19 // pred_check
        %p222 = pneg %p54
      $region22: #{batch_wideresnet_forward.16} parent=19 // pred_check_branch
        %224 = sbr.rel (%p222) target = $region24
      $region23: #{batch_wideresnet_forward.16} parent=19 // pred_region
        %s225 = smul.u32 2, %s19
        %p226 = scmp.lt.s32.totalorder %s18, 3
        %s227 = scalar_select %p226, %s18, 3
        %p228 = scmp.lt.s32.totalorder %s225, 1
        %s229 = scalar_select %p228, %s225, 1
        %p230 = scmp.lt.s32.totalorder %s20, 0
        %s231 = scalar_select %p230, %s20, 0
        %s232 = sadd.s32 %s231, %s229
        %s233 = smul.addr %s227, 2
        %s234 = sadd.s32 %s232, %s233
        %s235 = smul.addr %s234, 4
        %s236 = scalar_lea.vmem %s0, %s235
        %s237 = smul.u32 2, %s19
      $region24: #{batch_wideresnet_forward.16} parent=19 // pred_fallthru
        _
      // Predicated region
      $region25: #{batch_wideresnet_forward.16} parent=19 // pred_check
        %p238 = pneg %p82
      $region26: #{batch_wideresnet_forward.16} parent=19 // pred_check_branch
        %240 = sbr.rel (%p238) target = $region28
      $region27: #{batch_wideresnet_forward.16} parent=19 // pred_region
        %s241 = smul.u32 16, %s20
        %p242 = scmp.lt.s32.totalorder %s18, 3
        %s243 = scalar_select %p242, %s18, 3
        %p244 = scmp.lt.s32.totalorder %s241, 15
        %s245 = scalar_select %p244, %s241, 15
        %s246 = smul.addr %s243, 16
        %s247 = sadd.s32 %s245, %s246
        %s248 = smul.addr %s247, 8
        %s249 = scalar_lea.vmem %s1, %s248
        %s250 = smul.u32 16, %s20
      $region28: #{batch_wideresnet_forward.16} parent=19 // pred_fallthru
        _
      // Predicated region
      $region29: #{batch_wideresnet_forward.16} parent=19 // pred_check
        %p251 = pneg %p134
      $region30: #{batch_wideresnet_forward.16} parent=19 // pred_check_branch
        %253 = sbr.rel (%p251) target = $region32
      $region31: #{batch_wideresnet_forward.16} parent=19 // pred_region
        %p254 = scmp.lt.s32.totalorder %s18, 3
        %s255 = scalar_select %p254, %s18, 3
        %s256 = scalar_lea.vmem %s3, %s255
      $region32: #{batch_wideresnet_forward.16} parent=19 // pred_fallthru
        _
      // Predicated region
      $region33: #{batch_wideresnet_forward.16} parent=19 // pred_check
        %p257 = pneg %p160
      $region34: #{batch_wideresnet_forward.16} parent=19 // pred_check_branch
        %259 = sbr.rel (%p257) target = $region36
      $region35: #{batch_wideresnet_forward.16} parent=19 // pred_region
        %p260 = scmp.lt.s32.totalorder %s18, 3
        %s261 = scalar_select %p260, %s18, 3
        %s262 = scalar_lea.vmem %s4, %s261
      $region36: #{batch_wideresnet_forward.16} parent=19 // pred_fallthru
        _
    $region20: #{batch_wideresnet_forward.16} parent=5 // pred_fallthru
      _
    %p263 = scmp.le.s32.totalorder 1, %s11
    %p264 = scmp.lt.s32.totalorder %s11, 5
    %p265 = pnand %p263, %p264
    %p266 = pneg %p265
    // Predicated region
    $region37: #{batch_wideresnet_forward.16} parent=5 // pred_check
      _
    $region38: #{batch_wideresnet_forward.16} parent=5 // pred_check_branch
      %268 = sbr.rel (%p265) target = $region40
    $region39: #{batch_wideresnet_forward.16} parent=5 // pred_region
      %s269 = ssub.s32 %s11, 1
      %s270 = smul.u32 2, %s22
      %p271 = scmp.lt.s32.totalorder %s21, 3
      %s272 = scalar_select %p271, %s21, 3
      %p273 = scmp.lt.s32.totalorder %s270, 1
      %s274 = scalar_select %p273, %s270, 1
      %p275 = scmp.lt.s32.totalorder %s23, 0
      %s276 = scalar_select %p275, %s23, 0
      %s277 = sadd.s32 %s276, %s274
      %s278 = smul.addr %s272, 2
      %s279 = sadd.s32 %s277, %s278
      %s280 = smul.addr %s279, 4
      %s281 = scalar_lea.vmem %s0, %s280
      %p282 = pneg %p60
      %p283 = pneg %p57
      %s284 = smul.u32 16, %s23
      %p285 = scmp.lt.s32.totalorder %s21, 3
      %s286 = scalar_select %p285, %s21, 3
      %p287 = scmp.lt.s32.totalorder %s284, 15
      %s288 = scalar_select %p287, %s284, 15
      %s289 = smul.addr %s286, 16
      %s290 = sadd.s32 %s288, %s289
      %s291 = smul.addr %s290, 8
      %s292 = scalar_lea.vmem %s1, %s291
      %p293 = pneg %p88
      %p294 = pneg %p85
      %s295 = smul.u32 16, %s23
      %p296 = scmp.lt.s32.totalorder %s295, 15
      %s297 = scalar_select %p296, %s295, 15
      %s298 = smul.addr %s297, 4
      %s299 = scalar_lea.vmem %s2, %s298
      %p300 = pneg %p114
      %p301 = pneg %p111
      %p302 = scmp.lt.s32.totalorder %s21, 3
      %s303 = scalar_select %p302, %s21, 3
      %s304 = scalar_lea.vmem %s3, %s303
      %p305 = pneg %p140
      %p306 = pneg %p137
      %p307 = scmp.lt.s32.totalorder %s21, 3
      %s308 = scalar_select %p307, %s21, 3
      %s309 = scalar_lea.vmem %s4, %s308
      %p310 = pneg %p166
      %p311 = pneg %p163
      %p312 = pneg %p194
      %p313 = pneg %p191
      %s314 = smul.u32 2, %s22
      %p315 = scmp.lt.s32.totalorder %s21, 3
      %s316 = scalar_select %p315, %s21, 3
      %p317 = scmp.lt.s32.totalorder %s314, 1
      %s318 = scalar_select %p317, %s314, 1
      %s319 = smul.addr %s316, 2
      %s320 = sadd.s32 %s318, %s319
      %s321 = smul.addr %s320, 4
      %s322 = scalar_lea.vmem %s5, %s321
      %s323 = smul.u32 2, %s22
      %p324 = scmp.lt.s32.totalorder %s21, 3
      %s325 = scalar_select %p324, %s21, 3
      %p326 = scmp.lt.s32.totalorder %s323, 1
      %s327 = scalar_select %p326, %s323, 1
      %p328 = scmp.lt.s32.totalorder %s23, 0
      %s329 = scalar_select %p328, %s23, 0
      %s330 = sadd.s32 %s329, %s327
      %s331 = smul.addr %s325, 2
      %s332 = sadd.s32 %s330, %s331
      %s333 = smul.addr %s332, 4
      %s334 = scalar_lea.vmem %s0, %s333
      %s335 = smul.u32 2, %s22
      %s336 = smul.u32 16, %s23
      %p337 = scmp.lt.s32.totalorder %s21, 3
      %s338 = scalar_select %p337, %s21, 3
      %p339 = scmp.lt.s32.totalorder %s336, 15
      %s340 = scalar_select %p339, %s336, 15
      %s341 = smul.addr %s338, 16
      %s342 = sadd.s32 %s340, %s341
      %s343 = smul.addr %s342, 8
      %s344 = scalar_lea.vmem %s1, %s343
      %s345 = smul.u32 16, %s23
      %s346 = smul.u32 16, %s23
      %p347 = scmp.lt.s32.totalorder %s346, 15
      %s348 = scalar_select %p347, %s346, 15
      %s349 = smul.addr %s348, 4
      %s350 = scalar_lea.vmem %s2, %s349
      %s351 = smul.u32 16, %s23
      %p352 = scmp.lt.s32.totalorder %s21, 3
      %s353 = scalar_select %p352, %s21, 3
      %s354 = scalar_lea.vmem %s3, %s353
      %p355 = scmp.lt.s32.totalorder %s21, 3
      %s356 = scalar_select %p355, %s21, 3
      %s357 = scalar_lea.vmem %s4, %s356
      %s358 = smul.u32 2, %s22
      %p359 = scmp.lt.s32.totalorder %s21, 3
      %s360 = scalar_select %p359, %s21, 3
      %p361 = scmp.lt.s32.totalorder %s358, 1
      %s362 = scalar_select %p361, %s358, 1
      %s363 = smul.addr %s360, 2
      %s364 = sadd.s32 %s362, %s363
      %s365 = smul.addr %s364, 4
      %s366 = scalar_lea.vmem %s5, %s365
      %s367 = smul.u32 2, %s22
      %p369 = scmp.eq.s32.totalorder %s23, 0
      // Predicated region
      $region41: #{batch_wideresnet_forward.16} parent=39 // pred_check
        %p370 = pneg %p369
      $region42: #{batch_wideresnet_forward.16} parent=39 // pred_check_branch
        %372 = sbr.rel (%p370) target = $region44
      $region43: #{batch_wideresnet_forward.16} parent=39 // pred_region
        %373 = vst [vmem:[#allocation2] sm:$0xff] 0.0
        %374 = vst [vmem:[#allocation2 + $0x8] sm:$0xff] 0.0
      $region44: #{batch_wideresnet_forward.16} parent=39 // pred_fallthru
        _
      %v375 = vld [vmem:[%s350] sm:$0xf]
      %v376 = vld [vmem:[%s350 + $0x4] sm:$0xf]
      %v377 = vld [vmem:[%s350 + $0x8] sm:$0xf]
      %v378 = vld [vmem:[%s350 + $0xc] sm:$0xf]
      %v379 = vld [vmem:[%s350 + $0x10] sm:$0xf]
      %v380 = vld [vmem:[%s350 + $0x14] sm:$0xf]
      %v381 = vld [vmem:[%s350 + $0x18] sm:$0xf]
      %v382 = vld [vmem:[%s350 + $0x1c] sm:$0xf]
      %v383 = vld [vmem:[%s350 + $0x20] sm:$0xf]
      %v384 = vld [vmem:[%s350 + $0x24] sm:$0xf]
      %v385 = vld [vmem:[%s350 + $0x28] sm:$0xf]
      %v386 = vld [vmem:[%s350 + $0x2c] sm:$0xf]
      %v387 = vld [vmem:[%s350 + $0x30] sm:$0xf]
      %v388 = vld [vmem:[%s350 + $0x34] sm:$0xf]
      %v389 = vld [vmem:[%s350 + $0x38] sm:$0xf]
      %v390 = vld [vmem:[%s350 + $0x3c] sm:$0xf]
      %v391 = vld [vmem:[%s344] sm:$0xff]
      %v392 = vld [vmem:[%s344 + $0x8] sm:$0xff]
      %v393 = vld [vmem:[%s344 + $0x10] sm:$0xff]
      %v394 = vld [vmem:[%s344 + $0x18] sm:$0xff]
      %v395 = vld [vmem:[%s344 + $0x20] sm:$0xff]
      %v396 = vld [vmem:[%s344 + $0x28] sm:$0xff]
      %v397 = vld [vmem:[%s344 + $0x30] sm:$0xff]
      %v398 = vld [vmem:[%s344 + $0x38] sm:$0xff]
      %v399 = vld [vmem:[%s344 + $0x40] sm:$0xff]
      %v400 = vld [vmem:[%s344 + $0x48] sm:$0xff]
      %v401 = vld [vmem:[%s344 + $0x50] sm:$0xff]
      %v402 = vld [vmem:[%s344 + $0x58] sm:$0xff]
      %v403 = vld [vmem:[%s344 + $0x60] sm:$0xff]
      %v404 = vld [vmem:[%s344 + $0x68] sm:$0xff]
      %v405 = vld [vmem:[%s344 + $0x70] sm:$0xff]
      %v406 = vld [vmem:[%s344 + $0x78] sm:$0xff]
      %v407 = vunpack.c.l.bf16 %v375
      %v408 = vunpack.c.l.bf16 %v376
      %v409 = vunpack.c.l.bf16 %v377
      %v410 = vunpack.c.l.bf16 %v378
      %v411 = vunpack.c.l.bf16 %v379
      %v412 = vunpack.c.l.bf16 %v380
      %v413 = vunpack.c.l.bf16 %v381
      %v414 = vunpack.c.l.bf16 %v382
      %v415 = vunpack.c.l.bf16 %v383
      %v416 = vunpack.c.l.bf16 %v384
      %v417 = vunpack.c.l.bf16 %v385
      %v418 = vunpack.c.l.bf16 %v386
      %v419 = vunpack.c.l.bf16 %v387
      %v420 = vunpack.c.l.bf16 %v388
      %v421 = vunpack.c.l.bf16 %v389
      %v422 = vunpack.c.l.bf16 %v390
      %424 = vset.pattern.permute.xlu0 0
      %425 = vperm.xlu0 %424, %v391
      %v426 = vpop.permute.xlu0 %425
      %429 = vset.pattern.permute.xlu0 0
      %430 = vperm.xlu0 %429, %v392
      %v431 = vpop.permute.xlu0 %430
      %434 = vset.pattern.permute.xlu0 0
      %435 = vperm.xlu0 %434, %v393
      %v436 = vpop.permute.xlu0 %435
      %439 = vset.pattern.permute.xlu0 0
      %440 = vperm.xlu0 %439, %v394
      %v441 = vpop.permute.xlu0 %440
      %444 = vset.pattern.permute.xlu0 0
      %445 = vperm.xlu0 %444, %v395
      %v446 = vpop.permute.xlu0 %445
      %449 = vset.pattern.permute.xlu0 0
      %450 = vperm.xlu0 %449, %v396
      %v451 = vpop.permute.xlu0 %450
      %454 = vset.pattern.permute.xlu0 0
      %455 = vperm.xlu0 %454, %v397
      %v456 = vpop.permute.xlu0 %455
      %459 = vset.pattern.permute.xlu0 0
      %460 = vperm.xlu0 %459, %v398
      %v461 = vpop.permute.xlu0 %460
      %464 = vset.pattern.permute.xlu0 0
      %465 = vperm.xlu0 %464, %v399
      %v466 = vpop.permute.xlu0 %465
      %469 = vset.pattern.permute.xlu0 0
      %470 = vperm.xlu0 %469, %v400
      %v471 = vpop.permute.xlu0 %470
      %474 = vset.pattern.permute.xlu0 0
      %475 = vperm.xlu0 %474, %v401
      %v476 = vpop.permute.xlu0 %475
      %479 = vset.pattern.permute.xlu0 0
      %480 = vperm.xlu0 %479, %v402
      %v481 = vpop.permute.xlu0 %480
      %484 = vset.pattern.permute.xlu0 0
      %485 = vperm.xlu0 %484, %v403
      %v486 = vpop.permute.xlu0 %485
      %489 = vset.pattern.permute.xlu0 0
      %490 = vperm.xlu0 %489, %v404
      %v491 = vpop.permute.xlu0 %490
      %494 = vset.pattern.permute.xlu0 0
      %495 = vperm.xlu0 %494, %v405
      %v496 = vpop.permute.xlu0 %495
      %499 = vset.pattern.permute.xlu0 0
      %500 = vperm.xlu0 %499, %v406
      %v501 = vpop.permute.xlu0 %500
      %v503 = vmul.f32 %v407, %v426
      %v504 = vmul.f32 %v408, %v431
      %v505 = vmul.f32 %v409, %v436
      %v506 = vmul.f32 %v410, %v441
      %v507 = vmul.f32 %v411, %v446
      %v508 = vmul.f32 %v412, %v451
      %v509 = vmul.f32 %v413, %v456
      %v510 = vmul.f32 %v414, %v461
      %v511 = vmul.f32 %v415, %v466
      %v512 = vmul.f32 %v416, %v471
      %v513 = vmul.f32 %v417, %v476
      %v514 = vmul.f32 %v418, %v481
      %v515 = vmul.f32 %v419, %v486
      %v516 = vmul.f32 %v420, %v491
      %v517 = vmul.f32 %v421, %v496
      %v518 = vmul.f32 %v422, %v501
      %v519 = vpack.c.bf16 %v504, %v503
      %v520 = vpack.c.bf16 %v506, %v505
      %v521 = vpack.c.bf16 %v508, %v507
      %v522 = vpack.c.bf16 %v510, %v509
      %v523 = vpack.c.bf16 %v512, %v511
      %v524 = vpack.c.bf16 %v514, %v513
      %v525 = vpack.c.bf16 %v516, %v515
      %v526 = vpack.c.bf16 %v518, %v517
      %v527 = vld [vmem:[#allocation2] sm:$0xff]
      %v528 = vld [vmem:[#allocation2 + $0x8] sm:$0xff]
      %v529 = vld [vmem:[%s334] sm:$0xf]
      %v530 = vld [vmem:[%s334 + $0x4] sm:$0xf]
      %v533 = vunpack.c.l.b16 %v529
      %v534 = vunpack.c.l.b16 %v530
      %v535 = vpack.c.b16 %v534, %v533
      %537 = vmatprep.subr.bf16.mxu0 0
      %538 = vmatpush1.bf16.msra.mxu0 %v519
      %539 = vmatprep.subr.bf16.mxu0 0
      %540 = vmatpush1.bf16.msra.mxu0 %v520
      %541 = vmatprep.subr.bf16.mxu0 0
      %542 = vmatpush1.bf16.msra.mxu0 %v521
      %543 = vmatprep.subr.bf16.mxu0 0
      %544 = vmatpush1.bf16.msra.mxu0 %v522
      %545 = vmatprep.subr.bf16.mxu0 0
      %546 = vmatpush1.bf16.msra.mxu0 %v523
      %547 = vmatprep.subr.bf16.mxu0 0
      %548 = vmatpush1.bf16.msra.mxu0 %v524
      %549 = vmatprep.subr.bf16.mxu0 0
      %550 = vmatpush1.bf16.msra.mxu0 %v525
      %551 = vmatprep.subr.bf16.mxu0 0
      %552 = vmatpush1.bf16.msra.mxu0 %v526
      %553 = vmatprep.subr.bf16.mxu0 0
      %554 = vmatpush1.bf16.msra.mxu0 0
      %555 = vmatprep.subr.bf16.mxu0 0
      %556 = vmatpush1.bf16.msra.mxu0 0
      %557 = vmatprep.subr.bf16.mxu0 0
      %558 = vmatpush1.bf16.msra.mxu0 0
      %559 = vmatprep.subr.bf16.mxu0 0
      %560 = vmatpush1.bf16.msra.mxu0 0
      %561 = vmatprep.subr.bf16.mxu0 0
      %562 = vmatpush1.bf16.msra.mxu0 0
      %563 = vmatprep.subr.bf16.mxu0 0
      %564 = vmatpush1.bf16.msra.mxu0 0
      %565 = vmatprep.subr.bf16.mxu0 0
      %566 = vmatpush1.bf16.msra.mxu0 0
      %567 = vmatprep.subr.bf16.mxu0 0
      %568 = vmatpush1.bf16.msra.mxu0 0
      %569 = vmatprep.mubr.bf16.mxu0 0
      %570 = vmatmul.mubr.bf16.gmra.mrb[0].mxu0 %v535
      %v571 = vpop.f32.mrb[0].mxu0
      %v572 = vadd.f32 0.0, %v571
      %v573 = vpop.f32.mrb[0].mxu0
      %v574 = vpop.f32.mrb[0].mxu0
      %v575 = vadd.f32 0.0, %v574
      %v576 = vpop.f32.mrb[0].mxu0
      %577 = vdwg.mxu0
      %v578 = vadd.f32 %v527, %v572
      %v579 = vadd.f32 %v528, %v575
      %580 = vst [vmem:[#allocation2] sm:$0xff] %v578
      %581 = vst [vmem:[#allocation2 + $0x8] sm:$0xff] %v579
      // Predicated region
      $region45: #{batch_wideresnet_forward.16} parent=39 // pred_check
        %p582 = pneg %p369
      $region46: #{batch_wideresnet_forward.16} parent=39 // pred_check_branch
        %584 = sbr.rel (%p582) target = $region48
      $region47: #{batch_wideresnet_forward.16} parent=39 // pred_region
        %v585 = vld [vmem:[#allocation2] sm:$0xff]
        %v586 = vld [vmem:[#allocation2 + $0x8] sm:$0xff]
        %v587 = vld [vmem:[%s354] sm:$0x1]
        %v589 = vlaneseq
        %v590 = vshrl.u32 %v589, 7
        %v591 = vsub.s32 0, %v590
        %v592 = vrot.slane %v587, %v591
        %v594 = vmul.f32 %v585, %v592
        %v595 = vmul.f32 %v586, %v592
        %v596 = vld [vmem:[%s357] sm:$0x1]
        %v598 = vlaneseq
        %v599 = vshrl.u32 %v598, 7
        %v600 = vsub.s32 0, %v599
        %v601 = vrot.slane %v596, %v600
        %v603 = vadd.f32 %v594, %v601
        %v604 = vadd.f32 %v595, %v601
        %v605 = vpack.c.bf16 %v604, %v603
        %v607 = vunpack.c.l.b16 %v605
        %v608 = vunpack.c.h.b16 %v605
        %v609 = vpack.c.b16 %v607, %v607
        %v610 = vpack.c.b16 %v608, %v608
        %613 = vst [vmem:[%s366] sm:$0xf] %v609
        %614 = vst [vmem:[%s366 + $0x4] sm:$0xf] %v610
      $region48: #{batch_wideresnet_forward.16} parent=39 // pred_fallthru
        _
      %s615 = smul.u32 2, %s22
      %p616 = scmp.lt.s32.totalorder %s21, 3
      %s617 = scalar_select %p616, %s21, 3
      %p618 = scmp.lt.s32.totalorder %s615, 1
      %s619 = scalar_select %p618, %s615, 1
      %s620 = smul.addr %s617, 2
      %s621 = sadd.s32 %s619, %s620
      %s622 = smul.addr %s621, 4
      %s623 = scalar_lea.vmem %s5, %s622
      // Predicated region
      $region49: #{batch_wideresnet_forward.16} parent=39 // pred_check
        %p624 = pneg %p191
      $region50: #{batch_wideresnet_forward.16} parent=39 // pred_check_branch
        %626 = sbr.rel (%p624) target = $region52
      $region51: #{batch_wideresnet_forward.16} parent=39 // pred_region
        %s627 = smul.u32 2, %s22
      $region52: #{batch_wideresnet_forward.16} parent=39 // pred_fallthru
        _
    $region40: #{batch_wideresnet_forward.16} parent=5 // pred_fallthru
      _
    %p628 = scmp.le.s32.totalorder 2, %s11
    // Predicated region
    $region53: #{batch_wideresnet_forward.16} parent=5 // pred_check
      %p629 = pneg %p628
    $region54: #{batch_wideresnet_forward.16} parent=5 // pred_check_branch
      %631 = sbr.rel (%p629) target = $region56
    $region55: #{batch_wideresnet_forward.16} parent=5 // pred_region
      %s632 = ssub.s32 %s11, 2
      // Predicated region
      $region57: #{batch_wideresnet_forward.16} parent=55 // pred_check
        %p633 = pneg %p197
      $region58: #{batch_wideresnet_forward.16} parent=55 // pred_check_branch
        %635 = sbr.rel (%p633) target = $region60
      $region59: #{batch_wideresnet_forward.16} parent=55 // pred_region
        %s636 = smul.u32 2, %s25
        %p637 = scmp.lt.s32.totalorder %s24, 3
        %s638 = scalar_select %p637, %s24, 3
        %p639 = scmp.lt.s32.totalorder %s636, 1
        %s640 = scalar_select %p639, %s636, 1
        %s641 = smul.addr %s638, 2
        %s642 = sadd.s32 %s640, %s641
        %s643 = smul.addr %s642, 4
        %s644 = scalar_lea.vmem %s5, %s643
      $region60: #{batch_wideresnet_forward.16} parent=55 // pred_fallthru
        _
    $region56: #{batch_wideresnet_forward.16} parent=5 // pred_fallthru
      _
  $region6: #{batch_wideresnet_forward.16} parent=0 // loop_footer
    %s15 = sadd.s32 1, %s11
  $region7: #{batch_wideresnet_forward.16} parent=0 // loop_footer_branch
    %10 = sbr.rel target = $region3
  $region8: #{batch_wideresnet_forward.16} parent=0 // loop_exit
    _

// kernel: batch_wideresnet_forward.21
$region0: #{batch_wideresnet_forward.21}
  #allocation0 [shape = 'u32[]', space=smem, size = 0x4, offset = 0x4, fixed_abs, tag = 'smem constant byte address 0x4 - core index']
  #allocation1 [shape = 'u32[144,128]{1,0:T(1,128)}', space=vmem, size = 0x12000, scoped, tag = 'internal scratch']
  #allocation2 [shape = 'f32[16,128]{1,0:T(8,128)}', space=vmem, size = 0x2000, scoped, tag = 'scratch operand']
  %s0 = inlined_call_operand.vmem [shape: bf16[4,16,128], index: 0, kind: input, shape index: {}]
  %s1 = inlined_call_operand.vmem [shape: f32[4,128,1], index: 1, kind: input, shape index: {}]
  %s2 = inlined_call_operand.vmem [shape: bf16[128,128], index: 2, kind: input, shape index: {}]
  %s3 = inlined_call_operand.vmem [shape: f32[4,1,128], index: 3, kind: input, shape index: {}]
  %s4 = inlined_call_operand.vmem [shape: f32[4,1,128], index: 4, kind: input, shape index: {}]
  %s5 = inlined_call_operand.vmem [shape: f32[4,16,128], index: 5, kind: output, shape index: {}]
  %s6 = sld [smem:[#allocation0]]
  $region61: #{batch_wideresnet_forward.21} parent=0
    _
  %s8 = ssub.s32 1, %s6
  %s9 = scalar_select 0, %s8, %s6
  loop: start=0, step=1, limit=6
  $region2: #{batch_wideresnet_forward.21} parent=0 // loop_pre_header
    _
  $region3: #{batch_wideresnet_forward.21} parent=0 // loop_header
    %s11 = sphi 0, %s15
    %p12 = scmp.ge.s32.totalorder %s11, 6
    %s18 = sphi 0, %s37
    %s19 = sphi 0, %s33
    %s20 = sphi 0, %s29
    %s21 = sphi 0, %s18
    %s22 = sphi 0, %s19
    %s23 = sphi 0, %s20
    %s24 = sphi 0, %s21
    %s25 = sphi 0, %s22
    %s26 = sphi 0, %s23
    %s44 = sphi 0, %s46
    %s47 = sphi 0, %s44
    %s48 = sphi 0, %s47
    %s64 = sphi 0, %s48
    %s72 = sphi 0, %s74
    %s75 = sphi 0, %s72
    %s76 = sphi 0, %s75
    %s92 = sphi 0, %s76
    %s98 = sphi 0, %s100
    %s101 = sphi 0, %s98
    %s102 = sphi 0, %s101
    %s118 = sphi 0, %s102
    %s124 = sphi 0, %s126
    %s127 = sphi 0, %s124
    %s128 = sphi 0, %s127
    %s144 = sphi 0, %s128
    %s150 = sphi 0, %s152
    %s153 = sphi 0, %s150
    %s154 = sphi 0, %s153
    %s170 = sphi 0, %s154
    %s178 = sphi 0, %s180
    %s181 = sphi 0, %s178
    %s182 = sphi 0, %s181
    %s198 = sphi 0, %s182
  $region4: #{batch_wideresnet_forward.21} parent=0 // loop_header_branch
    %14 = sbr.rel (%p12) target = $region8
  $region5: #{batch_wideresnet_forward.21} parent=0 // loop_body
    %s16 = ssub.s32 %s11, 1
    %s17 = ssub.s32 %s11, 2
    %s27 = sadd.s32 1, %s20
    %p28 = scmp.ge.s32.totalorder %s27, 1
    %s29 = scalar_select %p28, 0, %s27
    %s30 = sadd.s32 1, %s19
    %s31 = scalar_select %p28, %s30, %s19
    %p32 = scmp.ge.s32.totalorder %s31, 1
    %s33 = scalar_select %p32, 0, %s31
    %s34 = sadd.s32 1, %s18
    %s35 = scalar_select %p32, %s34, %s18
    %p36 = scmp.ge.s32.totalorder %s35, 4
    %s37 = scalar_select %p36, 0, %s35
    %s38 = ssub.s32 %s18, %s37
    %s39 = ssub.s32 %s19, %s33
    %s40 = sor.u32 %s38, %s39
    %s41 = ssub.s32 %s20, %s29
    %s42 = sor.u32 %s40, %s41
    %p43 = scmp.eq.s32.totalorder %s42, 0
    %s45 = sadd.s32 %s44, 1
    %s46 = scalar_select %p43, %s44, %s45
    %p49 = pneg %p43
    %p50 = scmp.eq.s32.totalorder %s11, 3
    %p51 = por %p49, %p50
    %p52 = scmp.ne.s32.totalorder %s44, %s47
    %p53 = scmp.eq.s32.totalorder %s11, 0
    %p54 = por %p52, %p53
    %p55 = scmp.ne.s32.totalorder %s44, %s47
    %p56 = scmp.eq.s32.totalorder %s16, 3
    %p57 = por %p55, %p56
    %p58 = scmp.ne.s32.totalorder %s47, %s48
    %p59 = scmp.eq.s32.totalorder %s16, 0
    %p60 = por %p58, %p59
    %p61 = scmp.ne.s32.totalorder %s47, %s48
    %p62 = scmp.eq.s32.totalorder %s17, 3
    %p63 = por %p61, %p62
    %p65 = scmp.ne.s32.totalorder %s48, %s64
    %p66 = scmp.eq.s32.totalorder %s17, 0
    %p67 = por %p65, %p66
    %s68 = ssub.s32 %s18, %s37
    %s69 = ssub.s32 %s20, %s29
    %s70 = sor.u32 %s68, %s69
    %p71 = scmp.eq.s32.totalorder %s70, 0
    %s73 = sadd.s32 %s72, 1
    %s74 = scalar_select %p71, %s72, %s73
    %p77 = pneg %p71
    %p78 = scmp.eq.s32.totalorder %s11, 3
    %p79 = por %p77, %p78
    %p80 = scmp.ne.s32.totalorder %s72, %s75
    %p81 = scmp.eq.s32.totalorder %s11, 0
    %p82 = por %p80, %p81
    %p83 = scmp.ne.s32.totalorder %s72, %s75
    %p84 = scmp.eq.s32.totalorder %s16, 3
    %p85 = por %p83, %p84
    %p86 = scmp.ne.s32.totalorder %s75, %s76
    %p87 = scmp.eq.s32.totalorder %s16, 0
    %p88 = por %p86, %p87
    %p89 = scmp.ne.s32.totalorder %s75, %s76
    %p90 = scmp.eq.s32.totalorder %s17, 3
    %p91 = por %p89, %p90
    %p93 = scmp.ne.s32.totalorder %s76, %s92
    %p94 = scmp.eq.s32.totalorder %s17, 0
    %p95 = por %p93, %p94
    %s96 = ssub.s32 %s20, %s29
    %p97 = scmp.eq.s32.totalorder %s96, 0
    %s99 = sadd.s32 %s98, 1
    %s100 = scalar_select %p97, %s98, %s99
    %p103 = pneg %p97
    %p104 = scmp.eq.s32.totalorder %s11, 3
    %p105 = por %p103, %p104
    %p106 = scmp.ne.s32.totalorder %s98, %s101
    %p107 = scmp.eq.s32.totalorder %s11, 0
    %p108 = por %p106, %p107
    %p109 = scmp.ne.s32.totalorder %s98, %s101
    %p110 = scmp.eq.s32.totalorder %s16, 3
    %p111 = por %p109, %p110
    %p112 = scmp.ne.s32.totalorder %s101, %s102
    %p113 = scmp.eq.s32.totalorder %s16, 0
    %p114 = por %p112, %p113
    %p115 = scmp.ne.s32.totalorder %s101, %s102
    %p116 = scmp.eq.s32.totalorder %s17, 3
    %p117 = por %p115, %p116
    %p119 = scmp.ne.s32.totalorder %s102, %s118
    %p120 = scmp.eq.s32.totalorder %s17, 0
    %p121 = por %p119, %p120
    %s122 = ssub.s32 %s18, %s37
    %p123 = scmp.eq.s32.totalorder %s122, 0
    %s125 = sadd.s32 %s124, 1
    %s126 = scalar_select %p123, %s124, %s125
    %p129 = pneg %p123
    %p130 = scmp.eq.s32.totalorder %s11, 3
    %p131 = por %p129, %p130
    %p132 = scmp.ne.s32.totalorder %s124, %s127
    %p133 = scmp.eq.s32.totalorder %s11, 0
    %p134 = por %p132, %p133
    %p135 = scmp.ne.s32.totalorder %s124, %s127
    %p136 = scmp.eq.s32.totalorder %s16, 3
    %p137 = por %p135, %p136
    %p138 = scmp.ne.s32.totalorder %s127, %s128
    %p139 = scmp.eq.s32.totalorder %s16, 0
    %p140 = por %p138, %p139
    %p141 = scmp.ne.s32.totalorder %s127, %s128
    %p142 = scmp.eq.s32.totalorder %s17, 3
    %p143 = por %p141, %p142
    %p145 = scmp.ne.s32.totalorder %s128, %s144
    %p146 = scmp.eq.s32.totalorder %s17, 0
    %p147 = por %p145, %p146
    %s148 = ssub.s32 %s18, %s37
    %p149 = scmp.eq.s32.totalorder %s148, 0
    %s151 = sadd.s32 %s150, 1
    %s152 = scalar_select %p149, %s150, %s151
    %p155 = pneg %p149
    %p156 = scmp.eq.s32.totalorder %s11, 3
    %p157 = por %p155, %p156
    %p158 = scmp.ne.s32.totalorder %s150, %s153
    %p159 = scmp.eq.s32.totalorder %s11, 0
    %p160 = por %p158, %p159
    %p161 = scmp.ne.s32.totalorder %s150, %s153
    %p162 = scmp.eq.s32.totalorder %s16, 3
    %p163 = por %p161, %p162
    %p164 = scmp.ne.s32.totalorder %s153, %s154
    %p165 = scmp.eq.s32.totalorder %s16, 0
    %p166 = por %p164, %p165
    %p167 = scmp.ne.s32.totalorder %s153, %s154
    %p168 = scmp.eq.s32.totalorder %s17, 3
    %p169 = por %p167, %p168
    %p171 = scmp.ne.s32.totalorder %s154, %s170
    %p172 = scmp.eq.s32.totalorder %s17, 0
    %p173 = por %p171, %p172
    %s174 = ssub.s32 %s18, %s37
    %s175 = ssub.s32 %s19, %s33
    %s176 = sor.u32 %s174, %s175
    %p177 = scmp.eq.s32.totalorder %s176, 0
    %s179 = sadd.s32 %s178, 1
    %s180 = scalar_select %p177, %s178, %s179
    %p183 = pneg %p177
    %p184 = scmp.eq.s32.totalorder %s11, 3
    %p185 = por %p183, %p184
    %p186 = scmp.ne.s32.totalorder %s178, %s181
    %p187 = scmp.eq.s32.totalorder %s11, 0
    %p188 = por %p186, %p187
    %p189 = scmp.ne.s32.totalorder %s178, %s181
    %p190 = scmp.eq.s32.totalorder %s16, 3
    %p191 = por %p189, %p190
    %p192 = scmp.ne.s32.totalorder %s181, %s182
    %p193 = scmp.eq.s32.totalorder %s16, 0
    %p194 = por %p192, %p193
    %p195 = scmp.ne.s32.totalorder %s181, %s182
    %p196 = scmp.eq.s32.totalorder %s17, 3
    %p197 = por %p195, %p196
    %p199 = scmp.ne.s32.totalorder %s182, %s198
    %p200 = scmp.eq.s32.totalorder %s17, 0
    %p201 = por %p199, %p200
    %p202 = scmp.le.s32.totalorder 1, %s11
    %p203 = scmp.lt.s32.totalorder %s11, 5
    %p204 = pnand %p202, %p203
    %p205 = pneg %p204
    // Predicated region
    $region9: #{batch_wideresnet_forward.21} parent=5 // pred_check
      _
    $region10: #{batch_wideresnet_forward.21} parent=5 // pred_check_branch
      %207 = sbr.rel (%p204) target = $region12
    $region11: #{batch_wideresnet_forward.21} parent=5 // pred_region
      %s208 = ssub.s32 %s11, 1
      // Predicated region
      $region13: #{batch_wideresnet_forward.21} parent=11 // pred_check
        %p209 = pneg %p114
      $region14: #{batch_wideresnet_forward.21} parent=11 // pred_check_branch
        %211 = sbr.rel (%p209) target = $region16
      $region15: #{batch_wideresnet_forward.21} parent=11 // pred_region
        %s212 = smul.u32 16, %s23
        %p213 = scmp.lt.s32.totalorder %s212, 15
        %s214 = scalar_select %p213, %s212, 15
        %s215 = smul.addr %s214, 4
        %s216 = scalar_lea.vmem %s2, %s215
        %s217 = smul.u32 16, %s23
      $region16: #{batch_wideresnet_forward.21} parent=11 // pred_fallthru
        _
    $region12: #{batch_wideresnet_forward.21} parent=5 // pred_fallthru
      _
    %p218 = scmp.lt.s32.totalorder %s11, 4
    // Predicated region
    $region17: #{batch_wideresnet_forward.21} parent=5 // pred_check
      %p219 = pneg %p218
    $region18: #{batch_wideresnet_forward.21} parent=5 // pred_check_branch
      %221 = sbr.rel (%p219) target = $region20
    $region19: #{batch_wideresnet_forward.21} parent=5 // pred_region
      // Predicated region
      $region21: #{batch_wideresnet_forward.21} parent=19 // pred_check
        %p222 = pneg %p54
      $region22: #{batch_wideresnet_forward.21} parent=19 // pred_check_branch
        %224 = sbr.rel (%p222) target = $region24
      $region23: #{batch_wideresnet_forward.21} parent=19 // pred_region
        %s225 = smul.u32 2, %s19
        %p226 = scmp.lt.s32.totalorder %s18, 3
        %s227 = scalar_select %p226, %s18, 3
        %p228 = scmp.lt.s32.totalorder %s225, 1
        %s229 = scalar_select %p228, %s225, 1
        %p230 = scmp.lt.s32.totalorder %s20, 0
        %s231 = scalar_select %p230, %s20, 0
        %s232 = sadd.s32 %s231, %s229
        %s233 = smul.addr %s227, 2
        %s234 = sadd.s32 %s232, %s233
        %s235 = smul.addr %s234, 4
        %s236 = scalar_lea.vmem %s0, %s235
        %s237 = smul.u32 2, %s19
      $region24: #{batch_wideresnet_forward.21} parent=19 // pred_fallthru
        _
      // Predicated region
      $region25: #{batch_wideresnet_forward.21} parent=19 // pred_check
        %p238 = pneg %p82
      $region26: #{batch_wideresnet_forward.21} parent=19 // pred_check_branch
        %240 = sbr.rel (%p238) target = $region28
      $region27: #{batch_wideresnet_forward.21} parent=19 // pred_region
        %s241 = smul.u32 16, %s20
        %p242 = scmp.lt.s32.totalorder %s18, 3
        %s243 = scalar_select %p242, %s18, 3
        %p244 = scmp.lt.s32.totalorder %s241, 15
        %s245 = scalar_select %p244, %s241, 15
        %s246 = smul.addr %s243, 16
        %s247 = sadd.s32 %s245, %s246
        %s248 = smul.addr %s247, 8
        %s249 = scalar_lea.vmem %s1, %s248
        %s250 = smul.u32 16, %s20
      $region28: #{batch_wideresnet_forward.21} parent=19 // pred_fallthru
        _
      // Predicated region
      $region29: #{batch_wideresnet_forward.21} parent=19 // pred_check
        %p251 = pneg %p134
      $region30: #{batch_wideresnet_forward.21} parent=19 // pred_check_branch
        %253 = sbr.rel (%p251) target = $region32
      $region31: #{batch_wideresnet_forward.21} parent=19 // pred_region
        %p254 = scmp.lt.s32.totalorder %s18, 3
        %s255 = scalar_select %p254, %s18, 3
        %s256 = scalar_lea.vmem %s3, %s255
      $region32: #{batch_wideresnet_forward.21} parent=19 // pred_fallthru
        _
      // Predicated region
      $region33: #{batch_wideresnet_forward.21} parent=19 // pred_check
        %p257 = pneg %p160
      $region34: #{batch_wideresnet_forward.21} parent=19 // pred_check_branch
        %259 = sbr.rel (%p257) target = $region36
      $region35: #{batch_wideresnet_forward.21} parent=19 // pred_region
        %p260 = scmp.lt.s32.totalorder %s18, 3
        %s261 = scalar_select %p260, %s18, 3
        %s262 = scalar_lea.vmem %s4, %s261
      $region36: #{batch_wideresnet_forward.21} parent=19 // pred_fallthru
        _
    $region20: #{batch_wideresnet_forward.21} parent=5 // pred_fallthru
      _
    %p263 = scmp.le.s32.totalorder 1, %s11
    %p264 = scmp.lt.s32.totalorder %s11, 5
    %p265 = pnand %p263, %p264
    %p266 = pneg %p265
    // Predicated region
    $region37: #{batch_wideresnet_forward.21} parent=5 // pred_check
      _
    $region38: #{batch_wideresnet_forward.21} parent=5 // pred_check_branch
      %268 = sbr.rel (%p265) target = $region40
    $region39: #{batch_wideresnet_forward.21} parent=5 // pred_region
      %s269 = ssub.s32 %s11, 1
      %s270 = smul.u32 2, %s22
      %p271 = scmp.lt.s32.totalorder %s21, 3
      %s272 = scalar_select %p271, %s21, 3
      %p273 = scmp.lt.s32.totalorder %s270, 1
      %s274 = scalar_select %p273, %s270, 1
      %p275 = scmp.lt.s32.totalorder %s23, 0
      %s276 = scalar_select %p275, %s23, 0
      %s277 = sadd.s32 %s276, %s274
      %s278 = smul.addr %s272, 2
      %s279 = sadd.s32 %s277, %s278
      %s280 = smul.addr %s279, 4
      %s281 = scalar_lea.vmem %s0, %s280
      %p282 = pneg %p60
      %p283 = pneg %p57
      %s284 = smul.u32 16, %s23
      %p285 = scmp.lt.s32.totalorder %s21, 3
      %s286 = scalar_select %p285, %s21, 3
      %p287 = scmp.lt.s32.totalorder %s284, 15
      %s288 = scalar_select %p287, %s284, 15
      %s289 = smul.addr %s286, 16
      %s290 = sadd.s32 %s288, %s289
      %s291 = smul.addr %s290, 8
      %s292 = scalar_lea.vmem %s1, %s291
      %p293 = pneg %p88
      %p294 = pneg %p85
      %s295 = smul.u32 16, %s23
      %p296 = scmp.lt.s32.totalorder %s295, 15
      %s297 = scalar_select %p296, %s295, 15
      %s298 = smul.addr %s297, 4
      %s299 = scalar_lea.vmem %s2, %s298
      %p300 = pneg %p114
      %p301 = pneg %p111
      %p302 = scmp.lt.s32.totalorder %s21, 3
      %s303 = scalar_select %p302, %s21, 3
      %s304 = scalar_lea.vmem %s3, %s303
      %p305 = pneg %p140
      %p306 = pneg %p137
      %p307 = scmp.lt.s32.totalorder %s21, 3
      %s308 = scalar_select %p307, %s21, 3
      %s309 = scalar_lea.vmem %s4, %s308
      %p310 = pneg %p166
      %p311 = pneg %p163
      %p312 = pneg %p194
      %p313 = pneg %p191
      %s314 = smul.u32 2, %s22
      %p315 = scmp.lt.s32.totalorder %s21, 3
      %s316 = scalar_select %p315, %s21, 3
      %p317 = scmp.lt.s32.totalorder %s314, 1
      %s318 = scalar_select %p317, %s314, 1
      %s319 = smul.addr %s316, 2
      %s320 = sadd.s32 %s318, %s319
      %s321 = smul.addr %s320, 8
      %s322 = scalar_lea.vmem %s5, %s321
      %s323 = smul.u32 2, %s22
      %p324 = scmp.lt.s32.totalorder %s21, 3
      %s325 = scalar_select %p324, %s21, 3
      %p326 = scmp.lt.s32.totalorder %s323, 1
      %s327 = scalar_select %p326, %s323, 1
      %p328 = scmp.lt.s32.totalorder %s23, 0
      %s329 = scalar_select %p328, %s23, 0
      %s330 = sadd.s32 %s329, %s327
      %s331 = smul.addr %s325, 2
      %s332 = sadd.s32 %s330, %s331
      %s333 = smul.addr %s332, 4
      %s334 = scalar_lea.vmem %s0, %s333
      %s335 = smul.u32 2, %s22
      %s336 = smul.u32 16, %s23
      %p337 = scmp.lt.s32.totalorder %s21, 3
      %s338 = scalar_select %p337, %s21, 3
      %p339 = scmp.lt.s32.totalorder %s336, 15
      %s340 = scalar_select %p339, %s336, 15
      %s341 = smul.addr %s338, 16
      %s342 = sadd.s32 %s340, %s341
      %s343 = smul.addr %s342, 8
      %s344 = scalar_lea.vmem %s1, %s343
      %s345 = smul.u32 16, %s23
      %s346 = smul.u32 16, %s23
      %p347 = scmp.lt.s32.totalorder %s346, 15
      %s348 = scalar_select %p347, %s346, 15
      %s349 = smul.addr %s348, 4
      %s350 = scalar_lea.vmem %s2, %s349
      %s351 = smul.u32 16, %s23
      %p352 = scmp.lt.s32.totalorder %s21, 3
      %s353 = scalar_select %p352, %s21, 3
      %s354 = scalar_lea.vmem %s3, %s353
      %p355 = scmp.lt.s32.totalorder %s21, 3
      %s356 = scalar_select %p355, %s21, 3
      %s357 = scalar_lea.vmem %s4, %s356
      %s358 = smul.u32 2, %s22
      %p359 = scmp.lt.s32.totalorder %s21, 3
      %s360 = scalar_select %p359, %s21, 3
      %p361 = scmp.lt.s32.totalorder %s358, 1
      %s362 = scalar_select %p361, %s358, 1
      %s363 = smul.addr %s360, 2
      %s364 = sadd.s32 %s362, %s363
      %s365 = smul.addr %s364, 8
      %s366 = scalar_lea.vmem %s5, %s365
      %s367 = smul.u32 2, %s22
      %p369 = scmp.eq.s32.totalorder %s23, 0
      // Predicated region
      $region41: #{batch_wideresnet_forward.21} parent=39 // pred_check
        %p370 = pneg %p369
      $region42: #{batch_wideresnet_forward.21} parent=39 // pred_check_branch
        %372 = sbr.rel (%p370) target = $region44
      $region43: #{batch_wideresnet_forward.21} parent=39 // pred_region
        %373 = vst [vmem:[#allocation2] sm:$0xff] 0.0
        %374 = vst [vmem:[#allocation2 + $0x8] sm:$0xff] 0.0
      $region44: #{batch_wideresnet_forward.21} parent=39 // pred_fallthru
        _
      %v375 = vld [vmem:[%s350] sm:$0xf]
      %v376 = vld [vmem:[%s350 + $0x4] sm:$0xf]
      %v377 = vld [vmem:[%s350 + $0x8] sm:$0xf]
      %v378 = vld [vmem:[%s350 + $0xc] sm:$0xf]
      %v379 = vld [vmem:[%s350 + $0x10] sm:$0xf]
      %v380 = vld [vmem:[%s350 + $0x14] sm:$0xf]
      %v381 = vld [vmem:[%s350 + $0x18] sm:$0xf]
      %v382 = vld [vmem:[%s350 + $0x1c] sm:$0xf]
      %v383 = vld [vmem:[%s350 + $0x20] sm:$0xf]
      %v384 = vld [vmem:[%s350 + $0x24] sm:$0xf]
      %v385 = vld [vmem:[%s350 + $0x28] sm:$0xf]
      %v386 = vld [vmem:[%s350 + $0x2c] sm:$0xf]
      %v387 = vld [vmem:[%s350 + $0x30] sm:$0xf]
      %v388 = vld [vmem:[%s350 + $0x34] sm:$0xf]
      %v389 = vld [vmem:[%s350 + $0x38] sm:$0xf]
      %v390 = vld [vmem:[%s350 + $0x3c] sm:$0xf]
      %v391 = vld [vmem:[%s344] sm:$0xff]
      %v392 = vld [vmem:[%s344 + $0x8] sm:$0xff]
      %v393 = vld [vmem:[%s344 + $0x10] sm:$0xff]
      %v394 = vld [vmem:[%s344 + $0x18] sm:$0xff]
      %v395 = vld [vmem:[%s344 + $0x20] sm:$0xff]
      %v396 = vld [vmem:[%s344 + $0x28] sm:$0xff]
      %v397 = vld [vmem:[%s344 + $0x30] sm:$0xff]
      %v398 = vld [vmem:[%s344 + $0x38] sm:$0xff]
      %v399 = vld [vmem:[%s344 + $0x40] sm:$0xff]
      %v400 = vld [vmem:[%s344 + $0x48] sm:$0xff]
      %v401 = vld [vmem:[%s344 + $0x50] sm:$0xff]
      %v402 = vld [vmem:[%s344 + $0x58] sm:$0xff]
      %v403 = vld [vmem:[%s344 + $0x60] sm:$0xff]
      %v404 = vld [vmem:[%s344 + $0x68] sm:$0xff]
      %v405 = vld [vmem:[%s344 + $0x70] sm:$0xff]
      %v406 = vld [vmem:[%s344 + $0x78] sm:$0xff]
      %v407 = vunpack.c.l.bf16 %v375
      %v408 = vunpack.c.l.bf16 %v376
      %v409 = vunpack.c.l.bf16 %v377
      %v410 = vunpack.c.l.bf16 %v378
      %v411 = vunpack.c.l.bf16 %v379
      %v412 = vunpack.c.l.bf16 %v380
      %v413 = vunpack.c.l.bf16 %v381
      %v414 = vunpack.c.l.bf16 %v382
      %v415 = vunpack.c.l.bf16 %v383
      %v416 = vunpack.c.l.bf16 %v384
      %v417 = vunpack.c.l.bf16 %v385
      %v418 = vunpack.c.l.bf16 %v386
      %v419 = vunpack.c.l.bf16 %v387
      %v420 = vunpack.c.l.bf16 %v388
      %v421 = vunpack.c.l.bf16 %v389
      %v422 = vunpack.c.l.bf16 %v390
      %424 = vset.pattern.permute.xlu0 0
      %425 = vperm.xlu0 %424, %v391
      %v426 = vpop.permute.xlu0 %425
      %429 = vset.pattern.permute.xlu0 0
      %430 = vperm.xlu0 %429, %v392
      %v431 = vpop.permute.xlu0 %430
      %434 = vset.pattern.permute.xlu0 0
      %435 = vperm.xlu0 %434, %v393
      %v436 = vpop.permute.xlu0 %435
      %439 = vset.pattern.permute.xlu0 0
      %440 = vperm.xlu0 %439, %v394
      %v441 = vpop.permute.xlu0 %440
      %444 = vset.pattern.permute.xlu0 0
      %445 = vperm.xlu0 %444, %v395
      %v446 = vpop.permute.xlu0 %445
      %449 = vset.pattern.permute.xlu0 0
      %450 = vperm.xlu0 %449, %v396
      %v451 = vpop.permute.xlu0 %450
      %454 = vset.pattern.permute.xlu0 0
      %455 = vperm.xlu0 %454, %v397
      %v456 = vpop.permute.xlu0 %455
      %459 = vset.pattern.permute.xlu0 0
      %460 = vperm.xlu0 %459, %v398
      %v461 = vpop.permute.xlu0 %460
      %464 = vset.pattern.permute.xlu0 0
      %465 = vperm.xlu0 %464, %v399
      %v466 = vpop.permute.xlu0 %465
      %469 = vset.pattern.permute.xlu0 0
      %470 = vperm.xlu0 %469, %v400
      %v471 = vpop.permute.xlu0 %470
      %474 = vset.pattern.permute.xlu0 0
      %475 = vperm.xlu0 %474, %v401
      %v476 = vpop.permute.xlu0 %475
      %479 = vset.pattern.permute.xlu0 0
      %480 = vperm.xlu0 %479, %v402
      %v481 = vpop.permute.xlu0 %480
      %484 = vset.pattern.permute.xlu0 0
      %485 = vperm.xlu0 %484, %v403
      %v486 = vpop.permute.xlu0 %485
      %489 = vset.pattern.permute.xlu0 0
      %490 = vperm.xlu0 %489, %v404
      %v491 = vpop.permute.xlu0 %490
      %494 = vset.pattern.permute.xlu0 0
      %495 = vperm.xlu0 %494, %v405
      %v496 = vpop.permute.xlu0 %495
      %499 = vset.pattern.permute.xlu0 0
      %500 = vperm.xlu0 %499, %v406
      %v501 = vpop.permute.xlu0 %500
      %v503 = vmul.f32 %v407, %v426
      %v504 = vmul.f32 %v408, %v431
      %v505 = vmul.f32 %v409, %v436
      %v506 = vmul.f32 %v410, %v441
      %v507 = vmul.f32 %v411, %v446
      %v508 = vmul.f32 %v412, %v451
      %v509 = vmul.f32 %v413, %v456
      %v510 = vmul.f32 %v414, %v461
      %v511 = vmul.f32 %v415, %v466
      %v512 = vmul.f32 %v416, %v471
      %v513 = vmul.f32 %v417, %v476
      %v514 = vmul.f32 %v418, %v481
      %v515 = vmul.f32 %v419, %v486
      %v516 = vmul.f32 %v420, %v491
      %v517 = vmul.f32 %v421, %v496
      %v518 = vmul.f32 %v422, %v501
      %v519 = vpack.c.bf16 %v504, %v503
      %v520 = vpack.c.bf16 %v506, %v505
      %v521 = vpack.c.bf16 %v508, %v507
      %v522 = vpack.c.bf16 %v510, %v509
      %v523 = vpack.c.bf16 %v512, %v511
      %v524 = vpack.c.bf16 %v514, %v513
      %v525 = vpack.c.bf16 %v516, %v515
      %v526 = vpack.c.bf16 %v518, %v517
      %v527 = vld [vmem:[#allocation2] sm:$0xff]
      %v528 = vld [vmem:[#allocation2 + $0x8] sm:$0xff]
      %v529 = vld [vmem:[%s334] sm:$0xf]
      %v530 = vld [vmem:[%s334 + $0x4] sm:$0xf]
      %v533 = vunpack.c.l.b16 %v529
      %v534 = vunpack.c.l.b16 %v530
      %v535 = vpack.c.b16 %v534, %v533
      %537 = vmatprep.subr.bf16.mxu0 0
      %538 = vmatpush1.bf16.msra.mxu0 %v519
      %539 = vmatprep.subr.bf16.mxu0 0
      %540 = vmatpush1.bf16.msra.mxu0 %v520
      %541 = vmatprep.subr.bf16.mxu0 0
      %542 = vmatpush1.bf16.msra.mxu0 %v521
      %543 = vmatprep.subr.bf16.mxu0 0
      %544 = vmatpush1.bf16.msra.mxu0 %v522
      %545 = vmatprep.subr.bf16.mxu0 0
      %546 = vmatpush1.bf16.msra.mxu0 %v523
      %547 = vmatprep.subr.bf16.mxu0 0
      %548 = vmatpush1.bf16.msra.mxu0 %v524
      %549 = vmatprep.subr.bf16.mxu0 0
      %550 = vmatpush1.bf16.msra.mxu0 %v525
      %551 = vmatprep.subr.bf16.mxu0 0
      %552 = vmatpush1.bf16.msra.mxu0 %v526
      %553 = vmatprep.subr.bf16.mxu0 0
      %554 = vmatpush1.bf16.msra.mxu0 0
      %555 = vmatprep.subr.bf16.mxu0 0
      %556 = vmatpush1.bf16.msra.mxu0 0
      %557 = vmatprep.subr.bf16.mxu0 0
      %558 = vmatpush1.bf16.msra.mxu0 0
      %559 = vmatprep.subr.bf16.mxu0 0
      %560 = vmatpush1.bf16.msra.mxu0 0
      %561 = vmatprep.subr.bf16.mxu0 0
      %562 = vmatpush1.bf16.msra.mxu0 0
      %563 = vmatprep.subr.bf16.mxu0 0
      %564 = vmatpush1.bf16.msra.mxu0 0
      %565 = vmatprep.subr.bf16.mxu0 0
      %566 = vmatpush1.bf16.msra.mxu0 0
      %567 = vmatprep.subr.bf16.mxu0 0
      %568 = vmatpush1.bf16.msra.mxu0 0
      %569 = vmatprep.mubr.bf16.mxu0 0
      %570 = vmatmul.mubr.bf16.gmra.mrb[0].mxu0 %v535
      %v571 = vpop.f32.mrb[0].mxu0
      %v572 = vadd.f32 0.0, %v571
      %v573 = vpop.f32.mrb[0].mxu0
      %v574 = vpop.f32.mrb[0].mxu0
      %v575 = vadd.f32 0.0, %v574
      %v576 = vpop.f32.mrb[0].mxu0
      %577 = vdwg.mxu0
      %v578 = vadd.f32 %v527, %v572
      %v579 = vadd.f32 %v528, %v575
      %580 = vst [vmem:[#allocation2] sm:$0xff] %v578
      %581 = vst [vmem:[#allocation2 + $0x8] sm:$0xff] %v579
      // Predicated region
      $region45: #{batch_wideresnet_forward.21} parent=39 // pred_check
        %p582 = pneg %p369
      $region46: #{batch_wideresnet_forward.21} parent=39 // pred_check_branch
        %584 = sbr.rel (%p582) target = $region48
      $region47: #{batch_wideresnet_forward.21} parent=39 // pred_region
        %v585 = vld [vmem:[#allocation2] sm:$0xff]
        %v586 = vld [vmem:[#allocation2 + $0x8] sm:$0xff]
        %v587 = vld [vmem:[%s354] sm:$0x1]
        %v589 = vlaneseq
        %v590 = vshrl.u32 %v589, 7
        %v591 = vsub.s32 0, %v590
        %v592 = vrot.slane %v587, %v591
        %v594 = vmul.f32 %v585, %v592
        %v595 = vmul.f32 %v586, %v592
        %v596 = vld [vmem:[%s357] sm:$0x1]
        %v598 = vlaneseq
        %v599 = vshrl.u32 %v598, 7
        %v600 = vsub.s32 0, %v599
        %v601 = vrot.slane %v596, %v600
        %v603 = vadd.f32 %v594, %v601
        %v604 = vadd.f32 %v595, %v601
        %605 = vst [vmem:[%s366] sm:$0xff] %v603
        %606 = vst [vmem:[%s366 + $0x8] sm:$0xff] %v604
      $region48: #{batch_wideresnet_forward.21} parent=39 // pred_fallthru
        _
      %s607 = smul.u32 2, %s22
      %p608 = scmp.lt.s32.totalorder %s21, 3
      %s609 = scalar_select %p608, %s21, 3
      %p610 = scmp.lt.s32.totalorder %s607, 1
      %s611 = scalar_select %p610, %s607, 1
      %s612 = smul.addr %s609, 2
      %s613 = sadd.s32 %s611, %s612
      %s614 = smul.addr %s613, 8
      %s615 = scalar_lea.vmem %s5, %s614
      // Predicated region
      $region49: #{batch_wideresnet_forward.21} parent=39 // pred_check
        %p616 = pneg %p191
      $region50: #{batch_wideresnet_forward.21} parent=39 // pred_check_branch
        %618 = sbr.rel (%p616) target = $region52
      $region51: #{batch_wideresnet_forward.21} parent=39 // pred_region
        %s619 = smul.u32 2, %s22
      $region52: #{batch_wideresnet_forward.21} parent=39 // pred_fallthru
        _
    $region40: #{batch_wideresnet_forward.21} parent=5 // pred_fallthru
      _
    %p620 = scmp.le.s32.totalorder 2, %s11
    // Predicated region
    $region53: #{batch_wideresnet_forward.21} parent=5 // pred_check
      %p621 = pneg %p620
    $region54: #{batch_wideresnet_forward.21} parent=5 // pred_check_branch
      %623 = sbr.rel (%p621) target = $region56
    $region55: #{batch_wideresnet_forward.21} parent=5 // pred_region
      %s624 = ssub.s32 %s11, 2
      // Predicated region
      $region57: #{batch_wideresnet_forward.21} parent=55 // pred_check
        %p625 = pneg %p197
      $region58: #{batch_wideresnet_forward.21} parent=55 // pred_check_branch
        %627 = sbr.rel (%p625) target = $region60
      $region59: #{batch_wideresnet_forward.21} parent=55 // pred_region
        %s628 = smul.u32 2, %s25
        %p629 = scmp.lt.s32.totalorder %s24, 3
        %s630 = scalar_select %p629, %s24, 3
        %p631 = scmp.lt.s32.totalorder %s628, 1
        %s632 = scalar_select %p631, %s628, 1
        %s633 = smul.addr %s630, 2
        %s634 = sadd.s32 %s632, %s633
        %s635 = smul.addr %s634, 8
        %s636 = scalar_lea.vmem %s5, %s635
      $region60: #{batch_wideresnet_forward.21} parent=55 // pred_fallthru
        _
    $region56: #{batch_wideresnet_forward.21} parent=5 // pred_fallthru
      _
  $region6: #{batch_wideresnet_forward.21} parent=0 // loop_footer
    %s15 = sadd.s32 1, %s11
  $region7: #{batch_wideresnet_forward.21} parent=0 // loop_footer_branch
    %10 = sbr.rel target = $region3
  $region8: #{batch_wideresnet_forward.21} parent=0 // loop_exit
    _

</llo_original>
